<compile_context>
chip_gen: v7x
topology: tpu7x:2x2x1
jax: 0.10.0
libtpu: 0.0.40
codegen_flags: <defaults>
</compile_context>

<pallas_src>
import math

import jax
import jax.numpy as jnp
from jax.experimental import pallas as pl
from jax.experimental.pallas import tpu as pltpu

# ----------------------------- model config -----------------------------
BATCH = 2
IN_CH = 3
IMG = 16
PATCH = 4
HIDDEN = 32
NUM_HEADS = 4
HEAD_DIM = HIDDEN // NUM_HEADS
MLP_DIM = 4 * HIDDEN
NUM_LAYERS = 2
LN_EPS = 1e-6

N_PATCHES = (IMG // PATCH) ** 2
SEQ = N_PATCHES + 1                 # 17 = CLS + patches
S_PAD = 24                          # sequence padded to a multiple of 8 sublanes
PATCH_DIM = IN_CH * PATCH * PATCH   # 48
ATTN_SCALE = 1.0 / math.sqrt(HEAD_DIM)
HS = NUM_HEADS * S_PAD              # 96, width of the blocked all-head score matrix


# ----------------------------- fused Pallas kernel -----------------------------
def _layernorm(x, g, b):
    mu = jnp.mean(x, axis=-1, keepdims=True)
    var = jnp.mean(jnp.square(x - mu), axis=-1, keepdims=True)
    return (x - mu) * jax.lax.rsqrt(var + LN_EPS) * g + b


def _vit_fused_kernel(
    tok_ref, patch_w_ref, embed_add_ref, head_sel_ref, key_bias_ref,
    ln1_g_ref, ln1_b_ref, wqkv_ref, bqkv_ref, wo_ref, bo_ref,
    ln2_g_ref, ln2_b_ref, w1_ref, b1_ref, w2_ref, b2_ref,
    lnf_g_ref, lnf_b_ref,
    pred_ref, hs_ref,
):
    f32 = jnp.float32
    bf16 = jnp.bfloat16

    # ---- constants shared by all layers (loaded once, outside the layer loop) ----
    head_sel = head_sel_ref[...]              # (H*S_PAD, D) f32, 0/1 block-diag selector
    head_sel_b = head_sel.astype(bf16)
    key_bias = key_bias_ref[...]              # (1, H*S_PAD) f32, -1e9 on padded key slots

    # ---- patch embedding: tok row 0 is the CLS slot (all zero), rows >= SEQ are
    #      padding; cls token, pos embedding and patch bias are pre-folded into
    #      embed_add ----
    tok = tok_ref[0]                                                # (S_PAD, CPP) bf16
    h = jnp.dot(tok, patch_w_ref[...], preferred_element_type=f32) + embed_add_ref[...]
    hs_ref[0, 0] = h.astype(bf16)                                   # embeddings output

    for l in range(NUM_LAYERS):
        # ---------------- self-attention block (pre-LN, fused QKV) ----------------
        hn = _layernorm(h, ln1_g_ref[l], ln1_b_ref[l])
        qkv = jnp.dot(hn.astype(bf16), wqkv_ref[l],
                      preferred_element_type=f32) + bqkv_ref[l]     # (S_PAD, 3D)
        q = (qkv[:, :HIDDEN] * ATTN_SCALE).astype(bf16)             # scale folded into q
        k = qkv[:, HIDDEN:2 * HIDDEN]                               # (S_PAD, D) f32
        v = qkv[:, 2 * HIDDEN:]                                     # (S_PAD, D) f32

        # Scores for ALL heads in one matmul via a block-diagonal key expansion:
        #   kexp[h*S_PAD + j, d] = k[j, d] * [d belongs to head h]
        #   s[i, h*S_PAD + j]    = q_h[i] . k_h[j]
        kexp = (jnp.concatenate([k] * NUM_HEADS, axis=0) * head_sel).astype(bf16)
        s = jax.lax.dot_general(q, kexp, (((1,), (1,)), ((), ())),
                                preferred_element_type=f32)         # (S_PAD, H*S_PAD)
        s = s + key_bias                                            # mask padded keys
        # Shared row-max across heads (exp-range safety only; exact at this scale).
        m = jnp.max(s, axis=-1, keepdims=True)
        p = jnp.exp(s - m).astype(bf16)                             # unnormalized probs

        # Context for all heads + per-head softmax denominators (two small matmuls,
        # heads land concatenated along lanes -> no merge-heads concat needed).
        vexp = (jnp.concatenate([v] * NUM_HEADS, axis=0) * head_sel).astype(bf16)
        ctx_un = jnp.dot(p, vexp, preferred_element_type=f32)       # (S_PAD, D)
        denom = jnp.dot(p, head_sel_b, preferred_element_type=f32)  # (S_PAD, D) per-head sums
        ctx = ctx_un * pl.reciprocal(denom, approx=True)

        attn = jnp.dot(ctx.astype(bf16), wo_ref[l],
                       preferred_element_type=f32) + bo_ref[l]
        h = h + attn

        # ---------------- MLP block (pre-LN) ----------------
        hn2 = _layernorm(h, ln2_g_ref[l], ln2_b_ref[l])
        m1 = jnp.dot(hn2.astype(bf16), w1_ref[l],
                     preferred_element_type=f32) + b1_ref[l]
        # TODO(synk): torch nn.GELU default is the exact erf GELU; tanh
        #             approximation used here to keep Mosaic lowering robust.
        m1 = jax.nn.gelu(m1, approximate=True)
        m2 = jnp.dot(m1.astype(bf16), w2_ref[l],
                     preferred_element_type=f32) + b2_ref[l]
        h = h + m2
        hs_ref[0, l + 1] = h.astype(bf16)                           # per-layer output

    # ---- final LayerNorm -> last_hidden_state ----
    pred_ref[0] = _layernorm(h, lnf_g_ref[...], lnf_b_ref[...])


# ----------------------------- parameters -----------------------------
def init_params(key):
    keys = iter(jax.random.split(key, 4 + 6 * NUM_LAYERS))

    def dense(k, fan_in, fan_out):
        w = jax.random.normal(k, (fan_in, fan_out), jnp.float32) / math.sqrt(fan_in)
        return w, jnp.zeros((fan_out,), jnp.float32)

    params = {}
    params["patch_w"], params["patch_b"] = dense(next(keys), PATCH_DIM, HIDDEN)
    params["cls"] = jax.random.normal(next(keys), (1, HIDDEN), jnp.float32) * 0.02
    params["pos"] = jax.random.normal(next(keys), (SEQ, HIDDEN), jnp.float32) * 0.02
    params["lnf_g"] = jnp.ones((HIDDEN,), jnp.float32)
    params["lnf_b"] = jnp.zeros((HIDDEN,), jnp.float32)

    layers = []
    for _ in range(NUM_LAYERS):
        lyr = {}
        lyr["ln1_g"] = jnp.ones((HIDDEN,), jnp.float32)
        lyr["ln1_b"] = jnp.zeros((HIDDEN,), jnp.float32)
        wq, bq = dense(next(keys), HIDDEN, HIDDEN)
        wk, bk = dense(next(keys), HIDDEN, HIDDEN)
        wv, bv = dense(next(keys), HIDDEN, HIDDEN)
        lyr["w_qkv"] = jnp.concatenate([wq, wk, wv], axis=1)      # fused QKV (D, 3D)
        lyr["b_qkv"] = jnp.concatenate([bq, bk, bv], axis=0)      # (3D,)
        lyr["wo"], lyr["bo"] = dense(next(keys), HIDDEN, HIDDEN)
        lyr["ln2_g"] = jnp.ones((HIDDEN,), jnp.float32)
        lyr["ln2_b"] = jnp.zeros((HIDDEN,), jnp.float32)
        lyr["w1"], lyr["b1"] = dense(next(keys), HIDDEN, MLP_DIM)
        lyr["w2"], lyr["b2"] = dense(next(keys), MLP_DIM, HIDDEN)
        layers.append(lyr)
    params["layers"] = layers
    return params


def _pack_params(params):
    """Stack per-layer weights along a leading L axis; matmul weights -> bf16.
    Also bakes the static block-diagonal head selector and key-padding bias."""
    bf16 = jnp.bfloat16
    stk = lambda name: jnp.stack([lyr[name] for lyr in params["layers"]], axis=0)

    embed_add = jnp.concatenate(
        [params["cls"] + params["pos"][0:1],                      # CLS + pos[0]
         params["pos"][1:] + params["patch_b"][None, :],          # pos[i] + patch bias
         jnp.zeros((S_PAD - SEQ, HIDDEN), jnp.float32)],          # padded rows
        axis=0)                                                   # (S_PAD, D) f32

    r = jnp.arange(HS)
    c = jnp.arange(HIDDEN)
    head_sel = ((r[:, None] // S_PAD) == (c[None, :] // HEAD_DIM)).astype(jnp.float32)
    key_bias = jnp.where((r % S_PAD) < SEQ, 0.0, -1e9).astype(jnp.float32)[None, :]

    return {
        "patch_w": params["patch_w"].astype(bf16),                # (CPP, D)
        "embed_add": embed_add,                                   # (S_PAD, D)
        "head_sel": head_sel,                                     # (H*S_PAD, D)
        "key_bias": key_bias,                                     # (1, H*S_PAD)
        "ln1_g": stk("ln1_g")[:, None, :], "ln1_b": stk("ln1_b")[:, None, :],
        "w_qkv": stk("w_qkv").astype(bf16),                       # (L, D, 3D)
        "b_qkv": stk("b_qkv")[:, None, :],                        # (L, 1, 3D)
        "wo": stk("wo").astype(bf16),                             # (L, D, D)
        "bo": stk("bo")[:, None, :],
        "ln2_g": stk("ln2_g")[:, None, :], "ln2_b": stk("ln2_b")[:, None, :],
        "w1": stk("w1").astype(bf16),                             # (L, D, MLP)
        "b1": stk("b1")[:, None, :],
        "w2": stk("w2").astype(bf16),                             # (L, MLP, D)
        "b2": stk("b2")[:, None, :],
        "lnf_g": params["lnf_g"][None, :], "lnf_b": params["lnf_b"][None, :],
    }


# ----------------------------- forward -----------------------------
@jax.jit
def _encode(packed, pixel_values):
    B, C, H, W = pixel_values.shape
    nh, nw = H // PATCH, W // PATCH

    # Conv2d(k=P, stride=P) == unfold + matmul; row 0 is the CLS slot (embedding
    # comes entirely from embed_add), rows >= SEQ are zero padding.
    x = pixel_values.reshape(B, C, nh, PATCH, nw, PATCH)
    x = x.transpose(0, 2, 4, 1, 3, 5).reshape(B, nh * nw, C * PATCH * PATCH)
    tokens = jnp.concatenate(
        [jnp.zeros((B, 1, PATCH_DIM), x.dtype), x,
         jnp.zeros((B, S_PAD - SEQ, PATCH_DIM), x.dtype)], axis=1
    ).astype(jnp.bfloat16)                                        # (B, S_PAD, CPP)

    def full(shape):
        return pl.BlockSpec(shape, lambda b, _s=shape: (0,) * len(_s))

    in_specs = [
        pl.BlockSpec((1, S_PAD, PATCH_DIM), lambda b: (b, 0, 0)), # tokens
        full((PATCH_DIM, HIDDEN)),                                # patch_w
        full((S_PAD, HIDDEN)),                                    # embed_add
        full((HS, HIDDEN)),                                       # head_sel
        full((1, HS)),                                            # key_bias
        full((NUM_LAYERS, 1, HIDDEN)),                            # ln1_g
        full((NUM_LAYERS, 1, HIDDEN)),                            # ln1_b
        full((NUM_LAYERS, HIDDEN, 3 * HIDDEN)),                   # w_qkv
        full((NUM_LAYERS, 1, 3 * HIDDEN)),                        # b_qkv
        full((NUM_LAYERS, HIDDEN, HIDDEN)),                       # wo
        full((NUM_LAYERS, 1, HIDDEN)),                            # bo
        full((NUM_LAYERS, 1, HIDDEN)),                            # ln2_g
        full((NUM_LAYERS, 1, HIDDEN)),                            # ln2_b
        full((NUM_LAYERS, HIDDEN, MLP_DIM)),                      # w1
        full((NUM_LAYERS, 1, MLP_DIM)),                           # b1
        full((NUM_LAYERS, MLP_DIM, HIDDEN)),                      # w2
        full((NUM_LAYERS, 1, HIDDEN)),                            # b2
        full((1, HIDDEN)),                                        # lnf_g
        full((1, HIDDEN)),                                        # lnf_b
    ]

    # Advisory cost estimate so XLA schedules the surrounding reshapes sensibly.
    flops_per_img = (
        2 * S_PAD * PATCH_DIM * HIDDEN
        + NUM_LAYERS * (
            2 * S_PAD * HIDDEN * 3 * HIDDEN          # QKV
            + 2 * S_PAD * HIDDEN * HS                # blocked scores
            + 2 * S_PAD * HS * 2 * HIDDEN            # ctx + denominators
            + 2 * S_PAD * HIDDEN * HIDDEN            # output projection
            + 2 * 2 * S_PAD * HIDDEN * MLP_DIM))     # MLP
    transcendentals = B * NUM_LAYERS * (S_PAD * HS + S_PAD * MLP_DIM)
    weight_bytes = sum(int(v.size) * v.dtype.itemsize
                       for v in jax.tree_util.tree_leaves(packed))
    bytes_accessed = (int(tokens.size) * tokens.dtype.itemsize + weight_bytes
                      + B * S_PAD * HIDDEN * 4
                      + B * (NUM_LAYERS + 1) * S_PAD * HIDDEN * 2)

    pred, hs = pl.pallas_call(
        _vit_fused_kernel,
        grid=(B,),
        in_specs=in_specs,
        out_specs=(
            pl.BlockSpec((1, S_PAD, HIDDEN), lambda b: (b, 0, 0)),
            pl.BlockSpec((1, NUM_LAYERS + 1, S_PAD, HIDDEN), lambda b: (b, 0, 0, 0)),
        ),
        out_shape=(
            jax.ShapeDtypeStruct((B, S_PAD, HIDDEN), jnp.float32),
            jax.ShapeDtypeStruct((B, NUM_LAYERS + 1, S_PAD, HIDDEN), jnp.bfloat16),
        ),
        compiler_params=pltpu.CompilerParams(
            # batch axis is independent work -> both TensorCores on v7x
            dimension_semantics=("parallel",),
        ),
        cost_estimate=pl.CostEstimate(
            flops=int(B * flops_per_img),
            transcendentals=int(transcendentals),
            bytes_accessed=int(bytes_accessed),
        ),
    )(
        tokens, packed["patch_w"], packed["embed_add"],
        packed["head_sel"], packed["key_bias"],
        packed["ln1_g"], packed["ln1_b"], packed["w_qkv"], packed["b_qkv"],
        packed["wo"], packed["bo"], packed["ln2_g"], packed["ln2_b"],
        packed["w1"], packed["b1"], packed["w2"], packed["b2"],
        packed["lnf_g"], packed["lnf_b"],
    )
    return pred, hs


def vision_encoder_forward(params, pixel_values):
    """pixel_values: [B, C, H, W] float32 (NCHW, PyTorch convention)."""
    packed = _pack_params(params)
    pred, hs = _encode(packed, pixel_values)
    predictions = pred[:, :SEQ]                                   # strip seq padding
    hidden_states = tuple(hs[:, i, :SEQ] for i in range(NUM_LAYERS + 1))

    # Mirrors ImageEncoderOutput fields.
    return {
        "use_pred": False,               # getattr(output, 'loss', False) -> False
        "predictions": predictions,      # last_hidden_state
        "loss": None,
        "hidden_states": hidden_states,  # (embeddings, layer_1, ..., layer_N)
        "attentions": None,              # TODO(synk): attention probs not materialized
        "task_input": None,
    }


# ----------------------------- main -----------------------------
if __name__ == "__main__":
    key = jax.random.PRNGKey(0)
    pkey, xkey = jax.random.split(key)
    params = init_params(pkey)
    pixel_values = jax.random.normal(xkey, (BATCH, IN_CH, IMG, IMG), jnp.float32)

    out = vision_encoder_forward(params, pixel_values)
    jax.block_until_ready(out["predictions"])
    jax.block_until_ready(out["hidden_states"])

    assert out["predictions"].shape == (BATCH, SEQ, HIDDEN)
    assert len(out["hidden_states"]) == NUM_LAYERS + 1
    assert all(h.shape == (BATCH, SEQ, HIDDEN) for h in out["hidden_states"])
    assert bool(jnp.all(jnp.isfinite(out["predictions"])))
    assert bool(jnp.all(jnp.isfinite(out["hidden_states"][-1].astype(jnp.float32))))
    print("KERNEL_OK")
</pallas_src>

<mosaic_0001>
module attributes {stable_mosaic.version = 11 : i64} {
  func.func @_vit_fused_kernel(%arg0: i32, %arg1: memref<1x24x48xbf16, #tpu.memory_space<vmem>>, %arg2: memref<48x32xbf16, #tpu.memory_space<vmem>>, %arg3: memref<24x32xf32, #tpu.memory_space<vmem>>, %arg4: memref<96x32xf32, #tpu.memory_space<vmem>>, %arg5: memref<1x96xf32, #tpu.memory_space<vmem>>, %arg6: memref<2x1x32xf32, #tpu.memory_space<vmem>>, %arg7: memref<2x1x32xf32, #tpu.memory_space<vmem>>, %arg8: memref<2x32x96xbf16, #tpu.memory_space<vmem>>, %arg9: memref<2x1x96xf32, #tpu.memory_space<vmem>>, %arg10: memref<2x32x32xbf16, #tpu.memory_space<vmem>>, %arg11: memref<2x1x32xf32, #tpu.memory_space<vmem>>, %arg12: memref<2x1x32xf32, #tpu.memory_space<vmem>>, %arg13: memref<2x1x32xf32, #tpu.memory_space<vmem>>, %arg14: memref<2x32x128xbf16, #tpu.memory_space<vmem>>, %arg15: memref<2x1x128xf32, #tpu.memory_space<vmem>>, %arg16: memref<2x128x32xbf16, #tpu.memory_space<vmem>>, %arg17: memref<2x1x32xf32, #tpu.memory_space<vmem>>, %arg18: memref<1x32xf32, #tpu.memory_space<vmem>>, %arg19: memref<1x32xf32, #tpu.memory_space<vmem>>, %arg20: memref<1x24x32xf32, #tpu.memory_space<vmem>>, %arg21: memref<1x3x24x32xbf16, #tpu.memory_space<vmem>>) attributes {dimension_semantics = [#tpu.dimension_semantics<parallel>], iteration_bounds = array<i64: 2>, scalar_prefetch = 0 : i64, scratch_operands = 0 : i64, tpu.core_type = #tpu.core_type<tc>, window_params = [{transform_indices = @transform_0, window_bounds = array<i64: 1, 24, 48>}, {pipeline_mode = #tpu.pipeline_mode<synchronous>, transform_indices = @transform_1, window_bounds = array<i64: 48, 32>}, {pipeline_mode = #tpu.pipeline_mode<synchronous>, transform_indices = @transform_2, window_bounds = array<i64: 24, 32>}, {pipeline_mode = #tpu.pipeline_mode<synchronous>, transform_indices = @transform_3, window_bounds = array<i64: 96, 32>}, {pipeline_mode = #tpu.pipeline_mode<synchronous>, transform_indices = @transform_4, window_bounds = array<i64: 1, 96>}, {pipeline_mode = #tpu.pipeline_mode<synchronous>, transform_indices = @transform_5, window_bounds = array<i64: 2, 1, 32>}, {pipeline_mode = #tpu.pipeline_mode<synchronous>, transform_indices = @transform_6, window_bounds = array<i64: 2, 1, 32>}, {pipeline_mode = #tpu.pipeline_mode<synchronous>, transform_indices = @transform_7, window_bounds = array<i64: 2, 32, 96>}, {pipeline_mode = #tpu.pipeline_mode<synchronous>, transform_indices = @transform_8, window_bounds = array<i64: 2, 1, 96>}, {pipeline_mode = #tpu.pipeline_mode<synchronous>, transform_indices = @transform_9, window_bounds = array<i64: 2, 32, 32>}, {pipeline_mode = #tpu.pipeline_mode<synchronous>, transform_indices = @transform_10, window_bounds = array<i64: 2, 1, 32>}, {pipeline_mode = #tpu.pipeline_mode<synchronous>, transform_indices = @transform_11, window_bounds = array<i64: 2, 1, 32>}, {pipeline_mode = #tpu.pipeline_mode<synchronous>, transform_indices = @transform_12, window_bounds = array<i64: 2, 1, 32>}, {pipeline_mode = #tpu.pipeline_mode<synchronous>, transform_indices = @transform_13, window_bounds = array<i64: 2, 32, 128>}, {pipeline_mode = #tpu.pipeline_mode<synchronous>, transform_indices = @transform_14, window_bounds = array<i64: 2, 1, 128>}, {pipeline_mode = #tpu.pipeline_mode<synchronous>, transform_indices = @transform_15, window_bounds = array<i64: 2, 128, 32>}, {pipeline_mode = #tpu.pipeline_mode<synchronous>, transform_indices = @transform_16, window_bounds = array<i64: 2, 1, 32>}, {pipeline_mode = #tpu.pipeline_mode<synchronous>, transform_indices = @transform_17, window_bounds = array<i64: 1, 32>}, {pipeline_mode = #tpu.pipeline_mode<synchronous>, transform_indices = @transform_18, window_bounds = array<i64: 1, 32>}, {transform_indices = @transform_19, window_bounds = array<i64: 1, 24, 32>}, {transform_indices = @transform_20, window_bounds = array<i64: 1, 3, 24, 32>}]} {
    %c0 = arith.constant 0 : index
    %c0_0 = arith.constant 0 : index
    %0 = vector.load %arg4[%c0, %c0_0] : memref<96x32xf32, #tpu.memory_space<vmem>>, vector<96x32xf32>
    %1 = arith.truncf %0 : vector<96x32xf32> to vector<96x32xbf16>
    %c0_1 = arith.constant 0 : index
    %c0_2 = arith.constant 0 : index
    %2 = vector.load %arg5[%c0_1, %c0_2] : memref<1x96xf32, #tpu.memory_space<vmem>>, vector<1x96xf32>
    %c0_3 = arith.constant 0 : index
    %c0_4 = arith.constant 0 : index
    %c0_5 = arith.constant 0 : index
    %3 = vector.load %arg1[%c0_3, %c0_4, %c0_5] : memref<1x24x48xbf16, #tpu.memory_space<vmem>>, vector<1x24x48xbf16>
    %4 = vector.shape_cast %3 : vector<1x24x48xbf16> to vector<24x48xbf16>
    %c0_6 = arith.constant 0 : index
    %c0_7 = arith.constant 0 : index
    %5 = vector.load %arg2[%c0_6, %c0_7] : memref<48x32xbf16, #tpu.memory_space<vmem>>, vector<48x32xbf16>
    %cst = arith.constant dense<0.000000e+00> : vector<24x32xf32>
    %6 = tpu.matmul %4, %5, %cst {dimension_numbers = #tpu.dot_dimension_numbers<[1], [0], [0], [1], [0, 0, 1, 1], [], []>} : vector<24x48xbf16>, vector<48x32xbf16>, vector<24x32xf32> -> vector<24x32xf32>
    %c0_8 = arith.constant 0 : index
    %c0_9 = arith.constant 0 : index
    %7 = vector.load %arg3[%c0_8, %c0_9] : memref<24x32xf32, #tpu.memory_space<vmem>>, vector<24x32xf32>
    %8 = arith.addf %6, %7 : vector<24x32xf32>
    %9 = arith.truncf %8 : vector<24x32xf32> to vector<24x32xbf16>
    %c0_10 = arith.constant 0 : index
    %c0_11 = arith.constant 0 : index
    %c0_12 = arith.constant 0 : index
    %c0_13 = arith.constant 0 : index
    %10 = vector.load %arg21[%c0_10, %c0_11, %c0_12, %c0_13] : memref<1x3x24x32xbf16, #tpu.memory_space<vmem>>, vector<1x1x24x32xbf16>
    %11 = vector.shape_cast %10 : vector<1x1x24x32xbf16> to vector<24x32xbf16>
    %12 = vector.shape_cast %9 : vector<24x32xbf16> to vector<1x1x24x32xbf16>
    tpu.vector_store %arg21[%c0_10, %c0_11, %c0_12, %c0_13], %12 {strides = array<i32>} : memref<1x3x24x32xbf16, #tpu.memory_space<vmem>>, vector<1x1x24x32xbf16>,
    %c0_14 = arith.constant 0 : index
    %c0_15 = arith.constant 0 : index
    %c0_16 = arith.constant 0 : index
    %13 = vector.load %arg6[%c0_14, %c0_15, %c0_16] : memref<2x1x32xf32, #tpu.memory_space<vmem>>, vector<1x1x32xf32>
    %14 = vector.shape_cast %13 : vector<1x1x32xf32> to vector<1x32xf32>
    %c0_17 = arith.constant 0 : index
    %c0_18 = arith.constant 0 : index
    %c0_19 = arith.constant 0 : index
    %15 = vector.load %arg7[%c0_17, %c0_18, %c0_19] : memref<2x1x32xf32, #tpu.memory_space<vmem>>, vector<1x1x32xf32>
    %16 = vector.shape_cast %15 : vector<1x1x32xf32> to vector<1x32xf32>
    %cst_20 = arith.constant dense<0.000000e+00> : vector<24xf32>
    %17 = vector.multi_reduction <add>, %8, %cst_20 [1] : vector<24x32xf32> to vector<24xf32>
    %18 = vector.shape_cast %17 : vector<24xf32> to vector<24x1xf32>
    %cst_21 = arith.constant 3.200000e+01 : f32
    %19 = vector.broadcast %cst_21 : f32 to vector<24x1xf32>
    %20 = arith.divf %18, %19 : vector<24x1xf32>
    %21 = vector.broadcast %20 : vector<24x1xf32> to vector<24x32xf32>
    %22 = arith.subf %8, %21 : vector<24x32xf32>
    %23 = arith.mulf %22, %22 : vector<24x32xf32>
    %cst_22 = arith.constant dense<0.000000e+00> : vector<24xf32>
    %24 = vector.multi_reduction <add>, %23, %cst_22 [1] : vector<24x32xf32> to vector<24xf32>
    %25 = vector.shape_cast %24 : vector<24xf32> to vector<24x1xf32>
    %cst_23 = arith.constant 3.200000e+01 : f32
    %26 = vector.broadcast %cst_23 : f32 to vector<24x1xf32>
    %27 = arith.divf %25, %26 : vector<24x1xf32>
    %28 = vector.broadcast %20 : vector<24x1xf32> to vector<24x32xf32>
    %29 = arith.subf %8, %28 : vector<24x32xf32>
    %cst_24 = arith.constant 9.99999997E-7 : f32
    %30 = vector.broadcast %cst_24 : f32 to vector<24x1xf32>
    %31 = arith.addf %27, %30 : vector<24x1xf32>
    %32 = math.rsqrt %31 : vector<24x1xf32>
    %33 = vector.broadcast %32 : vector<24x1xf32> to vector<24x32xf32>
    %34 = arith.mulf %29, %33 : vector<24x32xf32>
    %35 = vector.broadcast %14 : vector<1x32xf32> to vector<24x32xf32>
    %36 = arith.mulf %34, %35 : vector<24x32xf32>
    %37 = vector.broadcast %16 : vector<1x32xf32> to vector<24x32xf32>
    %38 = arith.addf %36, %37 : vector<24x32xf32>
    %39 = arith.truncf %38 : vector<24x32xf32> to vector<24x32xbf16>
    %c0_25 = arith.constant 0 : index
    %c0_26 = arith.constant 0 : index
    %c0_27 = arith.constant 0 : index
    %40 = vector.load %arg8[%c0_25, %c0_26, %c0_27] : memref<2x32x96xbf16, #tpu.memory_space<vmem>>, vector<1x32x96xbf16>
    %41 = vector.shape_cast %40 : vector<1x32x96xbf16> to vector<32x96xbf16>
    %cst_28 = arith.constant dense<0.000000e+00> : vector<24x96xf32>
    %42 = tpu.matmul %39, %41, %cst_28 {dimension_numbers = #tpu.dot_dimension_numbers<[1], [0], [0], [1], [0, 0, 1, 1], [], []>} : vector<24x32xbf16>, vector<32x96xbf16>, vector<24x96xf32> -> vector<24x96xf32>
    %c0_29 = arith.constant 0 : index
    %c0_30 = arith.constant 0 : index
    %c0_31 = arith.constant 0 : index
    %43 = vector.load %arg9[%c0_29, %c0_30, %c0_31] : memref<2x1x96xf32, #tpu.memory_space<vmem>>, vector<1x1x96xf32>
    %44 = vector.shape_cast %43 : vector<1x1x96xf32> to vector<1x96xf32>
    %45 = vector.broadcast %44 : vector<1x96xf32> to vector<24x96xf32>
    %46 = arith.addf %42, %45 : vector<24x96xf32>
    %47 = vector.extract_strided_slice %46 {offsets = [0, 0], sizes = [24, 32], strides = [1, 1]} : vector<24x96xf32> to vector<24x32xf32>
    %cst_32 = arith.constant 0.353553385 : f32
    %48 = vector.broadcast %cst_32 : f32 to vector<24x32xf32>
    %49 = arith.mulf %47, %48 : vector<24x32xf32>
    %50 = arith.truncf %49 : vector<24x32xf32> to vector<24x32xbf16>
    %51 = vector.extract_strided_slice %46 {offsets = [0, 32], sizes = [24, 32], strides = [1, 1]} : vector<24x96xf32> to vector<24x32xf32>
    %52 = vector.extract_strided_slice %46 {offsets = [0, 64], sizes = [24, 32], strides = [1, 1]} : vector<24x96xf32> to vector<24x32xf32>
    %53 = tpu.concatenate %51, %51, %51, %51 in 0 : vector<24x32xf32>, vector<24x32xf32>, vector<24x32xf32>, vector<24x32xf32> -> vector<96x32xf32>
    %54 = arith.mulf %53, %0 : vector<96x32xf32>
    %55 = arith.truncf %54 : vector<96x32xf32> to vector<96x32xbf16>
    %cst_33 = arith.constant dense<0.000000e+00> : vector<24x96xf32>
    %56 = tpu.matmul %50, %55, %cst_33 {dimension_numbers = #tpu.dot_dimension_numbers<[1], [1], [0], [0], [0, 0, 1, 0], [], []>} : vector<24x32xbf16>, vector<96x32xbf16>, vector<24x96xf32> -> vector<24x96xf32>
    %57 = vector.broadcast %2 : vector<1x96xf32> to vector<24x96xf32>
    %58 = arith.addf %56, %57 : vector<24x96xf32>
    %cst_34 = arith.constant dense<0xFF800000> : vector<24xf32>
    %59 = vector.multi_reduction <maximumf>, %58, %cst_34 [1] : vector<24x96xf32> to vector<24xf32>
    %60 = vector.shape_cast %59 : vector<24xf32> to vector<24x1xf32>
    %61 = vector.broadcast %60 : vector<24x1xf32> to vector<24x96xf32>
    %62 = arith.subf %58, %61 : vector<24x96xf32>
    %63 = math.exp %62 : vector<24x96xf32>
    %64 = arith.truncf %63 : vector<24x96xf32> to vector<24x96xbf16>
    %65 = tpu.concatenate %52, %52, %52, %52 in 0 : vector<24x32xf32>, vector<24x32xf32>, vector<24x32xf32>, vector<24x32xf32> -> vector<96x32xf32>
    %66 = arith.mulf %65, %0 : vector<96x32xf32>
    %67 = arith.truncf %66 : vector<96x32xf32> to vector<96x32xbf16>
    %cst_35 = arith.constant dense<0.000000e+00> : vector<24x32xf32>
    %68 = tpu.matmul %64, %67, %cst_35 {dimension_numbers = #tpu.dot_dimension_numbers<[1], [0], [0], [1], [0, 0, 1, 1], [], []>} : vector<24x96xbf16>, vector<96x32xbf16>, vector<24x32xf32> -> vector<24x32xf32>
    %cst_36 = arith.constant dense<0.000000e+00> : vector<24x32xf32>
    %69 = tpu.matmul %64, %1, %cst_36 {dimension_numbers = #tpu.dot_dimension_numbers<[1], [0], [0], [1], [0, 0, 1, 1], [], []>} : vector<24x96xbf16>, vector<96x32xbf16>, vector<24x32xf32> -> vector<24x32xf32>
    %70 = tpu.reciprocal %69 {approx = true} : vector<24x32xf32> -> vector<24x32xf32>
    %71 = arith.mulf %68, %70 : vector<24x32xf32>
    %72 = arith.truncf %71 : vector<24x32xf32> to vector<24x32xbf16>
    %c0_37 = arith.constant 0 : index
    %c0_38 = arith.constant 0 : index
    %c0_39 = arith.constant 0 : index
    %73 = vector.load %arg10[%c0_37, %c0_38, %c0_39] : memref<2x32x32xbf16, #tpu.memory_space<vmem>>, vector<1x32x32xbf16>
    %74 = vector.shape_cast %73 : vector<1x32x32xbf16> to vector<32x32xbf16>
    %cst_40 = arith.constant dense<0.000000e+00> : vector<24x32xf32>
    %75 = tpu.matmul %72, %74, %cst_40 {dimension_numbers = #tpu.dot_dimension_numbers<[1], [0], [0], [1], [0, 0, 1, 1], [], []>} : vector<24x32xbf16>, vector<32x32xbf16>, vector<24x32xf32> -> vector<24x32xf32>
    %c0_41 = arith.constant 0 : index
    %c0_42 = arith.constant 0 : index
    %c0_43 = arith.constant 0 : index
    %76 = vector.load %arg11[%c0_41, %c0_42, %c0_43] : memref<2x1x32xf32, #tpu.memory_space<vmem>>, vector<1x1x32xf32>
    %77 = vector.shape_cast %76 : vector<1x1x32xf32> to vector<1x32xf32>
    %78 = vector.broadcast %77 : vector<1x32xf32> to vector<24x32xf32>
    %79 = arith.addf %75, %78 : vector<24x32xf32>
    %80 = arith.addf %8, %79 : vector<24x32xf32>
    %c0_44 = arith.constant 0 : index
    %c0_45 = arith.constant 0 : index
    %c0_46 = arith.constant 0 : index
    %81 = vector.load %arg12[%c0_44, %c0_45, %c0_46] : memref<2x1x32xf32, #tpu.memory_space<vmem>>, vector<1x1x32xf32>
    %82 = vector.shape_cast %81 : vector<1x1x32xf32> to vector<1x32xf32>
    %c0_47 = arith.constant 0 : index
    %c0_48 = arith.constant 0 : index
    %c0_49 = arith.constant 0 : index
    %83 = vector.load %arg13[%c0_47, %c0_48, %c0_49] : memref<2x1x32xf32, #tpu.memory_space<vmem>>, vector<1x1x32xf32>
    %84 = vector.shape_cast %83 : vector<1x1x32xf32> to vector<1x32xf32>
    %cst_50 = arith.constant dense<0.000000e+00> : vector<24xf32>
    %85 = vector.multi_reduction <add>, %80, %cst_50 [1] : vector<24x32xf32> to vector<24xf32>
    %86 = vector.shape_cast %85 : vector<24xf32> to vector<24x1xf32>
    %cst_51 = arith.constant 3.200000e+01 : f32
    %87 = vector.broadcast %cst_51 : f32 to vector<24x1xf32>
    %88 = arith.divf %86, %87 : vector<24x1xf32>
    %89 = vector.broadcast %88 : vector<24x1xf32> to vector<24x32xf32>
    %90 = arith.subf %80, %89 : vector<24x32xf32>
    %91 = arith.mulf %90, %90 : vector<24x32xf32>
    %cst_52 = arith.constant dense<0.000000e+00> : vector<24xf32>
    %92 = vector.multi_reduction <add>, %91, %cst_52 [1] : vector<24x32xf32> to vector<24xf32>
    %93 = vector.shape_cast %92 : vector<24xf32> to vector<24x1xf32>
    %cst_53 = arith.constant 3.200000e+01 : f32
    %94 = vector.broadcast %cst_53 : f32 to vector<24x1xf32>
    %95 = arith.divf %93, %94 : vector<24x1xf32>
    %96 = vector.broadcast %88 : vector<24x1xf32> to vector<24x32xf32>
    %97 = arith.subf %80, %96 : vector<24x32xf32>
    %cst_54 = arith.constant 9.99999997E-7 : f32
    %98 = vector.broadcast %cst_54 : f32 to vector<24x1xf32>
    %99 = arith.addf %95, %98 : vector<24x1xf32>
    %100 = math.rsqrt %99 : vector<24x1xf32>
    %101 = vector.broadcast %100 : vector<24x1xf32> to vector<24x32xf32>
    %102 = arith.mulf %97, %101 : vector<24x32xf32>
    %103 = vector.broadcast %82 : vector<1x32xf32> to vector<24x32xf32>
    %104 = arith.mulf %102, %103 : vector<24x32xf32>
    %105 = vector.broadcast %84 : vector<1x32xf32> to vector<24x32xf32>
    %106 = arith.addf %104, %105 : vector<24x32xf32>
    %107 = arith.truncf %106 : vector<24x32xf32> to vector<24x32xbf16>
    %c0_55 = arith.constant 0 : index
    %c0_56 = arith.constant 0 : index
    %c0_57 = arith.constant 0 : index
    %108 = vector.load %arg14[%c0_55, %c0_56, %c0_57] : memref<2x32x128xbf16, #tpu.memory_space<vmem>>, vector<1x32x128xbf16>
    %109 = vector.shape_cast %108 : vector<1x32x128xbf16> to vector<32x128xbf16>
    %cst_58 = arith.constant dense<0.000000e+00> : vector<24x128xf32>
    %110 = tpu.matmul %107, %109, %cst_58 {dimension_numbers = #tpu.dot_dimension_numbers<[1], [0], [0], [1], [0, 0, 1, 1], [], []>} : vector<24x32xbf16>, vector<32x128xbf16>, vector<24x128xf32> -> vector<24x128xf32>
    %c0_59 = arith.constant 0 : index
    %c0_60 = arith.constant 0 : index
    %c0_61 = arith.constant 0 : index
    %111 = vector.load %arg15[%c0_59, %c0_60, %c0_61] : memref<2x1x128xf32, #tpu.memory_space<vmem>>, vector<1x1x128xf32>
    %112 = vector.shape_cast %111 : vector<1x1x128xf32> to vector<1x128xf32>
    %113 = vector.broadcast %112 : vector<1x128xf32> to vector<24x128xf32>
    %114 = arith.addf %110, %113 : vector<24x128xf32>
    %115 = arith.mulf %114, %114 : vector<24x128xf32>
    %116 = arith.mulf %114, %115 : vector<24x128xf32>
    %cst_62 = arith.constant 4.471500e-02 : f32
    %117 = vector.broadcast %cst_62 : f32 to vector<24x128xf32>
    %118 = arith.mulf %117, %116 : vector<24x128xf32>
    %119 = arith.addf %114, %118 : vector<24x128xf32>
    %cst_63 = arith.constant 0.797884583 : f32
    %120 = vector.broadcast %cst_63 : f32 to vector<24x128xf32>
    %121 = arith.mulf %120, %119 : vector<24x128xf32>
    %122 = math.tanh %121 : vector<24x128xf32>
    %cst_64 = arith.constant 1.000000e+00 : f32
    %123 = vector.broadcast %cst_64 : f32 to vector<24x128xf32>
    %124 = arith.addf %123, %122 : vector<24x128xf32>
    %cst_65 = arith.constant 5.000000e-01 : f32
    %125 = vector.broadcast %cst_65 : f32 to vector<24x128xf32>
    %126 = arith.mulf %125, %124 : vector<24x128xf32>
    %127 = arith.mulf %114, %126 : vector<24x128xf32>
    %128 = arith.truncf %127 : vector<24x128xf32> to vector<24x128xbf16>
    %c0_66 = arith.constant 0 : index
    %c0_67 = arith.constant 0 : index
    %c0_68 = arith.constant 0 : index
    %129 = vector.load %arg16[%c0_66, %c0_67, %c0_68] : memref<2x128x32xbf16, #tpu.memory_space<vmem>>, vector<1x128x32xbf16>
    %130 = vector.shape_cast %129 : vector<1x128x32xbf16> to vector<128x32xbf16>
    %cst_69 = arith.constant dense<0.000000e+00> : vector<24x32xf32>
    %131 = tpu.matmul %128, %130, %cst_69 {dimension_numbers = #tpu.dot_dimension_numbers<[1], [0], [0], [1], [0, 0, 1, 1], [], []>} : vector<24x128xbf16>, vector<128x32xbf16>, vector<24x32xf32> -> vector<24x32xf32>
    %c0_70 = arith.constant 0 : index
    %c0_71 = arith.constant 0 : index
    %c0_72 = arith.constant 0 : index
    %132 = vector.load %arg17[%c0_70, %c0_71, %c0_72] : memref<2x1x32xf32, #tpu.memory_space<vmem>>, vector<1x1x32xf32>
    %133 = vector.shape_cast %132 : vector<1x1x32xf32> to vector<1x32xf32>
    %134 = vector.broadcast %133 : vector<1x32xf32> to vector<24x32xf32>
    %135 = arith.addf %131, %134 : vector<24x32xf32>
    %136 = arith.addf %80, %135 : vector<24x32xf32>
    %137 = arith.truncf %136 : vector<24x32xf32> to vector<24x32xbf16>
    %c0_73 = arith.constant 0 : index
    %c1 = arith.constant 1 : index
    %c0_74 = arith.constant 0 : index
    %c0_75 = arith.constant 0 : index
    %138 = vector.load %arg21[%c0_73, %c1, %c0_74, %c0_75] : memref<1x3x24x32xbf16, #tpu.memory_space<vmem>>, vector<1x1x24x32xbf16>
    %139 = vector.shape_cast %138 : vector<1x1x24x32xbf16> to vector<24x32xbf16>
    %140 = vector.shape_cast %137 : vector<24x32xbf16> to vector<1x1x24x32xbf16>
    tpu.vector_store %arg21[%c0_73, %c1, %c0_74, %c0_75], %140 {strides = array<i32>} : memref<1x3x24x32xbf16, #tpu.memory_space<vmem>>, vector<1x1x24x32xbf16>,
    %c1_76 = arith.constant 1 : index
    %c0_77 = arith.constant 0 : index
    %c0_78 = arith.constant 0 : index
    %141 = vector.load %arg6[%c1_76, %c0_77, %c0_78] : memref<2x1x32xf32, #tpu.memory_space<vmem>>, vector<1x1x32xf32>
    %142 = vector.shape_cast %141 : vector<1x1x32xf32> to vector<1x32xf32>
    %c1_79 = arith.constant 1 : index
    %c0_80 = arith.constant 0 : index
    %c0_81 = arith.constant 0 : index
    %143 = vector.load %arg7[%c1_79, %c0_80, %c0_81] : memref<2x1x32xf32, #tpu.memory_space<vmem>>, vector<1x1x32xf32>
    %144 = vector.shape_cast %143 : vector<1x1x32xf32> to vector<1x32xf32>
    %cst_82 = arith.constant dense<0.000000e+00> : vector<24xf32>
    %145 = vector.multi_reduction <add>, %136, %cst_82 [1] : vector<24x32xf32> to vector<24xf32>
    %146 = vector.shape_cast %145 : vector<24xf32> to vector<24x1xf32>
    %cst_83 = arith.constant 3.200000e+01 : f32
    %147 = vector.broadcast %cst_83 : f32 to vector<24x1xf32>
    %148 = arith.divf %146, %147 : vector<24x1xf32>
    %149 = vector.broadcast %148 : vector<24x1xf32> to vector<24x32xf32>
    %150 = arith.subf %136, %149 : vector<24x32xf32>
    %151 = arith.mulf %150, %150 : vector<24x32xf32>
    %cst_84 = arith.constant dense<0.000000e+00> : vector<24xf32>
    %152 = vector.multi_reduction <add>, %151, %cst_84 [1] : vector<24x32xf32> to vector<24xf32>
    %153 = vector.shape_cast %152 : vector<24xf32> to vector<24x1xf32>
    %cst_85 = arith.constant 3.200000e+01 : f32
    %154 = vector.broadcast %cst_85 : f32 to vector<24x1xf32>
    %155 = arith.divf %153, %154 : vector<24x1xf32>
    %156 = vector.broadcast %148 : vector<24x1xf32> to vector<24x32xf32>
    %157 = arith.subf %136, %156 : vector<24x32xf32>
    %cst_86 = arith.constant 9.99999997E-7 : f32
    %158 = vector.broadcast %cst_86 : f32 to vector<24x1xf32>
    %159 = arith.addf %155, %158 : vector<24x1xf32>
    %160 = math.rsqrt %159 : vector<24x1xf32>
    %161 = vector.broadcast %160 : vector<24x1xf32> to vector<24x32xf32>
    %162 = arith.mulf %157, %161 : vector<24x32xf32>
    %163 = vector.broadcast %142 : vector<1x32xf32> to vector<24x32xf32>
    %164 = arith.mulf %162, %163 : vector<24x32xf32>
    %165 = vector.broadcast %144 : vector<1x32xf32> to vector<24x32xf32>
    %166 = arith.addf %164, %165 : vector<24x32xf32>
    %167 = arith.truncf %166 : vector<24x32xf32> to vector<24x32xbf16>
    %c1_87 = arith.constant 1 : index
    %c0_88 = arith.constant 0 : index
    %c0_89 = arith.constant 0 : index
    %168 = vector.load %arg8[%c1_87, %c0_88, %c0_89] : memref<2x32x96xbf16, #tpu.memory_space<vmem>>, vector<1x32x96xbf16>
    %169 = vector.shape_cast %168 : vector<1x32x96xbf16> to vector<32x96xbf16>
    %cst_90 = arith.constant dense<0.000000e+00> : vector<24x96xf32>
    %170 = tpu.matmul %167, %169, %cst_90 {dimension_numbers = #tpu.dot_dimension_numbers<[1], [0], [0], [1], [0, 0, 1, 1], [], []>} : vector<24x32xbf16>, vector<32x96xbf16>, vector<24x96xf32> -> vector<24x96xf32>
    %c1_91 = arith.constant 1 : index
    %c0_92 = arith.constant 0 : index
    %c0_93 = arith.constant 0 : index
    %171 = vector.load %arg9[%c1_91, %c0_92, %c0_93] : memref<2x1x96xf32, #tpu.memory_space<vmem>>, vector<1x1x96xf32>
    %172 = vector.shape_cast %171 : vector<1x1x96xf32> to vector<1x96xf32>
    %173 = vector.broadcast %172 : vector<1x96xf32> to vector<24x96xf32>
    %174 = arith.addf %170, %173 : vector<24x96xf32>
    %175 = vector.extract_strided_slice %174 {offsets = [0, 0], sizes = [24, 32], strides = [1, 1]} : vector<24x96xf32> to vector<24x32xf32>
    %cst_94 = arith.constant 0.353553385 : f32
    %176 = vector.broadcast %cst_94 : f32 to vector<24x32xf32>
    %177 = arith.mulf %175, %176 : vector<24x32xf32>
    %178 = arith.truncf %177 : vector<24x32xf32> to vector<24x32xbf16>
    %179 = vector.extract_strided_slice %174 {offsets = [0, 32], sizes = [24, 32], strides = [1, 1]} : vector<24x96xf32> to vector<24x32xf32>
    %180 = vector.extract_strided_slice %174 {offsets = [0, 64], sizes = [24, 32], strides = [1, 1]} : vector<24x96xf32> to vector<24x32xf32>
    %181 = tpu.concatenate %179, %179, %179, %179 in 0 : vector<24x32xf32>, vector<24x32xf32>, vector<24x32xf32>, vector<24x32xf32> -> vector<96x32xf32>
    %182 = arith.mulf %181, %0 : vector<96x32xf32>
    %183 = arith.truncf %182 : vector<96x32xf32> to vector<96x32xbf16>
    %cst_95 = arith.constant dense<0.000000e+00> : vector<24x96xf32>
    %184 = tpu.matmul %178, %183, %cst_95 {dimension_numbers = #tpu.dot_dimension_numbers<[1], [1], [0], [0], [0, 0, 1, 0], [], []>} : vector<24x32xbf16>, vector<96x32xbf16>, vector<24x96xf32> -> vector<24x96xf32>
    %185 = vector.broadcast %2 : vector<1x96xf32> to vector<24x96xf32>
    %186 = arith.addf %184, %185 : vector<24x96xf32>
    %cst_96 = arith.constant dense<0xFF800000> : vector<24xf32>
    %187 = vector.multi_reduction <maximumf>, %186, %cst_96 [1] : vector<24x96xf32> to vector<24xf32>
    %188 = vector.shape_cast %187 : vector<24xf32> to vector<24x1xf32>
    %189 = vector.broadcast %188 : vector<24x1xf32> to vector<24x96xf32>
    %190 = arith.subf %186, %189 : vector<24x96xf32>
    %191 = math.exp %190 : vector<24x96xf32>
    %192 = arith.truncf %191 : vector<24x96xf32> to vector<24x96xbf16>
    %193 = tpu.concatenate %180, %180, %180, %180 in 0 : vector<24x32xf32>, vector<24x32xf32>, vector<24x32xf32>, vector<24x32xf32> -> vector<96x32xf32>
    %194 = arith.mulf %193, %0 : vector<96x32xf32>
    %195 = arith.truncf %194 : vector<96x32xf32> to vector<96x32xbf16>
    %cst_97 = arith.constant dense<0.000000e+00> : vector<24x32xf32>
    %196 = tpu.matmul %192, %195, %cst_97 {dimension_numbers = #tpu.dot_dimension_numbers<[1], [0], [0], [1], [0, 0, 1, 1], [], []>} : vector<24x96xbf16>, vector<96x32xbf16>, vector<24x32xf32> -> vector<24x32xf32>
    %cst_98 = arith.constant dense<0.000000e+00> : vector<24x32xf32>
    %197 = tpu.matmul %192, %1, %cst_98 {dimension_numbers = #tpu.dot_dimension_numbers<[1], [0], [0], [1], [0, 0, 1, 1], [], []>} : vector<24x96xbf16>, vector<96x32xbf16>, vector<24x32xf32> -> vector<24x32xf32>
    %198 = tpu.reciprocal %197 {approx = true} : vector<24x32xf32> -> vector<24x32xf32>
    %199 = arith.mulf %196, %198 : vector<24x32xf32>
    %200 = arith.truncf %199 : vector<24x32xf32> to vector<24x32xbf16>
    %c1_99 = arith.constant 1 : index
    %c0_100 = arith.constant 0 : index
    %c0_101 = arith.constant 0 : index
    %201 = vector.load %arg10[%c1_99, %c0_100, %c0_101] : memref<2x32x32xbf16, #tpu.memory_space<vmem>>, vector<1x32x32xbf16>
    %202 = vector.shape_cast %201 : vector<1x32x32xbf16> to vector<32x32xbf16>
    %cst_102 = arith.constant dense<0.000000e+00> : vector<24x32xf32>
    %203 = tpu.matmul %200, %202, %cst_102 {dimension_numbers = #tpu.dot_dimension_numbers<[1], [0], [0], [1], [0, 0, 1, 1], [], []>} : vector<24x32xbf16>, vector<32x32xbf16>, vector<24x32xf32> -> vector<24x32xf32>
    %c1_103 = arith.constant 1 : index
    %c0_104 = arith.constant 0 : index
    %c0_105 = arith.constant 0 : index
    %204 = vector.load %arg11[%c1_103, %c0_104, %c0_105] : memref<2x1x32xf32, #tpu.memory_space<vmem>>, vector<1x1x32xf32>
    %205 = vector.shape_cast %204 : vector<1x1x32xf32> to vector<1x32xf32>
    %206 = vector.broadcast %205 : vector<1x32xf32> to vector<24x32xf32>
    %207 = arith.addf %203, %206 : vector<24x32xf32>
    %208 = arith.addf %136, %207 : vector<24x32xf32>
    %c1_106 = arith.constant 1 : index
    %c0_107 = arith.constant 0 : index
    %c0_108 = arith.constant 0 : index
    %209 = vector.load %arg12[%c1_106, %c0_107, %c0_108] : memref<2x1x32xf32, #tpu.memory_space<vmem>>, vector<1x1x32xf32>
    %210 = vector.shape_cast %209 : vector<1x1x32xf32> to vector<1x32xf32>
    %c1_109 = arith.constant 1 : index
    %c0_110 = arith.constant 0 : index
    %c0_111 = arith.constant 0 : index
    %211 = vector.load %arg13[%c1_109, %c0_110, %c0_111] : memref<2x1x32xf32, #tpu.memory_space<vmem>>, vector<1x1x32xf32>
    %212 = vector.shape_cast %211 : vector<1x1x32xf32> to vector<1x32xf32>
    %cst_112 = arith.constant dense<0.000000e+00> : vector<24xf32>
    %213 = vector.multi_reduction <add>, %208, %cst_112 [1] : vector<24x32xf32> to vector<24xf32>
    %214 = vector.shape_cast %213 : vector<24xf32> to vector<24x1xf32>
    %cst_113 = arith.constant 3.200000e+01 : f32
    %215 = vector.broadcast %cst_113 : f32 to vector<24x1xf32>
    %216 = arith.divf %214, %215 : vector<24x1xf32>
    %217 = vector.broadcast %216 : vector<24x1xf32> to vector<24x32xf32>
    %218 = arith.subf %208, %217 : vector<24x32xf32>
    %219 = arith.mulf %218, %218 : vector<24x32xf32>
    %cst_114 = arith.constant dense<0.000000e+00> : vector<24xf32>
    %220 = vector.multi_reduction <add>, %219, %cst_114 [1] : vector<24x32xf32> to vector<24xf32>
    %221 = vector.shape_cast %220 : vector<24xf32> to vector<24x1xf32>
    %cst_115 = arith.constant 3.200000e+01 : f32
    %222 = vector.broadcast %cst_115 : f32 to vector<24x1xf32>
    %223 = arith.divf %221, %222 : vector<24x1xf32>
    %224 = vector.broadcast %216 : vector<24x1xf32> to vector<24x32xf32>
    %225 = arith.subf %208, %224 : vector<24x32xf32>
    %cst_116 = arith.constant 9.99999997E-7 : f32
    %226 = vector.broadcast %cst_116 : f32 to vector<24x1xf32>
    %227 = arith.addf %223, %226 : vector<24x1xf32>
    %228 = math.rsqrt %227 : vector<24x1xf32>
    %229 = vector.broadcast %228 : vector<24x1xf32> to vector<24x32xf32>
    %230 = arith.mulf %225, %229 : vector<24x32xf32>
    %231 = vector.broadcast %210 : vector<1x32xf32> to vector<24x32xf32>
    %232 = arith.mulf %230, %231 : vector<24x32xf32>
    %233 = vector.broadcast %212 : vector<1x32xf32> to vector<24x32xf32>
    %234 = arith.addf %232, %233 : vector<24x32xf32>
    %235 = arith.truncf %234 : vector<24x32xf32> to vector<24x32xbf16>
    %c1_117 = arith.constant 1 : index
    %c0_118 = arith.constant 0 : index
    %c0_119 = arith.constant 0 : index
    %236 = vector.load %arg14[%c1_117, %c0_118, %c0_119] : memref<2x32x128xbf16, #tpu.memory_space<vmem>>, vector<1x32x128xbf16>
    %237 = vector.shape_cast %236 : vector<1x32x128xbf16> to vector<32x128xbf16>
    %cst_120 = arith.constant dense<0.000000e+00> : vector<24x128xf32>
    %238 = tpu.matmul %235, %237, %cst_120 {dimension_numbers = #tpu.dot_dimension_numbers<[1], [0], [0], [1], [0, 0, 1, 1], [], []>} : vector<24x32xbf16>, vector<32x128xbf16>, vector<24x128xf32> -> vector<24x128xf32>
    %c1_121 = arith.constant 1 : index
    %c0_122 = arith.constant 0 : index
    %c0_123 = arith.constant 0 : index
    %239 = vector.load %arg15[%c1_121, %c0_122, %c0_123] : memref<2x1x128xf32, #tpu.memory_space<vmem>>, vector<1x1x128xf32>
    %240 = vector.shape_cast %239 : vector<1x1x128xf32> to vector<1x128xf32>
    %241 = vector.broadcast %240 : vector<1x128xf32> to vector<24x128xf32>
    %242 = arith.addf %238, %241 : vector<24x128xf32>
    %243 = arith.mulf %242, %242 : vector<24x128xf32>
    %244 = arith.mulf %242, %243 : vector<24x128xf32>
    %cst_124 = arith.constant 4.471500e-02 : f32
    %245 = vector.broadcast %cst_124 : f32 to vector<24x128xf32>
    %246 = arith.mulf %245, %244 : vector<24x128xf32>
    %247 = arith.addf %242, %246 : vector<24x128xf32>
    %cst_125 = arith.constant 0.797884583 : f32
    %248 = vector.broadcast %cst_125 : f32 to vector<24x128xf32>
    %249 = arith.mulf %248, %247 : vector<24x128xf32>
    %250 = math.tanh %249 : vector<24x128xf32>
    %cst_126 = arith.constant 1.000000e+00 : f32
    %251 = vector.broadcast %cst_126 : f32 to vector<24x128xf32>
    %252 = arith.addf %251, %250 : vector<24x128xf32>
    %cst_127 = arith.constant 5.000000e-01 : f32
    %253 = vector.broadcast %cst_127 : f32 to vector<24x128xf32>
    %254 = arith.mulf %253, %252 : vector<24x128xf32>
    %255 = arith.mulf %242, %254 : vector<24x128xf32>
    %256 = arith.truncf %255 : vector<24x128xf32> to vector<24x128xbf16>
    %c1_128 = arith.constant 1 : index
    %c0_129 = arith.constant 0 : index
    %c0_130 = arith.constant 0 : index
    %257 = vector.load %arg16[%c1_128, %c0_129, %c0_130] : memref<2x128x32xbf16, #tpu.memory_space<vmem>>, vector<1x128x32xbf16>
    %258 = vector.shape_cast %257 : vector<1x128x32xbf16> to vector<128x32xbf16>
    %cst_131 = arith.constant dense<0.000000e+00> : vector<24x32xf32>
    %259 = tpu.matmul %256, %258, %cst_131 {dimension_numbers = #tpu.dot_dimension_numbers<[1], [0], [0], [1], [0, 0, 1, 1], [], []>} : vector<24x128xbf16>, vector<128x32xbf16>, vector<24x32xf32> -> vector<24x32xf32>
    %c1_132 = arith.constant 1 : index
    %c0_133 = arith.constant 0 : index
    %c0_134 = arith.constant 0 : index
    %260 = vector.load %arg17[%c1_132, %c0_133, %c0_134] : memref<2x1x32xf32, #tpu.memory_space<vmem>>, vector<1x1x32xf32>
    %261 = vector.shape_cast %260 : vector<1x1x32xf32> to vector<1x32xf32>
    %262 = vector.broadcast %261 : vector<1x32xf32> to vector<24x32xf32>
    %263 = arith.addf %259, %262 : vector<24x32xf32>
    %264 = arith.addf %208, %263 : vector<24x32xf32>
    %265 = arith.truncf %264 : vector<24x32xf32> to vector<24x32xbf16>
    %c0_135 = arith.constant 0 : index
    %c2 = arith.constant 2 : index
    %c0_136 = arith.constant 0 : index
    %c0_137 = arith.constant 0 : index
    %266 = vector.load %arg21[%c0_135, %c2, %c0_136, %c0_137] : memref<1x3x24x32xbf16, #tpu.memory_space<vmem>>, vector<1x1x24x32xbf16>
    %267 = vector.shape_cast %266 : vector<1x1x24x32xbf16> to vector<24x32xbf16>
    %268 = vector.shape_cast %265 : vector<24x32xbf16> to vector<1x1x24x32xbf16>
    tpu.vector_store %arg21[%c0_135, %c2, %c0_136, %c0_137], %268 {strides = array<i32>} : memref<1x3x24x32xbf16, #tpu.memory_space<vmem>>, vector<1x1x24x32xbf16>,
    %c0_138 = arith.constant 0 : index
    %c0_139 = arith.constant 0 : index
    %269 = vector.load %arg18[%c0_138, %c0_139] : memref<1x32xf32, #tpu.memory_space<vmem>>, vector<1x32xf32>
    %c0_140 = arith.constant 0 : index
    %c0_141 = arith.constant 0 : index
    %270 = vector.load %arg19[%c0_140, %c0_141] : memref<1x32xf32, #tpu.memory_space<vmem>>, vector<1x32xf32>
    %cst_142 = arith.constant dense<0.000000e+00> : vector<24xf32>
    %271 = vector.multi_reduction <add>, %264, %cst_142 [1] : vector<24x32xf32> to vector<24xf32>
    %272 = vector.shape_cast %271 : vector<24xf32> to vector<24x1xf32>
    %cst_143 = arith.constant 3.200000e+01 : f32
    %273 = vector.broadcast %cst_143 : f32 to vector<24x1xf32>
    %274 = arith.divf %272, %273 : vector<24x1xf32>
    %275 = vector.broadcast %274 : vector<24x1xf32> to vector<24x32xf32>
    %276 = arith.subf %264, %275 : vector<24x32xf32>
    %277 = arith.mulf %276, %276 : vector<24x32xf32>
    %cst_144 = arith.constant dense<0.000000e+00> : vector<24xf32>
    %278 = vector.multi_reduction <add>, %277, %cst_144 [1] : vector<24x32xf32> to vector<24xf32>
    %279 = vector.shape_cast %278 : vector<24xf32> to vector<24x1xf32>
    %cst_145 = arith.constant 3.200000e+01 : f32
    %280 = vector.broadcast %cst_145 : f32 to vector<24x1xf32>
    %281 = arith.divf %279, %280 : vector<24x1xf32>
    %282 = vector.broadcast %274 : vector<24x1xf32> to vector<24x32xf32>
    %283 = arith.subf %264, %282 : vector<24x32xf32>
    %cst_146 = arith.constant 9.99999997E-7 : f32
    %284 = vector.broadcast %cst_146 : f32 to vector<24x1xf32>
    %285 = arith.addf %281, %284 : vector<24x1xf32>
    %286 = math.rsqrt %285 : vector<24x1xf32>
    %287 = vector.broadcast %286 : vector<24x1xf32> to vector<24x32xf32>
    %288 = arith.mulf %283, %287 : vector<24x32xf32>
    %289 = vector.broadcast %269 : vector<1x32xf32> to vector<24x32xf32>
    %290 = arith.mulf %288, %289 : vector<24x32xf32>
    %291 = vector.broadcast %270 : vector<1x32xf32> to vector<24x32xf32>
    %292 = arith.addf %290, %291 : vector<24x32xf32>
    %c0_147 = arith.constant 0 : index
    %c0_148 = arith.constant 0 : index
    %c0_149 = arith.constant 0 : index
    %293 = vector.load %arg20[%c0_147, %c0_148, %c0_149] : memref<1x24x32xf32, #tpu.memory_space<vmem>>, vector<1x24x32xf32>
    %294 = vector.shape_cast %293 : vector<1x24x32xf32> to vector<24x32xf32>
    %295 = vector.shape_cast %292 : vector<24x32xf32> to vector<1x24x32xf32>
    tpu.vector_store %arg20[%c0_147, %c0_148, %c0_149], %295 {strides = array<i32>} : memref<1x24x32xf32, #tpu.memory_space<vmem>>, vector<1x24x32xf32>,
    return
  }
  func.func @transform_0(%arg0: i32) -> (i32, i32, i32) {
    %c0_i32 = arith.constant 0 : i32
    %c0_i32_0 = arith.constant 0 : i32
    %c0_i32_1 = arith.constant 0 : i32
    return %arg0, %c0_i32, %c0_i32_0 : i32, i32, i32
  }
  func.func @transform_1(%arg0: i32) -> (i32, i32) {
    %c0_i32 = arith.constant 0 : i32
    %c0_i32_0 = arith.constant 0 : i32
    %c0_i32_1 = arith.constant 0 : i32
    return %c0_i32, %c0_i32_0 : i32, i32
  }
  func.func @transform_2(%arg0: i32) -> (i32, i32) {
    %c0_i32 = arith.constant 0 : i32
    %c0_i32_0 = arith.constant 0 : i32
    %c0_i32_1 = arith.constant 0 : i32
    return %c0_i32, %c0_i32_0 : i32, i32
  }
  func.func @transform_3(%arg0: i32) -> (i32, i32) {
    %c0_i32 = arith.constant 0 : i32
    %c0_i32_0 = arith.constant 0 : i32
    %c0_i32_1 = arith.constant 0 : i32
    return %c0_i32, %c0_i32_0 : i32, i32
  }
  func.func @transform_4(%arg0: i32) -> (i32, i32) {
    %c0_i32 = arith.constant 0 : i32
    %c0_i32_0 = arith.constant 0 : i32
    %c0_i32_1 = arith.constant 0 : i32
    return %c0_i32, %c0_i32_0 : i32, i32
  }
  func.func @transform_5(%arg0: i32) -> (i32, i32, i32) {
    %c0_i32 = arith.constant 0 : i32
    %c0_i32_0 = arith.constant 0 : i32
    %c0_i32_1 = arith.constant 0 : i32
    %c0_i32_2 = arith.constant 0 : i32
    return %c0_i32, %c0_i32_0, %c0_i32_1 : i32, i32, i32
  }
  func.func @transform_6(%arg0: i32) -> (i32, i32, i32) {
    %c0_i32 = arith.constant 0 : i32
    %c0_i32_0 = arith.constant 0 : i32
    %c0_i32_1 = arith.constant 0 : i32
    %c0_i32_2 = arith.constant 0 : i32
    return %c0_i32, %c0_i32_0, %c0_i32_1 : i32, i32, i32
  }
  func.func @transform_7(%arg0: i32) -> (i32, i32, i32) {
    %c0_i32 = arith.constant 0 : i32
    %c0_i32_0 = arith.constant 0 : i32
    %c0_i32_1 = arith.constant 0 : i32
    %c0_i32_2 = arith.constant 0 : i32
    return %c0_i32, %c0_i32_0, %c0_i32_1 : i32, i32, i32
  }
  func.func @transform_8(%arg0: i32) -> (i32, i32, i32) {
    %c0_i32 = arith.constant 0 : i32
    %c0_i32_0 = arith.constant 0 : i32
    %c0_i32_1 = arith.constant 0 : i32
    %c0_i32_2 = arith.constant 0 : i32
    return %c0_i32, %c0_i32_0, %c0_i32_1 : i32, i32, i32
  }
  func.func @transform_9(%arg0: i32) -> (i32, i32, i32) {
    %c0_i32 = arith.constant 0 : i32
    %c0_i32_0 = arith.constant 0 : i32
    %c0_i32_1 = arith.constant 0 : i32
    %c0_i32_2 = arith.constant 0 : i32
    return %c0_i32, %c0_i32_0, %c0_i32_1 : i32, i32, i32
  }
  func.func @transform_10(%arg0: i32) -> (i32, i32, i32) {
    %c0_i32 = arith.constant 0 : i32
    %c0_i32_0 = arith.constant 0 : i32
    %c0_i32_1 = arith.constant 0 : i32
    %c0_i32_2 = arith.constant 0 : i32
    return %c0_i32, %c0_i32_0, %c0_i32_1 : i32, i32, i32
  }
  func.func @transform_11(%arg0: i32) -> (i32, i32, i32) {
    %c0_i32 = arith.constant 0 : i32
    %c0_i32_0 = arith.constant 0 : i32
    %c0_i32_1 = arith.constant 0 : i32
    %c0_i32_2 = arith.constant 0 : i32
    return %c0_i32, %c0_i32_0, %c0_i32_1 : i32, i32, i32
  }
  func.func @transform_12(%arg0: i32) -> (i32, i32, i32) {
    %c0_i32 = arith.constant 0 : i32
    %c0_i32_0 = arith.constant 0 : i32
    %c0_i32_1 = arith.constant 0 : i32
    %c0_i32_2 = arith.constant 0 : i32
    return %c0_i32, %c0_i32_0, %c0_i32_1 : i32, i32, i32
  }
  func.func @transform_13(%arg0: i32) -> (i32, i32, i32) {
    %c0_i32 = arith.constant 0 : i32
    %c0_i32_0 = arith.constant 0 : i32
    %c0_i32_1 = arith.constant 0 : i32
    %c0_i32_2 = arith.constant 0 : i32
    return %c0_i32, %c0_i32_0, %c0_i32_1 : i32, i32, i32
  }
  func.func @transform_14(%arg0: i32) -> (i32, i32, i32) {
    %c0_i32 = arith.constant 0 : i32
    %c0_i32_0 = arith.constant 0 : i32
    %c0_i32_1 = arith.constant 0 : i32
    %c0_i32_2 = arith.constant 0 : i32
    return %c0_i32, %c0_i32_0, %c0_i32_1 : i32, i32, i32
  }
  func.func @transform_15(%arg0: i32) -> (i32, i32, i32) {
    %c0_i32 = arith.constant 0 : i32
    %c0_i32_0 = arith.constant 0 : i32
    %c0_i32_1 = arith.constant 0 : i32
    %c0_i32_2 = arith.constant 0 : i32
    return %c0_i32, %c0_i32_0, %c0_i32_1 : i32, i32, i32
  }
  func.func @transform_16(%arg0: i32) -> (i32, i32, i32) {
    %c0_i32 = arith.constant 0 : i32
    %c0_i32_0 = arith.constant 0 : i32
    %c0_i32_1 = arith.constant 0 : i32
    %c0_i32_2 = arith.constant 0 : i32
    return %c0_i32, %c0_i32_0, %c0_i32_1 : i32, i32, i32
  }
  func.func @transform_17(%arg0: i32) -> (i32, i32) {
    %c0_i32 = arith.constant 0 : i32
    %c0_i32_0 = arith.constant 0 : i32
    %c0_i32_1 = arith.constant 0 : i32
    return %c0_i32, %c0_i32_0 : i32, i32
  }
  func.func @transform_18(%arg0: i32) -> (i32, i32) {
    %c0_i32 = arith.constant 0 : i32
    %c0_i32_0 = arith.constant 0 : i32
    %c0_i32_1 = arith.constant 0 : i32
    return %c0_i32, %c0_i32_0 : i32, i32
  }
  func.func @transform_19(%arg0: i32) -> (i32, i32, i32) {
    %c0_i32 = arith.constant 0 : i32
    %c0_i32_0 = arith.constant 0 : i32
    %c0_i32_1 = arith.constant 0 : i32
    return %arg0, %c0_i32, %c0_i32_0 : i32, i32, i32
  }
  func.func @transform_20(%arg0: i32) -> (i32, i32, i32, i32) {
    %c0_i32 = arith.constant 0 : i32
    %c0_i32_0 = arith.constant 0 : i32
    %c0_i32_1 = arith.constant 0 : i32
    %c0_i32_2 = arith.constant 0 : i32
    return %arg0, %c0_i32, %c0_i32_0, %c0_i32_1 : i32, i32, i32, i32
  }
}

</mosaic_0001>

<llo_original>
// kernel: _encode.1
$region0: #{_encode.1}
  #allocation0 [shape = 'u32[]', space=smem, size = 0x4, offset = 0x4, fixed_abs, tag = 'smem constant byte address 0x4 - core index']
  #allocation1 [shape = 'u32[144,128]{1,0:T(1,128)}', space=vmem, size = 0x12000, scoped, tag = 'internal scratch']
  %s0 = inlined_call_operand.vmem [shape: bf16[2,24,48], index: 0, kind: input, shape index: {}]
  %s1 = inlined_call_operand.vmem [shape: bf16[48,32], index: 1, kind: input, shape index: {}]
  %s2 = inlined_call_operand.vmem [shape: f32[24,32], index: 2, kind: input, shape index: {}]
  %s3 = inlined_call_operand.vmem [shape: f32[96,32], index: 3, kind: input, shape index: {}]
  %s4 = inlined_call_operand.vmem [shape: f32[1,96], index: 4, kind: input, shape index: {}]
  %s5 = inlined_call_operand.vmem [shape: f32[2,1,32], index: 5, kind: input, shape index: {}]
  %s6 = inlined_call_operand.vmem [shape: f32[2,1,32], index: 6, kind: input, shape index: {}]
  %s7 = inlined_call_operand.vmem [shape: bf16[2,32,96], index: 7, kind: input, shape index: {}]
  %s8 = inlined_call_operand.vmem [shape: f32[2,1,96], index: 8, kind: input, shape index: {}]
  %s9 = inlined_call_operand.vmem [shape: bf16[2,32,32], index: 9, kind: input, shape index: {}]
  %s10 = inlined_call_operand.vmem [shape: f32[2,1,32], index: 10, kind: input, shape index: {}]
  %s11 = inlined_call_operand.vmem [shape: f32[2,1,32], index: 11, kind: input, shape index: {}]
  %s12 = inlined_call_operand.vmem [shape: f32[2,1,32], index: 12, kind: input, shape index: {}]
  %s13 = inlined_call_operand.vmem [shape: bf16[2,32,128], index: 13, kind: input, shape index: {}]
  %s14 = inlined_call_operand.vmem [shape: f32[2,1,128], index: 14, kind: input, shape index: {}]
  %s15 = inlined_call_operand.vmem [shape: bf16[2,128,32], index: 15, kind: input, shape index: {}]
  %s16 = inlined_call_operand.vmem [shape: f32[2,1,32], index: 16, kind: input, shape index: {}]
  %s17 = inlined_call_operand.vmem [shape: f32[1,32], index: 17, kind: input, shape index: {}]
  %s18 = inlined_call_operand.vmem [shape: f32[1,32], index: 18, kind: input, shape index: {}]
  %s19 = inlined_call_operand.hbm [shape: f32[2,24,32], index: 19, kind: output, shape index: {0}]
  %s20 = inlined_call_operand.hbm [shape: bf16[2,3,24,32], index: 20, kind: output, shape index: {1}]
  %21 = xla_tuple %s19, %s20
  %s22 = sld [smem:[#allocation0]]
  $region117: #{_encode.1} parent=0
    _
  %s24 = ssub.s32 1, %s22
  %s25 = scalar_select 0, %s24, %s22
  $region1: #{_encode.1} parent=0
    #allocation2 [shape = 'u8[24576]{0}', space=vmem, size = 0x6000, scoped, tag = 'output window, operand 0']
    #allocation3 [shape = 's32[2]{0}', space=sflag, size = 0x8, scoped, tag = 'scoped memory for _encode.1']
    #allocation4 [shape = 'u8[36864]{0}', space=vmem, size = 0x9000, scoped, tag = 'output window, operand 1']
    #allocation5 [shape = 's32[2]{0}', space=sflag, size = 0x8, scoped, tag = 'scoped memory for _encode.1']
    %26 = vsyncpa [#allocation3], 0
    %s27 = scalar_lea.sflag [#allocation3], 1
    %28 = vsyncpa %s27, 0
    %29 = vsyncpa [#allocation5], 0
    %s30 = scalar_lea.sflag [#allocation5], 1
    %31 = vsyncpa %s30, 0
    loop: start=0, step=1, limit=4
    $region2: #{_encode.1} parent=1 // loop_pre_header
      _
    $region3: #{_encode.1} parent=1 // loop_header
      %s33 = sphi 0, %s37
      %p34 = scmp.ge.s32.totalorder %s33, 4
      %s43 = sphi 0, %s45
      %s46 = sphi 0, %s43
      %s47 = sphi 0, %s46
      %s63 = sphi 0, %s47
      %s67 = sphi 0, %s67
      %s69 = sphi 0, %s67
      %s70 = sphi 0, %s69
      %s84 = sphi 0, %s70
      %s88 = sphi 0, %s88
      %s90 = sphi 0, %s88
      %s91 = sphi 0, %s90
      %s105 = sphi 0, %s91
      %s109 = sphi 0, %s109
      %s111 = sphi 0, %s109
      %s112 = sphi 0, %s111
      %s126 = sphi 0, %s112
      %s130 = sphi 0, %s130
      %s132 = sphi 0, %s130
      %s133 = sphi 0, %s132
      %s147 = sphi 0, %s133
      %s151 = sphi 0, %s151
      %s153 = sphi 0, %s151
      %s154 = sphi 0, %s153
      %s168 = sphi 0, %s154
      %s172 = sphi 0, %s172
      %s174 = sphi 0, %s172
      %s175 = sphi 0, %s174
      %s189 = sphi 0, %s175
      %s193 = sphi 0, %s193
      %s195 = sphi 0, %s193
      %s196 = sphi 0, %s195
      %s210 = sphi 0, %s196
      %s214 = sphi 0, %s214
      %s216 = sphi 0, %s214
      %s217 = sphi 0, %s216
      %s231 = sphi 0, %s217
      %s235 = sphi 0, %s235
      %s237 = sphi 0, %s235
      %s238 = sphi 0, %s237
      %s252 = sphi 0, %s238
      %s256 = sphi 0, %s256
      %s258 = sphi 0, %s256
      %s259 = sphi 0, %s258
      %s273 = sphi 0, %s259
      %s277 = sphi 0, %s277
      %s279 = sphi 0, %s277
      %s280 = sphi 0, %s279
      %s294 = sphi 0, %s280
      %s298 = sphi 0, %s298
      %s300 = sphi 0, %s298
      %s301 = sphi 0, %s300
      %s315 = sphi 0, %s301
      %s319 = sphi 0, %s319
      %s321 = sphi 0, %s319
      %s322 = sphi 0, %s321
      %s336 = sphi 0, %s322
      %s340 = sphi 0, %s340
      %s342 = sphi 0, %s340
      %s343 = sphi 0, %s342
      %s357 = sphi 0, %s343
      %s361 = sphi 0, %s361
      %s363 = sphi 0, %s361
      %s364 = sphi 0, %s363
      %s378 = sphi 0, %s364
      %s382 = sphi 0, %s382
      %s384 = sphi 0, %s382
      %s385 = sphi 0, %s384
      %s399 = sphi 0, %s385
      %s403 = sphi 0, %s403
      %s405 = sphi 0, %s403
      %s406 = sphi 0, %s405
      %s420 = sphi 0, %s406
      %s424 = sphi 0, %s424
      %s426 = sphi 0, %s424
      %s427 = sphi 0, %s426
      %s441 = sphi 0, %s427
      %s447 = sphi 0, %s449
      %s450 = sphi 0, %s447
      %s451 = sphi 0, %s450
      %s467 = sphi 0, %s451
      %s473 = sphi 0, %s475
      %s476 = sphi 0, %s473
      %s477 = sphi 0, %s476
      %s493 = sphi 0, %s477
    $region4: #{_encode.1} parent=1 // loop_header_branch
      %36 = sbr.rel (%p34) target = $region8
    $region5: #{_encode.1} parent=1 // loop_body
      %s38 = ssub.s32 %s33, 1
      %s39 = ssub.s32 %s33, 2
      %s40 = sadd.s32 %s33, 1
      %s41 = ssub.s32 %s33, %s40
      %p42 = scmp.eq.s32.totalorder %s41, 0
      %s44 = sadd.s32 %s43, 1
      %s45 = scalar_select %p42, %s43, %s44
      %p48 = pneg %p42
      %p49 = scmp.eq.s32.totalorder %s33, 1
      %p50 = por %p48, %p49
      %p51 = scmp.ne.s32.totalorder %s43, %s46
      %p52 = scmp.eq.s32.totalorder %s33, 0
      %p53 = por %p51, %p52
      %p54 = scmp.ne.s32.totalorder %s43, %s46
      %p55 = scmp.eq.s32.totalorder %s38, 1
      %p56 = por %p54, %p55
      %p57 = scmp.ne.s32.totalorder %s46, %s47
      %p58 = scmp.eq.s32.totalorder %s38, 0
      %p59 = por %p57, %p58
      %p60 = scmp.ne.s32.totalorder %s46, %s47
      %p61 = scmp.eq.s32.totalorder %s39, 1
      %p62 = por %p60, %p61
      %p64 = scmp.ne.s32.totalorder %s47, %s63
      %p65 = scmp.eq.s32.totalorder %s39, 0
      %p66 = por %p64, %p65
      %s68 = sadd.s32 %s67, 1
      %p71 = scmp.eq.s32.totalorder %s33, 1
      %p72 = scmp.ne.s32.totalorder %s67, %s69
      %p73 = scmp.eq.s32.totalorder %s33, 0
      %p74 = por %p72, %p73
      %p75 = scmp.ne.s32.totalorder %s67, %s69
      %p76 = scmp.eq.s32.totalorder %s38, 1
      %p77 = por %p75, %p76
      %p78 = scmp.ne.s32.totalorder %s69, %s70
      %p79 = scmp.eq.s32.totalorder %s38, 0
      %p80 = por %p78, %p79
      %p81 = scmp.ne.s32.totalorder %s69, %s70
      %p82 = scmp.eq.s32.totalorder %s39, 1
      %p83 = por %p81, %p82
      %p85 = scmp.ne.s32.totalorder %s70, %s84
      %p86 = scmp.eq.s32.totalorder %s39, 0
      %p87 = por %p85, %p86
      %s89 = sadd.s32 %s88, 1
      %p92 = scmp.eq.s32.totalorder %s33, 1
      %p93 = scmp.ne.s32.totalorder %s88, %s90
      %p94 = scmp.eq.s32.totalorder %s33, 0
      %p95 = por %p93, %p94
      %p96 = scmp.ne.s32.totalorder %s88, %s90
      %p97 = scmp.eq.s32.totalorder %s38, 1
      %p98 = por %p96, %p97
      %p99 = scmp.ne.s32.totalorder %s90, %s91
      %p100 = scmp.eq.s32.totalorder %s38, 0
      %p101 = por %p99, %p100
      %p102 = scmp.ne.s32.totalorder %s90, %s91
      %p103 = scmp.eq.s32.totalorder %s39, 1
      %p104 = por %p102, %p103
      %p106 = scmp.ne.s32.totalorder %s91, %s105
      %p107 = scmp.eq.s32.totalorder %s39, 0
      %p108 = por %p106, %p107
      %s110 = sadd.s32 %s109, 1
      %p113 = scmp.eq.s32.totalorder %s33, 1
      %p114 = scmp.ne.s32.totalorder %s109, %s111
      %p115 = scmp.eq.s32.totalorder %s33, 0
      %p116 = por %p114, %p115
      %p117 = scmp.ne.s32.totalorder %s109, %s111
      %p118 = scmp.eq.s32.totalorder %s38, 1
      %p119 = por %p117, %p118
      %p120 = scmp.ne.s32.totalorder %s111, %s112
      %p121 = scmp.eq.s32.totalorder %s38, 0
      %p122 = por %p120, %p121
      %p123 = scmp.ne.s32.totalorder %s111, %s112
      %p124 = scmp.eq.s32.totalorder %s39, 1
      %p125 = por %p123, %p124
      %p127 = scmp.ne.s32.totalorder %s112, %s126
      %p128 = scmp.eq.s32.totalorder %s39, 0
      %p129 = por %p127, %p128
      %s131 = sadd.s32 %s130, 1
      %p134 = scmp.eq.s32.totalorder %s33, 1
      %p135 = scmp.ne.s32.totalorder %s130, %s132
      %p136 = scmp.eq.s32.totalorder %s33, 0
      %p137 = por %p135, %p136
      %p138 = scmp.ne.s32.totalorder %s130, %s132
      %p139 = scmp.eq.s32.totalorder %s38, 1
      %p140 = por %p138, %p139
      %p141 = scmp.ne.s32.totalorder %s132, %s133
      %p142 = scmp.eq.s32.totalorder %s38, 0
      %p143 = por %p141, %p142
      %p144 = scmp.ne.s32.totalorder %s132, %s133
      %p145 = scmp.eq.s32.totalorder %s39, 1
      %p146 = por %p144, %p145
      %p148 = scmp.ne.s32.totalorder %s133, %s147
      %p149 = scmp.eq.s32.totalorder %s39, 0
      %p150 = por %p148, %p149
      %s152 = sadd.s32 %s151, 1
      %p155 = scmp.eq.s32.totalorder %s33, 1
      %p156 = scmp.ne.s32.totalorder %s151, %s153
      %p157 = scmp.eq.s32.totalorder %s33, 0
      %p158 = por %p156, %p157
      %p159 = scmp.ne.s32.totalorder %s151, %s153
      %p160 = scmp.eq.s32.totalorder %s38, 1
      %p161 = por %p159, %p160
      %p162 = scmp.ne.s32.totalorder %s153, %s154
      %p163 = scmp.eq.s32.totalorder %s38, 0
      %p164 = por %p162, %p163
      %p165 = scmp.ne.s32.totalorder %s153, %s154
      %p166 = scmp.eq.s32.totalorder %s39, 1
      %p167 = por %p165, %p166
      %p169 = scmp.ne.s32.totalorder %s154, %s168
      %p170 = scmp.eq.s32.totalorder %s39, 0
      %p171 = por %p169, %p170
      %s173 = sadd.s32 %s172, 1
      %p176 = scmp.eq.s32.totalorder %s33, 1
      %p177 = scmp.ne.s32.totalorder %s172, %s174
      %p178 = scmp.eq.s32.totalorder %s33, 0
      %p179 = por %p177, %p178
      %p180 = scmp.ne.s32.totalorder %s172, %s174
      %p181 = scmp.eq.s32.totalorder %s38, 1
      %p182 = por %p180, %p181
      %p183 = scmp.ne.s32.totalorder %s174, %s175
      %p184 = scmp.eq.s32.totalorder %s38, 0
      %p185 = por %p183, %p184
      %p186 = scmp.ne.s32.totalorder %s174, %s175
      %p187 = scmp.eq.s32.totalorder %s39, 1
      %p188 = por %p186, %p187
      %p190 = scmp.ne.s32.totalorder %s175, %s189
      %p191 = scmp.eq.s32.totalorder %s39, 0
      %p192 = por %p190, %p191
      %s194 = sadd.s32 %s193, 1
      %p197 = scmp.eq.s32.totalorder %s33, 1
      %p198 = scmp.ne.s32.totalorder %s193, %s195
      %p199 = scmp.eq.s32.totalorder %s33, 0
      %p200 = por %p198, %p199
      %p201 = scmp.ne.s32.totalorder %s193, %s195
      %p202 = scmp.eq.s32.totalorder %s38, 1
      %p203 = por %p201, %p202
      %p204 = scmp.ne.s32.totalorder %s195, %s196
      %p205 = scmp.eq.s32.totalorder %s38, 0
      %p206 = por %p204, %p205
      %p207 = scmp.ne.s32.totalorder %s195, %s196
      %p208 = scmp.eq.s32.totalorder %s39, 1
      %p209 = por %p207, %p208
      %p211 = scmp.ne.s32.totalorder %s196, %s210
      %p212 = scmp.eq.s32.totalorder %s39, 0
      %p213 = por %p211, %p212
      %s215 = sadd.s32 %s214, 1
      %p218 = scmp.eq.s32.totalorder %s33, 1
      %p219 = scmp.ne.s32.totalorder %s214, %s216
      %p220 = scmp.eq.s32.totalorder %s33, 0
      %p221 = por %p219, %p220
      %p222 = scmp.ne.s32.totalorder %s214, %s216
      %p223 = scmp.eq.s32.totalorder %s38, 1
      %p224 = por %p222, %p223
      %p225 = scmp.ne.s32.totalorder %s216, %s217
      %p226 = scmp.eq.s32.totalorder %s38, 0
      %p227 = por %p225, %p226
      %p228 = scmp.ne.s32.totalorder %s216, %s217
      %p229 = scmp.eq.s32.totalorder %s39, 1
      %p230 = por %p228, %p229
      %p232 = scmp.ne.s32.totalorder %s217, %s231
      %p233 = scmp.eq.s32.totalorder %s39, 0
      %p234 = por %p232, %p233
      %s236 = sadd.s32 %s235, 1
      %p239 = scmp.eq.s32.totalorder %s33, 1
      %p240 = scmp.ne.s32.totalorder %s235, %s237
      %p241 = scmp.eq.s32.totalorder %s33, 0
      %p242 = por %p240, %p241
      %p243 = scmp.ne.s32.totalorder %s235, %s237
      %p244 = scmp.eq.s32.totalorder %s38, 1
      %p245 = por %p243, %p244
      %p246 = scmp.ne.s32.totalorder %s237, %s238
      %p247 = scmp.eq.s32.totalorder %s38, 0
      %p248 = por %p246, %p247
      %p249 = scmp.ne.s32.totalorder %s237, %s238
      %p250 = scmp.eq.s32.totalorder %s39, 1
      %p251 = por %p249, %p250
      %p253 = scmp.ne.s32.totalorder %s238, %s252
      %p254 = scmp.eq.s32.totalorder %s39, 0
      %p255 = por %p253, %p254
      %s257 = sadd.s32 %s256, 1
      %p260 = scmp.eq.s32.totalorder %s33, 1
      %p261 = scmp.ne.s32.totalorder %s256, %s258
      %p262 = scmp.eq.s32.totalorder %s33, 0
      %p263 = por %p261, %p262
      %p264 = scmp.ne.s32.totalorder %s256, %s258
      %p265 = scmp.eq.s32.totalorder %s38, 1
      %p266 = por %p264, %p265
      %p267 = scmp.ne.s32.totalorder %s258, %s259
      %p268 = scmp.eq.s32.totalorder %s38, 0
      %p269 = por %p267, %p268
      %p270 = scmp.ne.s32.totalorder %s258, %s259
      %p271 = scmp.eq.s32.totalorder %s39, 1
      %p272 = por %p270, %p271
      %p274 = scmp.ne.s32.totalorder %s259, %s273
      %p275 = scmp.eq.s32.totalorder %s39, 0
      %p276 = por %p274, %p275
      %s278 = sadd.s32 %s277, 1
      %p281 = scmp.eq.s32.totalorder %s33, 1
      %p282 = scmp.ne.s32.totalorder %s277, %s279
      %p283 = scmp.eq.s32.totalorder %s33, 0
      %p284 = por %p282, %p283
      %p285 = scmp.ne.s32.totalorder %s277, %s279
      %p286 = scmp.eq.s32.totalorder %s38, 1
      %p287 = por %p285, %p286
      %p288 = scmp.ne.s32.totalorder %s279, %s280
      %p289 = scmp.eq.s32.totalorder %s38, 0
      %p290 = por %p288, %p289
      %p291 = scmp.ne.s32.totalorder %s279, %s280
      %p292 = scmp.eq.s32.totalorder %s39, 1
      %p293 = por %p291, %p292
      %p295 = scmp.ne.s32.totalorder %s280, %s294
      %p296 = scmp.eq.s32.totalorder %s39, 0
      %p297 = por %p295, %p296
      %s299 = sadd.s32 %s298, 1
      %p302 = scmp.eq.s32.totalorder %s33, 1
      %p303 = scmp.ne.s32.totalorder %s298, %s300
      %p304 = scmp.eq.s32.totalorder %s33, 0
      %p305 = por %p303, %p304
      %p306 = scmp.ne.s32.totalorder %s298, %s300
      %p307 = scmp.eq.s32.totalorder %s38, 1
      %p308 = por %p306, %p307
      %p309 = scmp.ne.s32.totalorder %s300, %s301
      %p310 = scmp.eq.s32.totalorder %s38, 0
      %p311 = por %p309, %p310
      %p312 = scmp.ne.s32.totalorder %s300, %s301
      %p313 = scmp.eq.s32.totalorder %s39, 1
      %p314 = por %p312, %p313
      %p316 = scmp.ne.s32.totalorder %s301, %s315
      %p317 = scmp.eq.s32.totalorder %s39, 0
      %p318 = por %p316, %p317
      %s320 = sadd.s32 %s319, 1
      %p323 = scmp.eq.s32.totalorder %s33, 1
      %p324 = scmp.ne.s32.totalorder %s319, %s321
      %p325 = scmp.eq.s32.totalorder %s33, 0
      %p326 = por %p324, %p325
      %p327 = scmp.ne.s32.totalorder %s319, %s321
      %p328 = scmp.eq.s32.totalorder %s38, 1
      %p329 = por %p327, %p328
      %p330 = scmp.ne.s32.totalorder %s321, %s322
      %p331 = scmp.eq.s32.totalorder %s38, 0
      %p332 = por %p330, %p331
      %p333 = scmp.ne.s32.totalorder %s321, %s322
      %p334 = scmp.eq.s32.totalorder %s39, 1
      %p335 = por %p333, %p334
      %p337 = scmp.ne.s32.totalorder %s322, %s336
      %p338 = scmp.eq.s32.totalorder %s39, 0
      %p339 = por %p337, %p338
      %s341 = sadd.s32 %s340, 1
      %p344 = scmp.eq.s32.totalorder %s33, 1
      %p345 = scmp.ne.s32.totalorder %s340, %s342
      %p346 = scmp.eq.s32.totalorder %s33, 0
      %p347 = por %p345, %p346
      %p348 = scmp.ne.s32.totalorder %s340, %s342
      %p349 = scmp.eq.s32.totalorder %s38, 1
      %p350 = por %p348, %p349
      %p351 = scmp.ne.s32.totalorder %s342, %s343
      %p352 = scmp.eq.s32.totalorder %s38, 0
      %p353 = por %p351, %p352
      %p354 = scmp.ne.s32.totalorder %s342, %s343
      %p355 = scmp.eq.s32.totalorder %s39, 1
      %p356 = por %p354, %p355
      %p358 = scmp.ne.s32.totalorder %s343, %s357
      %p359 = scmp.eq.s32.totalorder %s39, 0
      %p360 = por %p358, %p359
      %s362 = sadd.s32 %s361, 1
      %p365 = scmp.eq.s32.totalorder %s33, 1
      %p366 = scmp.ne.s32.totalorder %s361, %s363
      %p367 = scmp.eq.s32.totalorder %s33, 0
      %p368 = por %p366, %p367
      %p369 = scmp.ne.s32.totalorder %s361, %s363
      %p370 = scmp.eq.s32.totalorder %s38, 1
      %p371 = por %p369, %p370
      %p372 = scmp.ne.s32.totalorder %s363, %s364
      %p373 = scmp.eq.s32.totalorder %s38, 0
      %p374 = por %p372, %p373
      %p375 = scmp.ne.s32.totalorder %s363, %s364
      %p376 = scmp.eq.s32.totalorder %s39, 1
      %p377 = por %p375, %p376
      %p379 = scmp.ne.s32.totalorder %s364, %s378
      %p380 = scmp.eq.s32.totalorder %s39, 0
      %p381 = por %p379, %p380
      %s383 = sadd.s32 %s382, 1
      %p386 = scmp.eq.s32.totalorder %s33, 1
      %p387 = scmp.ne.s32.totalorder %s382, %s384
      %p388 = scmp.eq.s32.totalorder %s33, 0
      %p389 = por %p387, %p388
      %p390 = scmp.ne.s32.totalorder %s382, %s384
      %p391 = scmp.eq.s32.totalorder %s38, 1
      %p392 = por %p390, %p391
      %p393 = scmp.ne.s32.totalorder %s384, %s385
      %p394 = scmp.eq.s32.totalorder %s38, 0
      %p395 = por %p393, %p394
      %p396 = scmp.ne.s32.totalorder %s384, %s385
      %p397 = scmp.eq.s32.totalorder %s39, 1
      %p398 = por %p396, %p397
      %p400 = scmp.ne.s32.totalorder %s385, %s399
      %p401 = scmp.eq.s32.totalorder %s39, 0
      %p402 = por %p400, %p401
      %s404 = sadd.s32 %s403, 1
      %p407 = scmp.eq.s32.totalorder %s33, 1
      %p408 = scmp.ne.s32.totalorder %s403, %s405
      %p409 = scmp.eq.s32.totalorder %s33, 0
      %p410 = por %p408, %p409
      %p411 = scmp.ne.s32.totalorder %s403, %s405
      %p412 = scmp.eq.s32.totalorder %s38, 1
      %p413 = por %p411, %p412
      %p414 = scmp.ne.s32.totalorder %s405, %s406
      %p415 = scmp.eq.s32.totalorder %s38, 0
      %p416 = por %p414, %p415
      %p417 = scmp.ne.s32.totalorder %s405, %s406
      %p418 = scmp.eq.s32.totalorder %s39, 1
      %p419 = por %p417, %p418
      %p421 = scmp.ne.s32.totalorder %s406, %s420
      %p422 = scmp.eq.s32.totalorder %s39, 0
      %p423 = por %p421, %p422
      %s425 = sadd.s32 %s424, 1
      %p428 = scmp.eq.s32.totalorder %s33, 1
      %p429 = scmp.ne.s32.totalorder %s424, %s426
      %p430 = scmp.eq.s32.totalorder %s33, 0
      %p431 = por %p429, %p430
      %p432 = scmp.ne.s32.totalorder %s424, %s426
      %p433 = scmp.eq.s32.totalorder %s38, 1
      %p434 = por %p432, %p433
      %p435 = scmp.ne.s32.totalorder %s426, %s427
      %p436 = scmp.eq.s32.totalorder %s38, 0
      %p437 = por %p435, %p436
      %p438 = scmp.ne.s32.totalorder %s426, %s427
      %p439 = scmp.eq.s32.totalorder %s39, 1
      %p440 = por %p438, %p439
      %p442 = scmp.ne.s32.totalorder %s427, %s441
      %p443 = scmp.eq.s32.totalorder %s39, 0
      %p444 = por %p442, %p443
      %s445 = ssub.s32 %s33, %s40
      %p446 = scmp.eq.s32.totalorder %s445, 0
      %s448 = sadd.s32 %s447, 1
      %s449 = scalar_select %p446, %s447, %s448
      %p452 = pneg %p446
      %p453 = scmp.eq.s32.totalorder %s33, 1
      %p454 = por %p452, %p453
      %p455 = scmp.ne.s32.totalorder %s447, %s450
      %p456 = scmp.eq.s32.totalorder %s33, 0
      %p457 = por %p455, %p456
      %p458 = scmp.ne.s32.totalorder %s447, %s450
      %p459 = scmp.eq.s32.totalorder %s38, 1
      %p460 = por %p458, %p459
      %p461 = scmp.ne.s32.totalorder %s450, %s451
      %p462 = scmp.eq.s32.totalorder %s38, 0
      %p463 = por %p461, %p462
      %p464 = scmp.ne.s32.totalorder %s450, %s451
      %p465 = scmp.eq.s32.totalorder %s39, 1
      %p466 = por %p464, %p465
      %p468 = scmp.ne.s32.totalorder %s451, %s467
      %p469 = scmp.eq.s32.totalorder %s39, 0
      %p470 = por %p468, %p469
      %s471 = ssub.s32 %s33, %s40
      %p472 = scmp.eq.s32.totalorder %s471, 0
      %s474 = sadd.s32 %s473, 1
      %s475 = scalar_select %p472, %s473, %s474
      %p478 = pneg %p472
      %p479 = scmp.eq.s32.totalorder %s33, 1
      %p480 = por %p478, %p479
      %p481 = scmp.ne.s32.totalorder %s473, %s476
      %p482 = scmp.eq.s32.totalorder %s33, 0
      %p483 = por %p481, %p482
      %p484 = scmp.ne.s32.totalorder %s473, %s476
      %p485 = scmp.eq.s32.totalorder %s38, 1
      %p486 = por %p484, %p485
      %p487 = scmp.ne.s32.totalorder %s476, %s477
      %p488 = scmp.eq.s32.totalorder %s38, 0
      %p489 = por %p487, %p488
      %p490 = scmp.ne.s32.totalorder %s476, %s477
      %p491 = scmp.eq.s32.totalorder %s39, 1
      %p492 = por %p490, %p491
      %p494 = scmp.ne.s32.totalorder %s477, %s493
      %p495 = scmp.eq.s32.totalorder %s39, 0
      %p496 = por %p494, %p495
      %p497 = scmp.le.s32.totalorder 1, %s33
      %p498 = scmp.lt.s32.totalorder %s33, 3
      %p499 = pnand %p497, %p498
      %p500 = pneg %p499
      // Predicated region
      $region9: #{_encode.1} parent=5 // pred_check
        _
      $region10: #{_encode.1} parent=5 // pred_check_branch
        %502 = sbr.rel (%p499) target = $region12
      $region11: #{_encode.1} parent=5 // pred_region
        %s503 = ssub.s32 %s33, 1
        // Predicated region
        $region13: #{_encode.1} parent=11 // pred_check
          %p504 = pneg %p80
        $region14: #{_encode.1} parent=11 // pred_check_branch
          %506 = sbr.rel (%p504) target = $region16
        $region15: #{_encode.1} parent=11 // pred_region
          _
        $region16: #{_encode.1} parent=11 // pred_fallthru
          _
        // Predicated region
        $region17: #{_encode.1} parent=11 // pred_check
          %p507 = pneg %p101
        $region18: #{_encode.1} parent=11 // pred_check_branch
          %509 = sbr.rel (%p507) target = $region20
        $region19: #{_encode.1} parent=11 // pred_region
          _
        $region20: #{_encode.1} parent=11 // pred_fallthru
          _
        // Predicated region
        $region21: #{_encode.1} parent=11 // pred_check
          %p510 = pneg %p122
        $region22: #{_encode.1} parent=11 // pred_check_branch
          %512 = sbr.rel (%p510) target = $region24
        $region23: #{_encode.1} parent=11 // pred_region
          _
        $region24: #{_encode.1} parent=11 // pred_fallthru
          _
        // Predicated region
        $region25: #{_encode.1} parent=11 // pred_check
          %p513 = pneg %p143
        $region26: #{_encode.1} parent=11 // pred_check_branch
          %515 = sbr.rel (%p513) target = $region28
        $region27: #{_encode.1} parent=11 // pred_region
          _
        $region28: #{_encode.1} parent=11 // pred_fallthru
          _
        // Predicated region
        $region29: #{_encode.1} parent=11 // pred_check
          %p516 = pneg %p164
        $region30: #{_encode.1} parent=11 // pred_check_branch
          %518 = sbr.rel (%p516) target = $region32
        $region31: #{_encode.1} parent=11 // pred_region
          _
        $region32: #{_encode.1} parent=11 // pred_fallthru
          _
        // Predicated region
        $region33: #{_encode.1} parent=11 // pred_check
          %p519 = pneg %p185
        $region34: #{_encode.1} parent=11 // pred_check_branch
          %521 = sbr.rel (%p519) target = $region36
        $region35: #{_encode.1} parent=11 // pred_region
          _
        $region36: #{_encode.1} parent=11 // pred_fallthru
          _
        // Predicated region
        $region37: #{_encode.1} parent=11 // pred_check
          %p522 = pneg %p206
        $region38: #{_encode.1} parent=11 // pred_check_branch
          %524 = sbr.rel (%p522) target = $region40
        $region39: #{_encode.1} parent=11 // pred_region
          _
        $region40: #{_encode.1} parent=11 // pred_fallthru
          _
        // Predicated region
        $region41: #{_encode.1} parent=11 // pred_check
          %p525 = pneg %p227
        $region42: #{_encode.1} parent=11 // pred_check_branch
          %527 = sbr.rel (%p525) target = $region44
        $region43: #{_encode.1} parent=11 // pred_region
          _
        $region44: #{_encode.1} parent=11 // pred_fallthru
          _
        // Predicated region
        $region45: #{_encode.1} parent=11 // pred_check
          %p528 = pneg %p248
        $region46: #{_encode.1} parent=11 // pred_check_branch
          %530 = sbr.rel (%p528) target = $region48
        $region47: #{_encode.1} parent=11 // pred_region
          _
        $region48: #{_encode.1} parent=11 // pred_fallthru
          _
        // Predicated region
        $region49: #{_encode.1} parent=11 // pred_check
          %p531 = pneg %p269
        $region50: #{_encode.1} parent=11 // pred_check_branch
          %533 = sbr.rel (%p531) target = $region52
        $region51: #{_encode.1} parent=11 // pred_region
          _
        $region52: #{_encode.1} parent=11 // pred_fallthru
          _
        // Predicated region
        $region53: #{_encode.1} parent=11 // pred_check
          %p534 = pneg %p290
        $region54: #{_encode.1} parent=11 // pred_check_branch
          %536 = sbr.rel (%p534) target = $region56
        $region55: #{_encode.1} parent=11 // pred_region
          _
        $region56: #{_encode.1} parent=11 // pred_fallthru
          _
        // Predicated region
        $region57: #{_encode.1} parent=11 // pred_check
          %p537 = pneg %p311
        $region58: #{_encode.1} parent=11 // pred_check_branch
          %539 = sbr.rel (%p537) target = $region60
        $region59: #{_encode.1} parent=11 // pred_region
          _
        $region60: #{_encode.1} parent=11 // pred_fallthru
          _
        // Predicated region
        $region61: #{_encode.1} parent=11 // pred_check
          %p540 = pneg %p332
        $region62: #{_encode.1} parent=11 // pred_check_branch
          %542 = sbr.rel (%p540) target = $region64
        $region63: #{_encode.1} parent=11 // pred_region
          _
        $region64: #{_encode.1} parent=11 // pred_fallthru
          _
        // Predicated region
        $region65: #{_encode.1} parent=11 // pred_check
          %p543 = pneg %p353
        $region66: #{_encode.1} parent=11 // pred_check_branch
          %545 = sbr.rel (%p543) target = $region68
        $region67: #{_encode.1} parent=11 // pred_region
          _
        $region68: #{_encode.1} parent=11 // pred_fallthru
          _
        // Predicated region
        $region69: #{_encode.1} parent=11 // pred_check
          %p546 = pneg %p374
        $region70: #{_encode.1} parent=11 // pred_check_branch
          %548 = sbr.rel (%p546) target = $region72
        $region71: #{_encode.1} parent=11 // pred_region
          _
        $region72: #{_encode.1} parent=11 // pred_fallthru
          _
        // Predicated region
        $region73: #{_encode.1} parent=11 // pred_check
          %p549 = pneg %p395
        $region74: #{_encode.1} parent=11 // pred_check_branch
          %551 = sbr.rel (%p549) target = $region76
        $region75: #{_encode.1} parent=11 // pred_region
          _
        $region76: #{_encode.1} parent=11 // pred_fallthru
          _
        // Predicated region
        $region77: #{_encode.1} parent=11 // pred_check
          %p552 = pneg %p416
        $region78: #{_encode.1} parent=11 // pred_check_branch
          %554 = sbr.rel (%p552) target = $region80
        $region79: #{_encode.1} parent=11 // pred_region
          _
        $region80: #{_encode.1} parent=11 // pred_fallthru
          _
        // Predicated region
        $region81: #{_encode.1} parent=11 // pred_check
          %p555 = pneg %p437
        $region82: #{_encode.1} parent=11 // pred_check_branch
          %557 = sbr.rel (%p555) target = $region84
        $region83: #{_encode.1} parent=11 // pred_region
          _
        $region84: #{_encode.1} parent=11 // pred_fallthru
          _
      $region12: #{_encode.1} parent=5 // pred_fallthru
        _
      %p558 = scmp.lt.s32.totalorder %s33, 2
      // Predicated region
      $region85: #{_encode.1} parent=5 // pred_check
        %p559 = pneg %p558
      $region86: #{_encode.1} parent=5 // pred_check_branch
        %561 = sbr.rel (%p559) target = $region88
      $region87: #{_encode.1} parent=5 // pred_region
        // Predicated region
        $region89: #{_encode.1} parent=87 // pred_check
          %p562 = pneg %p53
        $region90: #{_encode.1} parent=87 // pred_check_branch
          %564 = sbr.rel (%p562) target = $region92
        $region91: #{_encode.1} parent=87 // pred_region
          %p565 = scmp.lt.s32.totalorder %s33, 1
          %s566 = scalar_select %p565, %s33, 1
          %s567 = smul.addr %s566, 3
          %s568 = smul.addr %s567, 4
          %s569 = scalar_lea.vmem %s0, %s568
        $region92: #{_encode.1} parent=87 // pred_fallthru
          _
      $region88: #{_encode.1} parent=5 // pred_fallthru
        _
      %p570 = scmp.le.s32.totalorder 1, %s33
      %p571 = scmp.lt.s32.totalorder %s33, 3
      %p572 = pnand %p570, %p571
      %p573 = pneg %p572
      // Predicated region
      $region93: #{_encode.1} parent=5 // pred_check
        _
      $region94: #{_encode.1} parent=5 // pred_check_branch
        %575 = sbr.rel (%p572) target = $region96
      $region95: #{_encode.1} parent=5 // pred_region
        %s576 = ssub.s32 %s33, 1
        %p577 = scmp.lt.s32.totalorder %s38, 1
        %s578 = scalar_select %p577, %s38, 1
        %s579 = smul.addr %s578, 3
        %s580 = smul.addr %s579, 4
        %s581 = scalar_lea.vmem %s0, %s580
        %p582 = pneg %p59
        %p583 = pneg %p56
        %p584 = pneg %p80
        %p585 = pneg %p77
        %p586 = pneg %p101
        %p587 = pneg %p98
        %p588 = pneg %p122
        %p589 = pneg %p119
        %p590 = pneg %p143
        %p591 = pneg %p140
        %p592 = pneg %p164
        %p593 = pneg %p161
        %p594 = pneg %p185
        %p595 = pneg %p182
        %p596 = pneg %p206
        %p597 = pneg %p203
        %p598 = pneg %p227
        %p599 = pneg %p224
        %p600 = pneg %p248
        %p601 = pneg %p245
        %p602 = pneg %p269
        %p603 = pneg %p266
        %p604 = pneg %p290
        %p605 = pneg %p287
        %p606 = pneg %p311
        %p607 = pneg %p308
        %p608 = pneg %p332
        %p609 = pneg %p329
        %p610 = pneg %p353
        %p611 = pneg %p350
        %p612 = pneg %p374
        %p613 = pneg %p371
        %p614 = pneg %p395
        %p615 = pneg %p392
        %p616 = pneg %p416
        %p617 = pneg %p413
        %p618 = pneg %p437
        %p619 = pneg %p434
        %p620 = pneg %p463
        %p621 = pneg %p460
        %s622 = sand.u32 %s450, 1
        %s623 = scalar_lea.sflag [#allocation3], %s622
        %s624 = sand.u32 %s450, 1
        %s625 = smul.addr %s624, 24
        %s626 = scalar_lea.vmem [#allocation2], %s625
        %p627 = pneg %p489
        %p628 = pneg %p486
        %s629 = sand.u32 %s476, 1
        %s630 = scalar_lea.sflag [#allocation5], %s629
        %s631 = sand.u32 %s476, 1
        %s632 = smul.addr %s631, 36
        %s633 = scalar_lea.vmem [#allocation4], %s632
        %p634 = scmp.lt.s32.totalorder %s38, 1
        %s635 = scalar_select %p634, %s38, 1
        %s636 = smul.addr %s635, 3
        %s637 = smul.addr %s636, 4
        %s638 = scalar_lea.vmem %s0, %s637
        %v640 = vld [vmem:[%s3] sm:$0xff]
        %v641 = vld [vmem:[%s3 + $0x8] sm:$0xff]
        %v642 = vld [vmem:[%s3 + $0x10] sm:$0xff]
        %v643 = vld [vmem:[%s3 + $0x18] sm:$0xff]
        %v644 = vld [vmem:[%s3 + $0x20] sm:$0xff]
        %v645 = vld [vmem:[%s3 + $0x28] sm:$0xff]
        %v646 = vld [vmem:[%s3 + $0x30] sm:$0xff]
        %v647 = vld [vmem:[%s3 + $0x38] sm:$0xff]
        %v648 = vld [vmem:[%s3 + $0x40] sm:$0xff]
        %v649 = vld [vmem:[%s3 + $0x48] sm:$0xff]
        %v650 = vld [vmem:[%s3 + $0x50] sm:$0xff]
        %v651 = vld [vmem:[%s3 + $0x58] sm:$0xff]
        %v652 = vpack.c.bf16 %v641, %v640
        %v653 = vpack.c.bf16 %v643, %v642
        %v654 = vpack.c.bf16 %v645, %v644
        %v655 = vpack.c.bf16 %v647, %v646
        %v656 = vpack.c.bf16 %v649, %v648
        %v657 = vpack.c.bf16 %v651, %v650
        %v658 = vld [vmem:[%s4] sm:$0x1]
        %v659 = vld [vmem:[%s638] sm:$0xf]
        %v660 = vld [vmem:[%s638 + $0x4] sm:$0xf]
        %v661 = vld [vmem:[%s638 + $0x8] sm:$0xf]
        %v662 = vld [vmem:[%s1] sm:$0xf]
        %v663 = vld [vmem:[%s1 + $0x4] sm:$0xf]
        %v664 = vld [vmem:[%s1 + $0x8] sm:$0xf]
        %v665 = vld [vmem:[%s1 + $0xc] sm:$0xf]
        %v666 = vld [vmem:[%s1 + $0x10] sm:$0xf]
        %v667 = vld [vmem:[%s1 + $0x14] sm:$0xf]
        %v668 = vld [vmem:[%s2] sm:$0xff]
        %v669 = vld [vmem:[%s2 + $0x8] sm:$0xff]
        %v670 = vld [vmem:[%s2 + $0x10] sm:$0xff]
        %v674 = vunpack.c.l.b16 %v659
        %v675 = vunpack.c.l.b16 %v660
        %v676 = vunpack.c.l.b16 %v661
        %v677 = vpack.c.b16 %v675, %v674
        %v678 = vpack.c.b16 %v676, %v676
        %v685 = vunpack.c.l.b16 %v662
        %v686 = vunpack.c.l.b16 %v663
        %v687 = vunpack.c.l.b16 %v664
        %v688 = vunpack.c.l.b16 %v665
        %v689 = vunpack.c.l.b16 %v666
        %v690 = vunpack.c.l.b16 %v667
        %v691 = vpack.c.b16 %v686, %v685
        %v692 = vpack.c.b16 %v688, %v687
        %v693 = vpack.c.b16 %v690, %v689
        %vm697 = vcmask 392192
        %v699 = vsel %vm697, %v677, 0
        %v702 = vsel %vm697, %v678, 0
        %704 = vmatprep.subr.bf16.mxu0 0
        %705 = vmatpush1.bf16.msra.mxu0 %v691
        %706 = vmatprep.subr.bf16.mxu0 0
        %707 = vmatpush1.bf16.msra.mxu0 %v692
        %708 = vmatprep.subr.bf16.mxu0 0
        %709 = vmatpush1.bf16.msra.mxu0 %v693
        %710 = vmatprep.subr.bf16.mxu0 0
        %711 = vmatpush1.bf16.msra.mxu0 0
        %712 = vmatprep.subr.bf16.mxu0 0
        %713 = vmatpush1.bf16.msra.mxu0 0
        %714 = vmatprep.subr.bf16.mxu0 0
        %715 = vmatpush1.bf16.msra.mxu0 0
        %716 = vmatprep.subr.bf16.mxu0 0
        %717 = vmatpush1.bf16.msra.mxu0 0
        %718 = vmatprep.subr.bf16.mxu0 0
        %719 = vmatpush1.bf16.msra.mxu0 0
        %720 = vmatprep.subr.bf16.mxu0 0
        %721 = vmatpush1.bf16.msra.mxu0 0
        %722 = vmatprep.subr.bf16.mxu0 0
        %723 = vmatpush1.bf16.msra.mxu0 0
        %724 = vmatprep.subr.bf16.mxu0 0
        %725 = vmatpush1.bf16.msra.mxu0 0
        %726 = vmatprep.subr.bf16.mxu0 0
        %727 = vmatpush1.bf16.msra.mxu0 0
        %728 = vmatprep.subr.bf16.mxu0 0
        %729 = vmatpush1.bf16.msra.mxu0 0
        %730 = vmatprep.subr.bf16.mxu0 0
        %731 = vmatpush1.bf16.msra.mxu0 0
        %732 = vmatprep.subr.bf16.mxu0 0
        %733 = vmatpush1.bf16.msra.mxu0 0
        %734 = vmatprep.subr.bf16.mxu0 0
        %735 = vmatpush1.bf16.msra.mxu0 0
        %736 = vmatprep.mubr.bf16.mxu0 0
        %737 = vmatmul.mubr.bf16.gmra.mrb[0].mxu0 %v699
        %v738 = vpop.f32.mrb[0].mxu0
        %v739 = vadd.f32 %v668, %v738
        %v740 = vpop.f32.mrb[0].mxu0
        %v741 = vpop.f32.mrb[0].mxu0
        %v742 = vadd.f32 %v669, %v741
        %v743 = vpop.f32.mrb[0].mxu0
        %744 = vmatprep.mubr.bf16.mxu0 0
        %745 = vmatmul.mubr.bf16.gmra.mrb[0].mxu0 %v702
        %v746 = vpop.f32.mrb[0].mxu0
        %v747 = vadd.f32 %v670, %v746
        %v748 = vpop.f32.mrb[0].mxu0
        %v749 = vpop.f32.mrb[0].mxu0
        %v750 = vpop.f32.mrb[0].mxu0
        %751 = vdwg.mxu0
        %v752 = vpack.c.bf16 %v742, %v739
        %v753 = vpack.c.bf16 %v747, %v747
        %v756 = vunpack.c.l.b16 %v752
        %v757 = vunpack.c.h.b16 %v752
        %v758 = vunpack.c.l.b16 %v753
        %v759 = vpack.c.b16 %v756, %v756
        %v760 = vpack.c.b16 %v757, %v757
        %v761 = vpack.c.b16 %v758, %v758
        %vm765 = vcmask 257024
        %766 = vst.msk [vmem:[%s633] sm:$0xf] %vm765, %v759
        %767 = vst.msk [vmem:[%s633 + $0x4] sm:$0xf] %vm765, %v760
        %768 = vst.msk [vmem:[%s633 + $0x8] sm:$0xf] %vm765, %v761
        %v769 = vld [vmem:[%s5] sm:$0x1]
        %v770 = vld [vmem:[%s6] sm:$0x1]
        %vm771 = vcmask 261120
        %v772 = vsel %vm771, %v739, 0.0
        %773 = vadd.xlane.f32.xlu0 %v772
        %v774 = vpop.xlane.xlu0 %773
        %v775 = vsel %vm771, %v742, 0.0
        %776 = vadd.xlane.f32.xlu0 %v775
        %v777 = vpop.xlane.xlu0 %776
        %v778 = vsel %vm771, %v747, 0.0
        %779 = vadd.xlane.f32.xlu0 %v778
        %v780 = vpop.xlane.xlu0 %779
        %v781 = vrcp.pop 32.0
        %v782 = vmul.f32 %v774, %v781
        %v783 = vmul.f32 %v777, %v781
        %v784 = vmul.f32 %v780, %v781
        %v785 = vsub.f32 %v739, %v782
        %v786 = vsub.f32 %v742, %v783
        %v787 = vsub.f32 %v747, %v784
        %v788 = vmul.f32 %v785, %v785
        %v789 = vmul.f32 %v786, %v786
        %v790 = vmul.f32 %v787, %v787
        %v791 = vsel %vm771, %v788, 0.0
        %792 = vadd.xlane.f32.xlu0 %v791
        %v793 = vpop.xlane.xlu0 %792
        %v794 = vsel %vm771, %v789, 0.0
        %795 = vadd.xlane.f32.xlu0 %v794
        %v796 = vpop.xlane.xlu0 %795
        %v797 = vsel %vm771, %v790, 0.0
        %798 = vadd.xlane.f32.xlu0 %v797
        %v799 = vpop.xlane.xlu0 %798
        %v800 = vmul.f32 %v793, %v781
        %v801 = vmul.f32 %v796, %v781
        %v802 = vmul.f32 %v799, %v781
        %v803 = vadd.f32 %v800, 1e-06
        %v804 = vadd.f32 %v801, 1e-06
        %v805 = vadd.f32 %v802, 1e-06
        %v806 = vrsqrt.pop %v803
        %v807 = vrsqrt.pop %v804
        %v808 = vrsqrt.pop %v805
        %v809 = vmul.f32 %v785, %v806
        %v810 = vmul.f32 %v786, %v807
        %v811 = vmul.f32 %v787, %v808
        %v813 = vlaneseq
        %v814 = vshrl.u32 %v813, 7
        %v815 = vsub.s32 0, %v814
        %v816 = vrot.slane %v769, %v815
        %v818 = vmul.f32 %v809, %v816
        %v819 = vmul.f32 %v810, %v816
        %v820 = vmul.f32 %v811, %v816
        %v822 = vlaneseq
        %v823 = vshrl.u32 %v822, 7
        %v824 = vsub.s32 0, %v823
        %v825 = vrot.slane %v770, %v824
        %v827 = vadd.f32 %v818, %v825
        %v828 = vadd.f32 %v819, %v825
        %v829 = vadd.f32 %v820, %v825
        %v830 = vpack.c.bf16 %v828, %v827
        %v831 = vpack.c.bf16 %v829, %v829
        %v832 = vld [vmem:[%s7] sm:$0xf]
        %v833 = vld [vmem:[%s7 + $0x4] sm:$0xf]
        %v834 = vld [vmem:[%s7 + $0x8] sm:$0xf]
        %v835 = vld [vmem:[%s7 + $0xc] sm:$0xf]
        %v836 = vld [vmem:[%s8] sm:$0x1]
        %v838 = vlaneseq
        %v839 = vshrl.u32 %v838, 7
        %v840 = vsub.s32 0, %v839
        %v841 = vrot.slane %v836, %v840
        %v847 = vunpack.c.l.b16 %v832
        %v848 = vunpack.c.l.b16 %v833
        %v849 = vunpack.c.l.b16 %v834
        %v850 = vunpack.c.l.b16 %v835
        %v851 = vpack.c.b16 %v848, %v847
        %v852 = vpack.c.b16 %v850, %v849
        %v856 = vsel %vm771, %v830, 0
        %v859 = vsel %vm771, %v831, 0
        %861 = vmatprep.subr.bf16.mxu0 0
        %862 = vmatpush1.bf16.msra.mxu0 %v851
        %863 = vmatprep.subr.bf16.mxu0 0
        %864 = vmatpush1.bf16.msra.mxu0 %v852
        %865 = vmatprep.subr.bf16.mxu0 0
        %866 = vmatpush1.bf16.msra.mxu0 0
        %867 = vmatprep.subr.bf16.mxu0 0
        %868 = vmatpush1.bf16.msra.mxu0 0
        %869 = vmatprep.subr.bf16.mxu0 0
        %870 = vmatpush1.bf16.msra.mxu0 0
        %871 = vmatprep.subr.bf16.mxu0 0
        %872 = vmatpush1.bf16.msra.mxu0 0
        %873 = vmatprep.subr.bf16.mxu0 0
        %874 = vmatpush1.bf16.msra.mxu0 0
        %875 = vmatprep.subr.bf16.mxu0 0
        %876 = vmatpush1.bf16.msra.mxu0 0
        %877 = vmatprep.subr.bf16.mxu0 0
        %878 = vmatpush1.bf16.msra.mxu0 0
        %879 = vmatprep.subr.bf16.mxu0 0
        %880 = vmatpush1.bf16.msra.mxu0 0
        %881 = vmatprep.subr.bf16.mxu0 0
        %882 = vmatpush1.bf16.msra.mxu0 0
        %883 = vmatprep.subr.bf16.mxu0 0
        %884 = vmatpush1.bf16.msra.mxu0 0
        %885 = vmatprep.subr.bf16.mxu0 0
        %886 = vmatpush1.bf16.msra.mxu0 0
        %887 = vmatprep.subr.bf16.mxu0 0
        %888 = vmatpush1.bf16.msra.mxu0 0
        %889 = vmatprep.subr.bf16.mxu0 0
        %890 = vmatpush1.bf16.msra.mxu0 0
        %891 = vmatprep.subr.bf16.mxu0 0
        %892 = vmatpush1.bf16.msra.mxu0 0
        %893 = vmatprep.mubr.bf16.mxu0 0
        %894 = vmatmul.mubr.bf16.gmra.mrb[0].mxu0 %v856
        %v895 = vpop.f32.mrb[0].mxu0
        %v896 = vadd.f32 %v841, %v895
        %v897 = vpop.f32.mrb[0].mxu0
        %v898 = vpop.f32.mrb[0].mxu0
        %v899 = vadd.f32 %v841, %v898
        %v900 = vpop.f32.mrb[0].mxu0
        %901 = vmatprep.mubr.bf16.mxu0 0
        %902 = vmatmul.mubr.bf16.gmra.mrb[0].mxu0 %v859
        %v903 = vpop.f32.mrb[0].mxu0
        %v904 = vadd.f32 %v841, %v903
        %v905 = vpop.f32.mrb[0].mxu0
        %v906 = vpop.f32.mrb[0].mxu0
        %v907 = vpop.f32.mrb[0].mxu0
        %908 = vdwg.mxu0
        %v909 = vmul.f32 %v896, 0.35355338
        %v910 = vmul.f32 %v899, 0.35355338
        %v911 = vmul.f32 %v904, 0.35355338
        %v912 = vpack.c.bf16 %v910, %v909
        %v913 = vpack.c.bf16 %v911, %v911
        %926 = vrot.lane.b32.xlu0 %v640, 32
        %v927 = vpop.permute.xlu0 %926
        %928 = vrot.lane.b32.xlu0 %v641, 32
        %v929 = vpop.permute.xlu0 %928
        %930 = vrot.lane.b32.xlu0 %v642, 32
        %v931 = vpop.permute.xlu0 %930
        %932 = vrot.lane.b32.xlu0 %v643, 32
        %v933 = vpop.permute.xlu0 %932
        %934 = vrot.lane.b32.xlu0 %v644, 32
        %v935 = vpop.permute.xlu0 %934
        %936 = vrot.lane.b32.xlu0 %v645, 32
        %v937 = vpop.permute.xlu0 %936
        %938 = vrot.lane.b32.xlu0 %v646, 32
        %v939 = vpop.permute.xlu0 %938
        %940 = vrot.lane.b32.xlu0 %v647, 32
        %v941 = vpop.permute.xlu0 %940
        %942 = vrot.lane.b32.xlu0 %v648, 32
        %v943 = vpop.permute.xlu0 %942
        %944 = vrot.lane.b32.xlu0 %v649, 32
        %v945 = vpop.permute.xlu0 %944
        %946 = vrot.lane.b32.xlu0 %v650, 32
        %v947 = vpop.permute.xlu0 %946
        %948 = vrot.lane.b32.xlu0 %v651, 32
        %v949 = vpop.permute.xlu0 %948
        %v962 = vmul.f32 %v896, %v927
        %v963 = vmul.f32 %v899, %v929
        %v964 = vmul.f32 %v904, %v931
        %v965 = vmul.f32 %v896, %v933
        %v966 = vmul.f32 %v899, %v935
        %v967 = vmul.f32 %v904, %v937
        %v968 = vmul.f32 %v896, %v939
        %v969 = vmul.f32 %v899, %v941
        %v970 = vmul.f32 %v904, %v943
        %v971 = vmul.f32 %v896, %v945
        %v972 = vmul.f32 %v899, %v947
        %v973 = vmul.f32 %v904, %v949
        %v974 = vpack.c.bf16 %v963, %v962
        %v975 = vpack.c.bf16 %v965, %v964
        %v976 = vpack.c.bf16 %v967, %v966
        %v977 = vpack.c.bf16 %v969, %v968
        %v978 = vpack.c.bf16 %v971, %v970
        %v979 = vpack.c.bf16 %v973, %v972
        %v981 = vlaneseq
        %v982 = vshrl.u32 %v981, 7
        %v983 = vsub.s32 0, %v982
        %v984 = vrot.slane %v658, %v983
        %992 = vrot.lane.b32.xlu0 %v974, 96
        %v993 = vpop.permute.xlu0 %992
        %994 = vrot.lane.b32.xlu0 %v975, 96
        %v995 = vpop.permute.xlu0 %994
        %996 = vrot.lane.b32.xlu0 %v976, 96
        %v997 = vpop.permute.xlu0 %996
        %998 = vrot.lane.b32.xlu0 %v977, 96
        %v999 = vpop.permute.xlu0 %998
        %1000 = vrot.lane.b32.xlu0 %v978, 96
        %v1001 = vpop.permute.xlu0 %1000
        %1002 = vrot.lane.b32.xlu0 %v979, 96
        %v1003 = vpop.permute.xlu0 %1002
        %v1005 = vsel %vm771, %v912, 0
        %v1008 = vsel %vm771, %v913, 0
        %v1011 = vsel %vm771, %v993, 0
        %v1014 = vsel %vm771, %v995, 0
        %v1017 = vsel %vm771, %v997, 0
        %v1020 = vsel %vm771, %v999, 0
        %v1023 = vsel %vm771, %v1001, 0
        %v1026 = vsel %vm771, %v1003, 0
        %1028 = vmatprep.subr.bf16.mxu0 0
        %1029 = vmatpush1.bf16.xpose.msra.mxu0 %v1011
        %1030 = vmatprep.subr.bf16.mxu0 0
        %1031 = vmatpush1.bf16.xpose.msra.mxu0 %v1014
        %1032 = vmatprep.subr.bf16.mxu0 0
        %1033 = vmatpush1.bf16.xpose.msra.mxu0 %v1017
        %1034 = vmatprep.subr.bf16.mxu0 0
        %1035 = vmatpush1.bf16.xpose.msra.mxu0 %v1020
        %1036 = vmatprep.subr.bf16.mxu0 0
        %1037 = vmatpush1.bf16.xpose.msra.mxu0 %v1023
        %1038 = vmatprep.subr.bf16.mxu0 0
        %1039 = vmatpush1.bf16.xpose.msra.mxu0 %v1026
        %1040 = vmatprep.subr.bf16.mxu0 0
        %1041 = vmatpush1.bf16.xpose.msra.mxu0 0
        %1042 = vmatprep.subr.bf16.mxu0 0
        %1043 = vmatpush1.bf16.xpose.msra.mxu0 0
        %1044 = vmatprep.subr.bf16.mxu0 0
        %1045 = vmatpush1.bf16.xpose.msra.mxu0 0
        %1046 = vmatprep.subr.bf16.mxu0 0
        %1047 = vmatpush1.bf16.xpose.msra.mxu0 0
        %1048 = vmatprep.subr.bf16.mxu0 0
        %1049 = vmatpush1.bf16.xpose.msra.mxu0 0
        %1050 = vmatprep.subr.bf16.mxu0 0
        %1051 = vmatpush1.bf16.xpose.msra.mxu0 0
        %1052 = vmatprep.subr.bf16.mxu0 0
        %1053 = vmatpush1.bf16.xpose.msra.mxu0 0
        %1054 = vmatprep.subr.bf16.mxu0 0
        %1055 = vmatpush1.bf16.xpose.msra.mxu0 0
        %1056 = vmatprep.subr.bf16.mxu0 0
        %1057 = vmatpush1.bf16.xpose.msra.mxu0 0
        %1058 = vmatprep.subr.bf16.mxu0 0
        %1059 = vmatpush1.bf16.xpose.msra.mxu0 0
        %1060 = vmatprep.mubr.bf16.mxu0 0
        %1061 = vmatmul.mubr.bf16.gmra.mrb[0].mxu0 %v1005
        %v1062 = vpop.f32.mrb[0].mxu0
        %v1063 = vadd.f32 %v984, %v1062
        %v1064 = vpop.f32.mrb[0].mxu0
        %v1065 = vpop.f32.mrb[0].mxu0
        %v1066 = vadd.f32 %v984, %v1065
        %v1067 = vpop.f32.mrb[0].mxu0
        %1068 = vmatprep.mubr.bf16.mxu0 0
        %1069 = vmatmul.mubr.bf16.gmra.mrb[0].mxu0 %v1008
        %v1070 = vpop.f32.mrb[0].mxu0
        %v1071 = vadd.f32 %v984, %v1070
        %v1072 = vpop.f32.mrb[0].mxu0
        %v1073 = vpop.f32.mrb[0].mxu0
        %v1074 = vpop.f32.mrb[0].mxu0
        %1075 = vdwg.mxu0
        %vm1076 = vcmask 785408
        %v1077 = vsel %vm1076, %v1063, -inf
        %1078 = vmax.xlane.f32.xlu0 %v1077
        %v1079 = vpop.xlane.xlu0 %1078
        %v1080 = vsel %vm1076, %v1066, -inf
        %1081 = vmax.xlane.f32.xlu0 %v1080
        %v1082 = vpop.xlane.xlu0 %1081
        %v1083 = vsel %vm1076, %v1071, -inf
        %1084 = vmax.xlane.f32.xlu0 %v1083
        %v1085 = vpop.xlane.xlu0 %1084
        %v1086 = vsub.f32 %v1063, %v1079
        %v1087 = vsub.f32 %v1066, %v1082
        %v1088 = vsub.f32 %v1071, %v1085
        %v1089 = vmul.f32 %v1086, 1.442695
        %v1090 = vpow.pop %v1089
        %v1091 = vmul.f32 %v1087, 1.442695
        %v1092 = vpow.pop %v1091
        %v1093 = vmul.f32 %v1088, 1.442695
        %v1094 = vpow.pop %v1093
        %v1095 = vpack.c.bf16 %v1092, %v1090
        %v1096 = vpack.c.bf16 %v1094, %v1094
        %1097 = vrot.lane.b32.xlu0 %v640, 64
        %v1098 = vpop.permute.xlu0 %1097
        %1099 = vrot.lane.b32.xlu0 %v641, 64
        %v1100 = vpop.permute.xlu0 %1099
        %1101 = vrot.lane.b32.xlu0 %v642, 64
        %v1102 = vpop.permute.xlu0 %1101
        %1103 = vrot.lane.b32.xlu0 %v643, 64
        %v1104 = vpop.permute.xlu0 %1103
        %1105 = vrot.lane.b32.xlu0 %v644, 64
        %v1106 = vpop.permute.xlu0 %1105
        %1107 = vrot.lane.b32.xlu0 %v645, 64
        %v1108 = vpop.permute.xlu0 %1107
        %1109 = vrot.lane.b32.xlu0 %v646, 64
        %v1110 = vpop.permute.xlu0 %1109
        %1111 = vrot.lane.b32.xlu0 %v647, 64
        %v1112 = vpop.permute.xlu0 %1111
        %1113 = vrot.lane.b32.xlu0 %v648, 64
        %v1114 = vpop.permute.xlu0 %1113
        %1115 = vrot.lane.b32.xlu0 %v649, 64
        %v1116 = vpop.permute.xlu0 %1115
        %1117 = vrot.lane.b32.xlu0 %v650, 64
        %v1118 = vpop.permute.xlu0 %1117
        %1119 = vrot.lane.b32.xlu0 %v651, 64
        %v1120 = vpop.permute.xlu0 %1119
        %v1133 = vmul.f32 %v896, %v1098
        %v1134 = vmul.f32 %v899, %v1100
        %v1135 = vmul.f32 %v904, %v1102
        %v1136 = vmul.f32 %v896, %v1104
        %v1137 = vmul.f32 %v899, %v1106
        %v1138 = vmul.f32 %v904, %v1108
        %v1139 = vmul.f32 %v896, %v1110
        %v1140 = vmul.f32 %v899, %v1112
        %v1141 = vmul.f32 %v904, %v1114
        %v1142 = vmul.f32 %v896, %v1116
        %v1143 = vmul.f32 %v899, %v1118
        %v1144 = vmul.f32 %v904, %v1120
        %v1145 = vpack.c.bf16 %v1134, %v1133
        %v1146 = vpack.c.bf16 %v1136, %v1135
        %v1147 = vpack.c.bf16 %v1138, %v1137
        %v1148 = vpack.c.bf16 %v1140, %v1139
        %v1149 = vpack.c.bf16 %v1142, %v1141
        %v1150 = vpack.c.bf16 %v1144, %v1143
        %1157 = vrot.lane.b32.xlu0 %v1145, 64
        %v1158 = vpop.permute.xlu0 %1157
        %1159 = vrot.lane.b32.xlu0 %v1146, 64
        %v1160 = vpop.permute.xlu0 %1159
        %1161 = vrot.lane.b32.xlu0 %v1147, 64
        %v1162 = vpop.permute.xlu0 %1161
        %1163 = vrot.lane.b32.xlu0 %v1148, 64
        %v1164 = vpop.permute.xlu0 %1163
        %1165 = vrot.lane.b32.xlu0 %v1149, 64
        %v1166 = vpop.permute.xlu0 %1165
        %1167 = vrot.lane.b32.xlu0 %v1150, 64
        %v1168 = vpop.permute.xlu0 %1167
        %v1176 = vsel %vm1076, %v1095, 0
        %v1179 = vsel %vm1076, %v1096, 0
        %1181 = vmatprep.subr.bf16.mxu0 0
        %1182 = vmatpush1.bf16.msra.mxu0 %v1158
        %1183 = vmatprep.subr.bf16.mxu0 0
        %1184 = vmatpush1.bf16.msra.mxu0 %v1160
        %1185 = vmatprep.subr.bf16.mxu0 0
        %1186 = vmatpush1.bf16.msra.mxu0 %v1162
        %1187 = vmatprep.subr.bf16.mxu0 0
        %1188 = vmatpush1.bf16.msra.mxu0 %v1164
        %1189 = vmatprep.subr.bf16.mxu0 0
        %1190 = vmatpush1.bf16.msra.mxu0 %v1166
        %1191 = vmatprep.subr.bf16.mxu0 0
        %1192 = vmatpush1.bf16.msra.mxu0 %v1168
        %1193 = vmatprep.subr.bf16.mxu0 0
        %1194 = vmatpush1.bf16.msra.mxu0 0
        %1195 = vmatprep.subr.bf16.mxu0 0
        %1196 = vmatpush1.bf16.msra.mxu0 0
        %1197 = vmatprep.subr.bf16.mxu0 0
        %1198 = vmatpush1.bf16.msra.mxu0 0
        %1199 = vmatprep.subr.bf16.mxu0 0
        %1200 = vmatpush1.bf16.msra.mxu0 0
        %1201 = vmatprep.subr.bf16.mxu0 0
        %1202 = vmatpush1.bf16.msra.mxu0 0
        %1203 = vmatprep.subr.bf16.mxu0 0
        %1204 = vmatpush1.bf16.msra.mxu0 0
        %1205 = vmatprep.subr.bf16.mxu0 0
        %1206 = vmatpush1.bf16.msra.mxu0 0
        %1207 = vmatprep.subr.bf16.mxu0 0
        %1208 = vmatpush1.bf16.msra.mxu0 0
        %1209 = vmatprep.subr.bf16.mxu0 0
        %1210 = vmatpush1.bf16.msra.mxu0 0
        %1211 = vmatprep.subr.bf16.mxu0 0
        %1212 = vmatpush1.bf16.msra.mxu0 0
        %1213 = vmatprep.mubr.bf16.mxu0 0
        %1214 = vmatmul.mubr.bf16.gmra.mrb[0].mxu0 %v1176
        %v1215 = vpop.f32.mrb[0].mxu0
        %v1216 = vadd.f32 0.0, %v1215
        %v1217 = vpop.f32.mrb[0].mxu0
        %v1218 = vpop.f32.mrb[0].mxu0
        %v1219 = vadd.f32 0.0, %v1218
        %v1220 = vpop.f32.mrb[0].mxu0
        %1221 = vmatprep.mubr.bf16.mxu0 0
        %1222 = vmatmul.mubr.bf16.gmra.mrb[0].mxu0 %v1179
        %v1223 = vpop.f32.mrb[0].mxu0
        %v1224 = vadd.f32 0.0, %v1223
        %v1225 = vpop.f32.mrb[0].mxu0
        %v1226 = vpop.f32.mrb[0].mxu0
        %v1227 = vpop.f32.mrb[0].mxu0
        %1228 = vdwg.mxu0
        %1229 = vmatprep.subr.bf16.mxu0 0
        %1230 = vmatpush1.bf16.msra.mxu0 %v652
        %1231 = vmatprep.subr.bf16.mxu0 0
        %1232 = vmatpush1.bf16.msra.mxu0 %v653
        %1233 = vmatprep.subr.bf16.mxu0 0
        %1234 = vmatpush1.bf16.msra.mxu0 %v654
        %1235 = vmatprep.subr.bf16.mxu0 0
        %1236 = vmatpush1.bf16.msra.mxu0 %v655
        %1237 = vmatprep.subr.bf16.mxu0 0
        %1238 = vmatpush1.bf16.msra.mxu0 %v656
        %1239 = vmatprep.subr.bf16.mxu0 0
        %1240 = vmatpush1.bf16.msra.mxu0 %v657
        %1241 = vmatprep.subr.bf16.mxu0 0
        %1242 = vmatpush1.bf16.msra.mxu0 0
        %1243 = vmatprep.subr.bf16.mxu0 0
        %1244 = vmatpush1.bf16.msra.mxu0 0
        %1245 = vmatprep.subr.bf16.mxu0 0
        %1246 = vmatpush1.bf16.msra.mxu0 0
        %1247 = vmatprep.subr.bf16.mxu0 0
        %1248 = vmatpush1.bf16.msra.mxu0 0
        %1249 = vmatprep.subr.bf16.mxu0 0
        %1250 = vmatpush1.bf16.msra.mxu0 0
        %1251 = vmatprep.subr.bf16.mxu0 0
        %1252 = vmatpush1.bf16.msra.mxu0 0
        %1253 = vmatprep.subr.bf16.mxu0 0
        %1254 = vmatpush1.bf16.msra.mxu0 0
        %1255 = vmatprep.subr.bf16.mxu0 0
        %1256 = vmatpush1.bf16.msra.mxu0 0
        %1257 = vmatprep.subr.bf16.mxu0 0
        %1258 = vmatpush1.bf16.msra.mxu0 0
        %1259 = vmatprep.subr.bf16.mxu0 0
        %1260 = vmatpush1.bf16.msra.mxu0 0
        %1261 = vmatprep.mubr.bf16.mxu0 0
        %1262 = vmatmul.mubr.bf16.gmra.mrb[0].mxu0 %v1176
        %v1263 = vpop.f32.mrb[0].mxu0
        %v1264 = vadd.f32 0.0, %v1263
        %v1265 = vpop.f32.mrb[0].mxu0
        %v1266 = vpop.f32.mrb[0].mxu0
        %v1267 = vadd.f32 0.0, %v1266
        %v1268 = vpop.f32.mrb[0].mxu0
        %1269 = vmatprep.mubr.bf16.mxu0 0
        %1270 = vmatmul.mubr.bf16.gmra.mrb[0].mxu0 %v1179
        %v1271 = vpop.f32.mrb[0].mxu0
        %v1272 = vadd.f32 0.0, %v1271
        %v1273 = vpop.f32.mrb[0].mxu0
        %v1274 = vpop.f32.mrb[0].mxu0
        %v1275 = vpop.f32.mrb[0].mxu0
        %1276 = vdwg.mxu0
        %v1277 = vrcp.pop %v1264
        %v1278 = vrcp.pop %v1267
        %v1279 = vrcp.pop %v1272
        %v1280 = vmul.f32 %v1216, %v1277
        %v1281 = vmul.f32 %v1219, %v1278
        %v1282 = vmul.f32 %v1224, %v1279
        %v1283 = vpack.c.bf16 %v1281, %v1280
        %v1284 = vpack.c.bf16 %v1282, %v1282
        %v1285 = vld [vmem:[%s9] sm:$0xf]
        %v1286 = vld [vmem:[%s9 + $0x4] sm:$0xf]
        %v1287 = vld [vmem:[%s9 + $0x8] sm:$0xf]
        %v1288 = vld [vmem:[%s9 + $0xc] sm:$0xf]
        %v1289 = vld [vmem:[%s10] sm:$0x1]
        %v1291 = vlaneseq
        %v1292 = vshrl.u32 %v1291, 7
        %v1293 = vsub.s32 0, %v1292
        %v1294 = vrot.slane %v1289, %v1293
        %v1300 = vunpack.c.l.b16 %v1285
        %v1301 = vunpack.c.l.b16 %v1286
        %v1302 = vunpack.c.l.b16 %v1287
        %v1303 = vunpack.c.l.b16 %v1288
        %v1304 = vpack.c.b16 %v1301, %v1300
        %v1305 = vpack.c.b16 %v1303, %v1302
        %v1309 = vsel %vm771, %v1283, 0
        %v1312 = vsel %vm771, %v1284, 0
        %1314 = vmatprep.subr.bf16.mxu0 0
        %1315 = vmatpush1.bf16.msra.mxu0 %v1304
        %1316 = vmatprep.subr.bf16.mxu0 0
        %1317 = vmatpush1.bf16.msra.mxu0 %v1305
        %1318 = vmatprep.subr.bf16.mxu0 0
        %1319 = vmatpush1.bf16.msra.mxu0 0
        %1320 = vmatprep.subr.bf16.mxu0 0
        %1321 = vmatpush1.bf16.msra.mxu0 0
        %1322 = vmatprep.subr.bf16.mxu0 0
        %1323 = vmatpush1.bf16.msra.mxu0 0
        %1324 = vmatprep.subr.bf16.mxu0 0
        %1325 = vmatpush1.bf16.msra.mxu0 0
        %1326 = vmatprep.subr.bf16.mxu0 0
        %1327 = vmatpush1.bf16.msra.mxu0 0
        %1328 = vmatprep.subr.bf16.mxu0 0
        %1329 = vmatpush1.bf16.msra.mxu0 0
        %1330 = vmatprep.subr.bf16.mxu0 0
        %1331 = vmatpush1.bf16.msra.mxu0 0
        %1332 = vmatprep.subr.bf16.mxu0 0
        %1333 = vmatpush1.bf16.msra.mxu0 0
        %1334 = vmatprep.subr.bf16.mxu0 0
        %1335 = vmatpush1.bf16.msra.mxu0 0
        %1336 = vmatprep.subr.bf16.mxu0 0
        %1337 = vmatpush1.bf16.msra.mxu0 0
        %1338 = vmatprep.subr.bf16.mxu0 0
        %1339 = vmatpush1.bf16.msra.mxu0 0
        %1340 = vmatprep.subr.bf16.mxu0 0
        %1341 = vmatpush1.bf16.msra.mxu0 0
        %1342 = vmatprep.subr.bf16.mxu0 0
        %1343 = vmatpush1.bf16.msra.mxu0 0
        %1344 = vmatprep.subr.bf16.mxu0 0
        %1345 = vmatpush1.bf16.msra.mxu0 0
        %1346 = vmatprep.mubr.bf16.mxu0 0
        %1347 = vmatmul.mubr.bf16.gmra.mrb[0].mxu0 %v1309
        %v1348 = vpop.f32.mrb[0].mxu0
        %v1349 = vadd.f32 %v1294, %v1348
        %v1350 = vpop.f32.mrb[0].mxu0
        %v1351 = vpop.f32.mrb[0].mxu0
        %v1352 = vadd.f32 %v1294, %v1351
        %v1353 = vpop.f32.mrb[0].mxu0
        %1354 = vmatprep.mubr.bf16.mxu0 0
        %1355 = vmatmul.mubr.bf16.gmra.mrb[0].mxu0 %v1312
        %v1356 = vpop.f32.mrb[0].mxu0
        %v1357 = vadd.f32 %v1294, %v1356
        %v1358 = vpop.f32.mrb[0].mxu0
        %v1359 = vpop.f32.mrb[0].mxu0
        %v1360 = vpop.f32.mrb[0].mxu0
        %1361 = vdwg.mxu0
        %v1362 = vadd.f32 %v739, %v1349
        %v1363 = vadd.f32 %v742, %v1352
        %v1364 = vadd.f32 %v747, %v1357
        %v1365 = vld [vmem:[%s11] sm:$0x1]
        %v1366 = vld [vmem:[%s12] sm:$0x1]
        %v1367 = vsel %vm771, %v1362, 0.0
        %1368 = vadd.xlane.f32.xlu0 %v1367
        %v1369 = vpop.xlane.xlu0 %1368
        %v1370 = vsel %vm771, %v1363, 0.0
        %1371 = vadd.xlane.f32.xlu0 %v1370
        %v1372 = vpop.xlane.xlu0 %1371
        %v1373 = vsel %vm771, %v1364, 0.0
        %1374 = vadd.xlane.f32.xlu0 %v1373
        %v1375 = vpop.xlane.xlu0 %1374
        %v1376 = vmul.f32 %v1369, %v781
        %v1377 = vmul.f32 %v1372, %v781
        %v1378 = vmul.f32 %v1375, %v781
        %v1379 = vsub.f32 %v1362, %v1376
        %v1380 = vsub.f32 %v1363, %v1377
        %v1381 = vsub.f32 %v1364, %v1378
        %v1382 = vmul.f32 %v1379, %v1379
        %v1383 = vmul.f32 %v1380, %v1380
        %v1384 = vmul.f32 %v1381, %v1381
        %v1385 = vsel %vm771, %v1382, 0.0
        %1386 = vadd.xlane.f32.xlu0 %v1385
        %v1387 = vpop.xlane.xlu0 %1386
        %v1388 = vsel %vm771, %v1383, 0.0
        %1389 = vadd.xlane.f32.xlu0 %v1388
        %v1390 = vpop.xlane.xlu0 %1389
        %v1391 = vsel %vm771, %v1384, 0.0
        %1392 = vadd.xlane.f32.xlu0 %v1391
        %v1393 = vpop.xlane.xlu0 %1392
        %v1394 = vmul.f32 %v1387, %v781
        %v1395 = vmul.f32 %v1390, %v781
        %v1396 = vmul.f32 %v1393, %v781
        %v1397 = vadd.f32 %v1394, 1e-06
        %v1398 = vadd.f32 %v1395, 1e-06
        %v1399 = vadd.f32 %v1396, 1e-06
        %v1400 = vrsqrt.pop %v1397
        %v1401 = vrsqrt.pop %v1398
        %v1402 = vrsqrt.pop %v1399
        %v1403 = vmul.f32 %v1379, %v1400
        %v1404 = vmul.f32 %v1380, %v1401
        %v1405 = vmul.f32 %v1381, %v1402
        %v1407 = vlaneseq
        %v1408 = vshrl.u32 %v1407, 7
        %v1409 = vsub.s32 0, %v1408
        %v1410 = vrot.slane %v1365, %v1409
        %v1412 = vmul.f32 %v1403, %v1410
        %v1413 = vmul.f32 %v1404, %v1410
        %v1414 = vmul.f32 %v1405, %v1410
        %v1416 = vlaneseq
        %v1417 = vshrl.u32 %v1416, 7
        %v1418 = vsub.s32 0, %v1417
        %v1419 = vrot.slane %v1366, %v1418
        %v1421 = vadd.f32 %v1412, %v1419
        %v1422 = vadd.f32 %v1413, %v1419
        %v1423 = vadd.f32 %v1414, %v1419
        %v1424 = vpack.c.bf16 %v1422, %v1421
        %v1425 = vpack.c.bf16 %v1423, %v1423
        %v1426 = vld [vmem:[%s13] sm:$0xf]
        %v1427 = vld [vmem:[%s13 + $0x4] sm:$0xf]
        %v1428 = vld [vmem:[%s13 + $0x8] sm:$0xf]
        %v1429 = vld [vmem:[%s13 + $0xc] sm:$0xf]
        %v1430 = vld [vmem:[%s14] sm:$0x1]
        %v1432 = vlaneseq
        %v1433 = vshrl.u32 %v1432, 7
        %v1434 = vsub.s32 0, %v1433
        %v1435 = vrot.slane %v1430, %v1434
        %v1441 = vunpack.c.l.b16 %v1426
        %v1442 = vunpack.c.l.b16 %v1427
        %v1443 = vunpack.c.l.b16 %v1428
        %v1444 = vunpack.c.l.b16 %v1429
        %v1445 = vpack.c.b16 %v1442, %v1441
        %v1446 = vpack.c.b16 %v1444, %v1443
        %v1450 = vsel %vm771, %v1424, 0
        %v1453 = vsel %vm771, %v1425, 0
        %1455 = vmatprep.subr.bf16.mxu0 0
        %1456 = vmatpush1.bf16.msra.mxu0 %v1445
        %1457 = vmatprep.subr.bf16.mxu0 0
        %1458 = vmatpush1.bf16.msra.mxu0 %v1446
        %1459 = vmatprep.subr.bf16.mxu0 0
        %1460 = vmatpush1.bf16.msra.mxu0 0
        %1461 = vmatprep.subr.bf16.mxu0 0
        %1462 = vmatpush1.bf16.msra.mxu0 0
        %1463 = vmatprep.subr.bf16.mxu0 0
        %1464 = vmatpush1.bf16.msra.mxu0 0
        %1465 = vmatprep.subr.bf16.mxu0 0
        %1466 = vmatpush1.bf16.msra.mxu0 0
        %1467 = vmatprep.subr.bf16.mxu0 0
        %1468 = vmatpush1.bf16.msra.mxu0 0
        %1469 = vmatprep.subr.bf16.mxu0 0
        %1470 = vmatpush1.bf16.msra.mxu0 0
        %1471 = vmatprep.subr.bf16.mxu0 0
        %1472 = vmatpush1.bf16.msra.mxu0 0
        %1473 = vmatprep.subr.bf16.mxu0 0
        %1474 = vmatpush1.bf16.msra.mxu0 0
        %1475 = vmatprep.subr.bf16.mxu0 0
        %1476 = vmatpush1.bf16.msra.mxu0 0
        %1477 = vmatprep.subr.bf16.mxu0 0
        %1478 = vmatpush1.bf16.msra.mxu0 0
        %1479 = vmatprep.subr.bf16.mxu0 0
        %1480 = vmatpush1.bf16.msra.mxu0 0
        %1481 = vmatprep.subr.bf16.mxu0 0
        %1482 = vmatpush1.bf16.msra.mxu0 0
        %1483 = vmatprep.subr.bf16.mxu0 0
        %1484 = vmatpush1.bf16.msra.mxu0 0
        %1485 = vmatprep.subr.bf16.mxu0 0
        %1486 = vmatpush1.bf16.msra.mxu0 0
        %1487 = vmatprep.mubr.bf16.mxu0 0
        %1488 = vmatmul.mubr.bf16.gmra.mrb[0].mxu0 %v1450
        %v1489 = vpop.f32.mrb[0].mxu0
        %v1490 = vadd.f32 %v1435, %v1489
        %v1491 = vpop.f32.mrb[0].mxu0
        %v1492 = vpop.f32.mrb[0].mxu0
        %v1493 = vadd.f32 %v1435, %v1492
        %v1494 = vpop.f32.mrb[0].mxu0
        %1495 = vmatprep.mubr.bf16.mxu0 0
        %1496 = vmatmul.mubr.bf16.gmra.mrb[0].mxu0 %v1453
        %v1497 = vpop.f32.mrb[0].mxu0
        %v1498 = vadd.f32 %v1435, %v1497
        %v1499 = vpop.f32.mrb[0].mxu0
        %v1500 = vpop.f32.mrb[0].mxu0
        %v1501 = vpop.f32.mrb[0].mxu0
        %1502 = vdwg.mxu0
        %v1503 = vmul.f32 %v1490, %v1490
        %v1504 = vmul.f32 %v1493, %v1493
        %v1505 = vmul.f32 %v1498, %v1498
        %v1506 = vmul.f32 %v1490, %v1503
        %v1507 = vmul.f32 %v1493, %v1504
        %v1508 = vmul.f32 %v1498, %v1505
        %v1509 = vmul.f32 %v1506, 0.044715
        %v1510 = vmul.f32 %v1507, 0.044715
        %v1511 = vmul.f32 %v1508, 0.044715
        %v1512 = vadd.f32 %v1490, %v1509
        %v1513 = vadd.f32 %v1493, %v1510
        %v1514 = vadd.f32 %v1498, %v1511
        %v1515 = vmul.f32 %v1512, 0.7978846
        %v1516 = vmul.f32 %v1513, 0.7978846
        %v1517 = vmul.f32 %v1514, 0.7978846
        %v1518 = vtanh.pop %v1515
        %v1519 = vtanh.pop %v1516
        %v1520 = vtanh.pop %v1517
        %v1521 = vadd.f32 %v1518, 1.0
        %v1522 = vadd.f32 %v1519, 1.0
        %v1523 = vadd.f32 %v1520, 1.0
        %v1524 = vmul.f32 %v1521, 0.5
        %v1525 = vmul.f32 %v1522, 0.5
        %v1526 = vmul.f32 %v1523, 0.5
        %v1527 = vmul.f32 %v1490, %v1524
        %v1528 = vmul.f32 %v1493, %v1525
        %v1529 = vmul.f32 %v1498, %v1526
        %v1530 = vpack.c.bf16 %v1528, %v1527
        %v1531 = vpack.c.bf16 %v1529, %v1529
        %v1532 = vld [vmem:[%s15] sm:$0xf]
        %v1533 = vld [vmem:[%s15 + $0x4] sm:$0xf]
        %v1534 = vld [vmem:[%s15 + $0x8] sm:$0xf]
        %v1535 = vld [vmem:[%s15 + $0xc] sm:$0xf]
        %v1536 = vld [vmem:[%s15 + $0x10] sm:$0xf]
        %v1537 = vld [vmem:[%s15 + $0x14] sm:$0xf]
        %v1538 = vld [vmem:[%s15 + $0x18] sm:$0xf]
        %v1539 = vld [vmem:[%s15 + $0x1c] sm:$0xf]
        %v1540 = vld [vmem:[%s15 + $0x20] sm:$0xf]
        %v1541 = vld [vmem:[%s15 + $0x24] sm:$0xf]
        %v1542 = vld [vmem:[%s15 + $0x28] sm:$0xf]
        %v1543 = vld [vmem:[%s15 + $0x2c] sm:$0xf]
        %v1544 = vld [vmem:[%s15 + $0x30] sm:$0xf]
        %v1545 = vld [vmem:[%s15 + $0x34] sm:$0xf]
        %v1546 = vld [vmem:[%s15 + $0x38] sm:$0xf]
        %v1547 = vld [vmem:[%s15 + $0x3c] sm:$0xf]
        %v1548 = vld [vmem:[%s16] sm:$0x1]
        %v1550 = vlaneseq
        %v1551 = vshrl.u32 %v1550, 7
        %v1552 = vsub.s32 0, %v1551
        %v1553 = vrot.slane %v1548, %v1552
        %v1571 = vunpack.c.l.b16 %v1532
        %v1572 = vunpack.c.l.b16 %v1533
        %v1573 = vunpack.c.l.b16 %v1534
        %v1574 = vunpack.c.l.b16 %v1535
        %v1575 = vunpack.c.l.b16 %v1536
        %v1576 = vunpack.c.l.b16 %v1537
        %v1577 = vunpack.c.l.b16 %v1538
        %v1578 = vunpack.c.l.b16 %v1539
        %v1579 = vunpack.c.l.b16 %v1540
        %v1580 = vunpack.c.l.b16 %v1541
        %v1581 = vunpack.c.l.b16 %v1542
        %v1582 = vunpack.c.l.b16 %v1543
        %v1583 = vunpack.c.l.b16 %v1544
        %v1584 = vunpack.c.l.b16 %v1545
        %v1585 = vunpack.c.l.b16 %v1546
        %v1586 = vunpack.c.l.b16 %v1547
        %v1587 = vpack.c.b16 %v1572, %v1571
        %v1588 = vpack.c.b16 %v1574, %v1573
        %v1589 = vpack.c.b16 %v1576, %v1575
        %v1590 = vpack.c.b16 %v1578, %v1577
        %v1591 = vpack.c.b16 %v1580, %v1579
        %v1592 = vpack.c.b16 %v1582, %v1581
        %v1593 = vpack.c.b16 %v1584, %v1583
        %v1594 = vpack.c.b16 %v1586, %v1585
        %1603 = vmatprep.subr.bf16.mxu0 0
        %1604 = vmatpush1.bf16.msra.mxu0 %v1587
        %1605 = vmatprep.subr.bf16.mxu0 0
        %1606 = vmatpush1.bf16.msra.mxu0 %v1588
        %1607 = vmatprep.subr.bf16.mxu0 0
        %1608 = vmatpush1.bf16.msra.mxu0 %v1589
        %1609 = vmatprep.subr.bf16.mxu0 0
        %1610 = vmatpush1.bf16.msra.mxu0 %v1590
        %1611 = vmatprep.subr.bf16.mxu0 0
        %1612 = vmatpush1.bf16.msra.mxu0 %v1591
        %1613 = vmatprep.subr.bf16.mxu0 0
        %1614 = vmatpush1.bf16.msra.mxu0 %v1592
        %1615 = vmatprep.subr.bf16.mxu0 0
        %1616 = vmatpush1.bf16.msra.mxu0 %v1593
        %1617 = vmatprep.subr.bf16.mxu0 0
        %1618 = vmatpush1.bf16.msra.mxu0 %v1594
        %1619 = vmatprep.subr.bf16.mxu0 0
        %1620 = vmatpush1.bf16.msra.mxu0 0
        %1621 = vmatprep.subr.bf16.mxu0 0
        %1622 = vmatpush1.bf16.msra.mxu0 0
        %1623 = vmatprep.subr.bf16.mxu0 0
        %1624 = vmatpush1.bf16.msra.mxu0 0
        %1625 = vmatprep.subr.bf16.mxu0 0
        %1626 = vmatpush1.bf16.msra.mxu0 0
        %1627 = vmatprep.subr.bf16.mxu0 0
        %1628 = vmatpush1.bf16.msra.mxu0 0
        %1629 = vmatprep.subr.bf16.mxu0 0
        %1630 = vmatpush1.bf16.msra.mxu0 0
        %1631 = vmatprep.subr.bf16.mxu0 0
        %1632 = vmatpush1.bf16.msra.mxu0 0
        %1633 = vmatprep.subr.bf16.mxu0 0
        %1634 = vmatpush1.bf16.msra.mxu0 0
        %1635 = vmatprep.mubr.bf16.mxu0 0
        %1636 = vmatmul.mubr.bf16.gmra.mrb[0].mxu0 %v1530
        %v1637 = vpop.f32.mrb[0].mxu0
        %v1638 = vadd.f32 %v1553, %v1637
        %v1639 = vpop.f32.mrb[0].mxu0
        %v1640 = vpop.f32.mrb[0].mxu0
        %v1641 = vadd.f32 %v1553, %v1640
        %v1642 = vpop.f32.mrb[0].mxu0
        %1643 = vmatprep.mubr.bf16.mxu0 0
        %1644 = vmatmul.mubr.bf16.gmra.mrb[0].mxu0 %v1531
        %v1645 = vpop.f32.mrb[0].mxu0
        %v1646 = vadd.f32 %v1553, %v1645
        %v1647 = vpop.f32.mrb[0].mxu0
        %v1648 = vpop.f32.mrb[0].mxu0
        %v1649 = vpop.f32.mrb[0].mxu0
        %1650 = vdwg.mxu0
        %v1651 = vadd.f32 %v1362, %v1638
        %v1652 = vadd.f32 %v1363, %v1641
        %v1653 = vadd.f32 %v1364, %v1646
        %v1654 = vpack.c.bf16 %v1652, %v1651
        %v1655 = vpack.c.bf16 %v1653, %v1653
        %v1658 = vunpack.c.l.b16 %v1654
        %v1659 = vunpack.c.h.b16 %v1654
        %v1660 = vunpack.c.l.b16 %v1655
        %v1661 = vpack.c.b16 %v1658, %v1658
        %v1662 = vpack.c.b16 %v1659, %v1659
        %v1663 = vpack.c.b16 %v1660, %v1660
        %s1667 = scalar_lea.vmem %s633, 12 [#allocation4]
        %1668 = vst.msk [vmem:[%s1667] sm:$0xf] %vm765, %v1661
        %1669 = vst.msk [vmem:[%s1667 + $0x4] sm:$0xf] %vm765, %v1662
        %1670 = vst.msk [vmem:[%s1667 + $0x8] sm:$0xf] %vm765, %v1663
        %s1671 = scalar_lea.vmem %s5, 1
        %v1672 = vld [vmem:[%s1671] sm:$0x1]
        %s1673 = scalar_lea.vmem %s6, 1
        %v1674 = vld [vmem:[%s1673] sm:$0x1]
        %v1675 = vsel %vm771, %v1651, 0.0
        %1676 = vadd.xlane.f32.xlu0 %v1675
        %v1677 = vpop.xlane.xlu0 %1676
        %v1678 = vsel %vm771, %v1652, 0.0
        %1679 = vadd.xlane.f32.xlu0 %v1678
        %v1680 = vpop.xlane.xlu0 %1679
        %v1681 = vsel %vm771, %v1653, 0.0
        %1682 = vadd.xlane.f32.xlu0 %v1681
        %v1683 = vpop.xlane.xlu0 %1682
        %v1684 = vmul.f32 %v1677, %v781
        %v1685 = vmul.f32 %v1680, %v781
        %v1686 = vmul.f32 %v1683, %v781
        %v1687 = vsub.f32 %v1651, %v1684
        %v1688 = vsub.f32 %v1652, %v1685
        %v1689 = vsub.f32 %v1653, %v1686
        %v1690 = vmul.f32 %v1687, %v1687
        %v1691 = vmul.f32 %v1688, %v1688
        %v1692 = vmul.f32 %v1689, %v1689
        %v1693 = vsel %vm771, %v1690, 0.0
        %1694 = vadd.xlane.f32.xlu0 %v1693
        %v1695 = vpop.xlane.xlu0 %1694
        %v1696 = vsel %vm771, %v1691, 0.0
        %1697 = vadd.xlane.f32.xlu0 %v1696
        %v1698 = vpop.xlane.xlu0 %1697
        %v1699 = vsel %vm771, %v1692, 0.0
        %1700 = vadd.xlane.f32.xlu0 %v1699
        %v1701 = vpop.xlane.xlu0 %1700
        %v1702 = vmul.f32 %v1695, %v781
        %v1703 = vmul.f32 %v1698, %v781
        %v1704 = vmul.f32 %v1701, %v781
        %v1705 = vadd.f32 %v1702, 1e-06
        %v1706 = vadd.f32 %v1703, 1e-06
        %v1707 = vadd.f32 %v1704, 1e-06
        %v1708 = vrsqrt.pop %v1705
        %v1709 = vrsqrt.pop %v1706
        %v1710 = vrsqrt.pop %v1707
        %v1711 = vmul.f32 %v1687, %v1708
        %v1712 = vmul.f32 %v1688, %v1709
        %v1713 = vmul.f32 %v1689, %v1710
        %v1715 = vlaneseq
        %v1716 = vshrl.u32 %v1715, 7
        %v1717 = vsub.s32 0, %v1716
        %v1718 = vrot.slane %v1672, %v1717
        %v1720 = vmul.f32 %v1711, %v1718
        %v1721 = vmul.f32 %v1712, %v1718
        %v1722 = vmul.f32 %v1713, %v1718
        %v1724 = vlaneseq
        %v1725 = vshrl.u32 %v1724, 7
        %v1726 = vsub.s32 0, %v1725
        %v1727 = vrot.slane %v1674, %v1726
        %v1729 = vadd.f32 %v1720, %v1727
        %v1730 = vadd.f32 %v1721, %v1727
        %v1731 = vadd.f32 %v1722, %v1727
        %v1732 = vpack.c.bf16 %v1730, %v1729
        %v1733 = vpack.c.bf16 %v1731, %v1731
        %s1734 = scalar_lea.vmem %s7, 16
        %v1735 = vld [vmem:[%s1734] sm:$0xf]
        %v1736 = vld [vmem:[%s1734 + $0x4] sm:$0xf]
        %v1737 = vld [vmem:[%s1734 + $0x8] sm:$0xf]
        %v1738 = vld [vmem:[%s1734 + $0xc] sm:$0xf]
        %s1739 = scalar_lea.vmem %s8, 1
        %v1740 = vld [vmem:[%s1739] sm:$0x1]
        %v1742 = vlaneseq
        %v1743 = vshrl.u32 %v1742, 7
        %v1744 = vsub.s32 0, %v1743
        %v1745 = vrot.slane %v1740, %v1744
        %v1751 = vunpack.c.l.b16 %v1735
        %v1752 = vunpack.c.l.b16 %v1736
        %v1753 = vunpack.c.l.b16 %v1737
        %v1754 = vunpack.c.l.b16 %v1738
        %v1755 = vpack.c.b16 %v1752, %v1751
        %v1756 = vpack.c.b16 %v1754, %v1753
        %v1760 = vsel %vm771, %v1732, 0
        %v1763 = vsel %vm771, %v1733, 0
        %1765 = vmatprep.subr.bf16.mxu0 0
        %1766 = vmatpush1.bf16.msra.mxu0 %v1755
        %1767 = vmatprep.subr.bf16.mxu0 0
        %1768 = vmatpush1.bf16.msra.mxu0 %v1756
        %1769 = vmatprep.subr.bf16.mxu0 0
        %1770 = vmatpush1.bf16.msra.mxu0 0
        %1771 = vmatprep.subr.bf16.mxu0 0
        %1772 = vmatpush1.bf16.msra.mxu0 0
        %1773 = vmatprep.subr.bf16.mxu0 0
        %1774 = vmatpush1.bf16.msra.mxu0 0
        %1775 = vmatprep.subr.bf16.mxu0 0
        %1776 = vmatpush1.bf16.msra.mxu0 0
        %1777 = vmatprep.subr.bf16.mxu0 0
        %1778 = vmatpush1.bf16.msra.mxu0 0
        %1779 = vmatprep.subr.bf16.mxu0 0
        %1780 = vmatpush1.bf16.msra.mxu0 0
        %1781 = vmatprep.subr.bf16.mxu0 0
        %1782 = vmatpush1.bf16.msra.mxu0 0
        %1783 = vmatprep.subr.bf16.mxu0 0
        %1784 = vmatpush1.bf16.msra.mxu0 0
        %1785 = vmatprep.subr.bf16.mxu0 0
        %1786 = vmatpush1.bf16.msra.mxu0 0
        %1787 = vmatprep.subr.bf16.mxu0 0
        %1788 = vmatpush1.bf16.msra.mxu0 0
        %1789 = vmatprep.subr.bf16.mxu0 0
        %1790 = vmatpush1.bf16.msra.mxu0 0
        %1791 = vmatprep.subr.bf16.mxu0 0
        %1792 = vmatpush1.bf16.msra.mxu0 0
        %1793 = vmatprep.subr.bf16.mxu0 0
        %1794 = vmatpush1.bf16.msra.mxu0 0
        %1795 = vmatprep.subr.bf16.mxu0 0
        %1796 = vmatpush1.bf16.msra.mxu0 0
        %1797 = vmatprep.mubr.bf16.mxu0 0
        %1798 = vmatmul.mubr.bf16.gmra.mrb[0].mxu0 %v1760
        %v1799 = vpop.f32.mrb[0].mxu0
        %v1800 = vadd.f32 %v1745, %v1799
        %v1801 = vpop.f32.mrb[0].mxu0
        %v1802 = vpop.f32.mrb[0].mxu0
        %v1803 = vadd.f32 %v1745, %v1802
        %v1804 = vpop.f32.mrb[0].mxu0
        %1805 = vmatprep.mubr.bf16.mxu0 0
        %1806 = vmatmul.mubr.bf16.gmra.mrb[0].mxu0 %v1763
        %v1807 = vpop.f32.mrb[0].mxu0
        %v1808 = vadd.f32 %v1745, %v1807
        %v1809 = vpop.f32.mrb[0].mxu0
        %v1810 = vpop.f32.mrb[0].mxu0
        %v1811 = vpop.f32.mrb[0].mxu0
        %1812 = vdwg.mxu0
        %v1813 = vmul.f32 %v1800, 0.35355338
        %v1814 = vmul.f32 %v1803, 0.35355338
        %v1815 = vmul.f32 %v1808, 0.35355338
        %v1816 = vpack.c.bf16 %v1814, %v1813
        %v1817 = vpack.c.bf16 %v1815, %v1815
        %v1818 = vmul.f32 %v1800, %v927
        %v1819 = vmul.f32 %v1803, %v929
        %v1820 = vmul.f32 %v1808, %v931
        %v1821 = vmul.f32 %v1800, %v933
        %v1822 = vmul.f32 %v1803, %v935
        %v1823 = vmul.f32 %v1808, %v937
        %v1824 = vmul.f32 %v1800, %v939
        %v1825 = vmul.f32 %v1803, %v941
        %v1826 = vmul.f32 %v1808, %v943
        %v1827 = vmul.f32 %v1800, %v945
        %v1828 = vmul.f32 %v1803, %v947
        %v1829 = vmul.f32 %v1808, %v949
        %v1830 = vpack.c.bf16 %v1819, %v1818
        %v1831 = vpack.c.bf16 %v1821, %v1820
        %v1832 = vpack.c.bf16 %v1823, %v1822
        %v1833 = vpack.c.bf16 %v1825, %v1824
        %v1834 = vpack.c.bf16 %v1827, %v1826
        %v1835 = vpack.c.bf16 %v1829, %v1828
        %1842 = vrot.lane.b32.xlu0 %v1830, 96
        %v1843 = vpop.permute.xlu0 %1842
        %1844 = vrot.lane.b32.xlu0 %v1831, 96
        %v1845 = vpop.permute.xlu0 %1844
        %1846 = vrot.lane.b32.xlu0 %v1832, 96
        %v1847 = vpop.permute.xlu0 %1846
        %1848 = vrot.lane.b32.xlu0 %v1833, 96
        %v1849 = vpop.permute.xlu0 %1848
        %1850 = vrot.lane.b32.xlu0 %v1834, 96
        %v1851 = vpop.permute.xlu0 %1850
        %1852 = vrot.lane.b32.xlu0 %v1835, 96
        %v1853 = vpop.permute.xlu0 %1852
        %v1855 = vsel %vm771, %v1816, 0
        %v1858 = vsel %vm771, %v1817, 0
        %v1861 = vsel %vm771, %v1843, 0
        %v1864 = vsel %vm771, %v1845, 0
        %v1867 = vsel %vm771, %v1847, 0
        %v1870 = vsel %vm771, %v1849, 0
        %v1873 = vsel %vm771, %v1851, 0
        %v1876 = vsel %vm771, %v1853, 0
        %1878 = vmatprep.subr.bf16.mxu0 0
        %1879 = vmatpush1.bf16.xpose.msra.mxu0 %v1861
        %1880 = vmatprep.subr.bf16.mxu0 0
        %1881 = vmatpush1.bf16.xpose.msra.mxu0 %v1864
        %1882 = vmatprep.subr.bf16.mxu0 0
        %1883 = vmatpush1.bf16.xpose.msra.mxu0 %v1867
        %1884 = vmatprep.subr.bf16.mxu0 0
        %1885 = vmatpush1.bf16.xpose.msra.mxu0 %v1870
        %1886 = vmatprep.subr.bf16.mxu0 0
        %1887 = vmatpush1.bf16.xpose.msra.mxu0 %v1873
        %1888 = vmatprep.subr.bf16.mxu0 0
        %1889 = vmatpush1.bf16.xpose.msra.mxu0 %v1876
        %1890 = vmatprep.subr.bf16.mxu0 0
        %1891 = vmatpush1.bf16.xpose.msra.mxu0 0
        %1892 = vmatprep.subr.bf16.mxu0 0
        %1893 = vmatpush1.bf16.xpose.msra.mxu0 0
        %1894 = vmatprep.subr.bf16.mxu0 0
        %1895 = vmatpush1.bf16.xpose.msra.mxu0 0
        %1896 = vmatprep.subr.bf16.mxu0 0
        %1897 = vmatpush1.bf16.xpose.msra.mxu0 0
        %1898 = vmatprep.subr.bf16.mxu0 0
        %1899 = vmatpush1.bf16.xpose.msra.mxu0 0
        %1900 = vmatprep.subr.bf16.mxu0 0
        %1901 = vmatpush1.bf16.xpose.msra.mxu0 0
        %1902 = vmatprep.subr.bf16.mxu0 0
        %1903 = vmatpush1.bf16.xpose.msra.mxu0 0
        %1904 = vmatprep.subr.bf16.mxu0 0
        %1905 = vmatpush1.bf16.xpose.msra.mxu0 0
        %1906 = vmatprep.subr.bf16.mxu0 0
        %1907 = vmatpush1.bf16.xpose.msra.mxu0 0
        %1908 = vmatprep.subr.bf16.mxu0 0
        %1909 = vmatpush1.bf16.xpose.msra.mxu0 0
        %1910 = vmatprep.mubr.bf16.mxu0 0
        %1911 = vmatmul.mubr.bf16.gmra.mrb[0].mxu0 %v1855
        %v1912 = vpop.f32.mrb[0].mxu0
        %v1913 = vadd.f32 %v984, %v1912
        %v1914 = vpop.f32.mrb[0].mxu0
        %v1915 = vpop.f32.mrb[0].mxu0
        %v1916 = vadd.f32 %v984, %v1915
        %v1917 = vpop.f32.mrb[0].mxu0
        %1918 = vmatprep.mubr.bf16.mxu0 0
        %1919 = vmatmul.mubr.bf16.gmra.mrb[0].mxu0 %v1858
        %v1920 = vpop.f32.mrb[0].mxu0
        %v1921 = vadd.f32 %v984, %v1920
        %v1922 = vpop.f32.mrb[0].mxu0
        %v1923 = vpop.f32.mrb[0].mxu0
        %v1924 = vpop.f32.mrb[0].mxu0
        %1925 = vdwg.mxu0
        %v1926 = vsel %vm1076, %v1913, -inf
        %1927 = vmax.xlane.f32.xlu0 %v1926
        %v1928 = vpop.xlane.xlu0 %1927
        %v1929 = vsel %vm1076, %v1916, -inf
        %1930 = vmax.xlane.f32.xlu0 %v1929
        %v1931 = vpop.xlane.xlu0 %1930
        %v1932 = vsel %vm1076, %v1921, -inf
        %1933 = vmax.xlane.f32.xlu0 %v1932
        %v1934 = vpop.xlane.xlu0 %1933
        %v1935 = vsub.f32 %v1913, %v1928
        %v1936 = vsub.f32 %v1916, %v1931
        %v1937 = vsub.f32 %v1921, %v1934
        %v1938 = vmul.f32 %v1935, 1.442695
        %v1939 = vpow.pop %v1938
        %v1940 = vmul.f32 %v1936, 1.442695
        %v1941 = vpow.pop %v1940
        %v1942 = vmul.f32 %v1937, 1.442695
        %v1943 = vpow.pop %v1942
        %v1944 = vpack.c.bf16 %v1941, %v1939
        %v1945 = vpack.c.bf16 %v1943, %v1943
        %v1946 = vmul.f32 %v1800, %v1098
        %v1947 = vmul.f32 %v1803, %v1100
        %v1948 = vmul.f32 %v1808, %v1102
        %v1949 = vmul.f32 %v1800, %v1104
        %v1950 = vmul.f32 %v1803, %v1106
        %v1951 = vmul.f32 %v1808, %v1108
        %v1952 = vmul.f32 %v1800, %v1110
        %v1953 = vmul.f32 %v1803, %v1112
        %v1954 = vmul.f32 %v1808, %v1114
        %v1955 = vmul.f32 %v1800, %v1116
        %v1956 = vmul.f32 %v1803, %v1118
        %v1957 = vmul.f32 %v1808, %v1120
        %v1958 = vpack.c.bf16 %v1947, %v1946
        %v1959 = vpack.c.bf16 %v1949, %v1948
        %v1960 = vpack.c.bf16 %v1951, %v1950
        %v1961 = vpack.c.bf16 %v1953, %v1952
        %v1962 = vpack.c.bf16 %v1955, %v1954
        %v1963 = vpack.c.bf16 %v1957, %v1956
        %1970 = vrot.lane.b32.xlu0 %v1958, 64
        %v1971 = vpop.permute.xlu0 %1970
        %1972 = vrot.lane.b32.xlu0 %v1959, 64
        %v1973 = vpop.permute.xlu0 %1972
        %1974 = vrot.lane.b32.xlu0 %v1960, 64
        %v1975 = vpop.permute.xlu0 %1974
        %1976 = vrot.lane.b32.xlu0 %v1961, 64
        %v1977 = vpop.permute.xlu0 %1976
        %1978 = vrot.lane.b32.xlu0 %v1962, 64
        %v1979 = vpop.permute.xlu0 %1978
        %1980 = vrot.lane.b32.xlu0 %v1963, 64
        %v1981 = vpop.permute.xlu0 %1980
        %v1989 = vsel %vm1076, %v1944, 0
        %v1992 = vsel %vm1076, %v1945, 0
        %1994 = vmatprep.subr.bf16.mxu0 0
        %1995 = vmatpush1.bf16.msra.mxu0 %v1971
        %1996 = vmatprep.subr.bf16.mxu0 0
        %1997 = vmatpush1.bf16.msra.mxu0 %v1973
        %1998 = vmatprep.subr.bf16.mxu0 0
        %1999 = vmatpush1.bf16.msra.mxu0 %v1975
        %2000 = vmatprep.subr.bf16.mxu0 0
        %2001 = vmatpush1.bf16.msra.mxu0 %v1977
        %2002 = vmatprep.subr.bf16.mxu0 0
        %2003 = vmatpush1.bf16.msra.mxu0 %v1979
        %2004 = vmatprep.subr.bf16.mxu0 0
        %2005 = vmatpush1.bf16.msra.mxu0 %v1981
        %2006 = vmatprep.subr.bf16.mxu0 0
        %2007 = vmatpush1.bf16.msra.mxu0 0
        %2008 = vmatprep.subr.bf16.mxu0 0
        %2009 = vmatpush1.bf16.msra.mxu0 0
        %2010 = vmatprep.subr.bf16.mxu0 0
        %2011 = vmatpush1.bf16.msra.mxu0 0
        %2012 = vmatprep.subr.bf16.mxu0 0
        %2013 = vmatpush1.bf16.msra.mxu0 0
        %2014 = vmatprep.subr.bf16.mxu0 0
        %2015 = vmatpush1.bf16.msra.mxu0 0
        %2016 = vmatprep.subr.bf16.mxu0 0
        %2017 = vmatpush1.bf16.msra.mxu0 0
        %2018 = vmatprep.subr.bf16.mxu0 0
        %2019 = vmatpush1.bf16.msra.mxu0 0
        %2020 = vmatprep.subr.bf16.mxu0 0
        %2021 = vmatpush1.bf16.msra.mxu0 0
        %2022 = vmatprep.subr.bf16.mxu0 0
        %2023 = vmatpush1.bf16.msra.mxu0 0
        %2024 = vmatprep.subr.bf16.mxu0 0
        %2025 = vmatpush1.bf16.msra.mxu0 0
        %2026 = vmatprep.mubr.bf16.mxu0 0
        %2027 = vmatmul.mubr.bf16.gmra.mrb[0].mxu0 %v1989
        %v2028 = vpop.f32.mrb[0].mxu0
        %v2029 = vadd.f32 0.0, %v2028
        %v2030 = vpop.f32.mrb[0].mxu0
        %v2031 = vpop.f32.mrb[0].mxu0
        %v2032 = vadd.f32 0.0, %v2031
        %v2033 = vpop.f32.mrb[0].mxu0
        %2034 = vmatprep.mubr.bf16.mxu0 0
        %2035 = vmatmul.mubr.bf16.gmra.mrb[0].mxu0 %v1992
        %v2036 = vpop.f32.mrb[0].mxu0
        %v2037 = vadd.f32 0.0, %v2036
        %v2038 = vpop.f32.mrb[0].mxu0
        %v2039 = vpop.f32.mrb[0].mxu0
        %v2040 = vpop.f32.mrb[0].mxu0
        %2041 = vdwg.mxu0
        %2042 = vmatprep.subr.bf16.mxu0 0
        %2043 = vmatpush1.bf16.msra.mxu0 %v652
        %2044 = vmatprep.subr.bf16.mxu0 0
        %2045 = vmatpush1.bf16.msra.mxu0 %v653
        %2046 = vmatprep.subr.bf16.mxu0 0
        %2047 = vmatpush1.bf16.msra.mxu0 %v654
        %2048 = vmatprep.subr.bf16.mxu0 0
        %2049 = vmatpush1.bf16.msra.mxu0 %v655
        %2050 = vmatprep.subr.bf16.mxu0 0
        %2051 = vmatpush1.bf16.msra.mxu0 %v656
        %2052 = vmatprep.subr.bf16.mxu0 0
        %2053 = vmatpush1.bf16.msra.mxu0 %v657
        %2054 = vmatprep.subr.bf16.mxu0 0
        %2055 = vmatpush1.bf16.msra.mxu0 0
        %2056 = vmatprep.subr.bf16.mxu0 0
        %2057 = vmatpush1.bf16.msra.mxu0 0
        %2058 = vmatprep.subr.bf16.mxu0 0
        %2059 = vmatpush1.bf16.msra.mxu0 0
        %2060 = vmatprep.subr.bf16.mxu0 0
        %2061 = vmatpush1.bf16.msra.mxu0 0
        %2062 = vmatprep.subr.bf16.mxu0 0
        %2063 = vmatpush1.bf16.msra.mxu0 0
        %2064 = vmatprep.subr.bf16.mxu0 0
        %2065 = vmatpush1.bf16.msra.mxu0 0
        %2066 = vmatprep.subr.bf16.mxu0 0
        %2067 = vmatpush1.bf16.msra.mxu0 0
        %2068 = vmatprep.subr.bf16.mxu0 0
        %2069 = vmatpush1.bf16.msra.mxu0 0
        %2070 = vmatprep.subr.bf16.mxu0 0
        %2071 = vmatpush1.bf16.msra.mxu0 0
        %2072 = vmatprep.subr.bf16.mxu0 0
        %2073 = vmatpush1.bf16.msra.mxu0 0
        %2074 = vmatprep.mubr.bf16.mxu0 0
        %2075 = vmatmul.mubr.bf16.gmra.mrb[0].mxu0 %v1989
        %v2076 = vpop.f32.mrb[0].mxu0
        %v2077 = vadd.f32 0.0, %v2076
        %v2078 = vpop.f32.mrb[0].mxu0
        %v2079 = vpop.f32.mrb[0].mxu0
        %v2080 = vadd.f32 0.0, %v2079
        %v2081 = vpop.f32.mrb[0].mxu0
        %2082 = vmatprep.mubr.bf16.mxu0 0
        %2083 = vmatmul.mubr.bf16.gmra.mrb[0].mxu0 %v1992
        %v2084 = vpop.f32.mrb[0].mxu0
        %v2085 = vadd.f32 0.0, %v2084
        %v2086 = vpop.f32.mrb[0].mxu0
        %v2087 = vpop.f32.mrb[0].mxu0
        %v2088 = vpop.f32.mrb[0].mxu0
        %2089 = vdwg.mxu0
        %v2090 = vrcp.pop %v2077
        %v2091 = vrcp.pop %v2080
        %v2092 = vrcp.pop %v2085
        %v2093 = vmul.f32 %v2029, %v2090
        %v2094 = vmul.f32 %v2032, %v2091
        %v2095 = vmul.f32 %v2037, %v2092
        %v2096 = vpack.c.bf16 %v2094, %v2093
        %v2097 = vpack.c.bf16 %v2095, %v2095
        %s2098 = scalar_lea.vmem %s9, 16
        %v2099 = vld [vmem:[%s2098] sm:$0xf]
        %v2100 = vld [vmem:[%s2098 + $0x4] sm:$0xf]
        %v2101 = vld [vmem:[%s2098 + $0x8] sm:$0xf]
        %v2102 = vld [vmem:[%s2098 + $0xc] sm:$0xf]
        %s2103 = scalar_lea.vmem %s10, 1
        %v2104 = vld [vmem:[%s2103] sm:$0x1]
        %v2106 = vlaneseq
        %v2107 = vshrl.u32 %v2106, 7
        %v2108 = vsub.s32 0, %v2107
        %v2109 = vrot.slane %v2104, %v2108
        %v2115 = vunpack.c.l.b16 %v2099
        %v2116 = vunpack.c.l.b16 %v2100
        %v2117 = vunpack.c.l.b16 %v2101
        %v2118 = vunpack.c.l.b16 %v2102
        %v2119 = vpack.c.b16 %v2116, %v2115
        %v2120 = vpack.c.b16 %v2118, %v2117
        %v2124 = vsel %vm771, %v2096, 0
        %v2127 = vsel %vm771, %v2097, 0
        %2129 = vmatprep.subr.bf16.mxu0 0
        %2130 = vmatpush1.bf16.msra.mxu0 %v2119
        %2131 = vmatprep.subr.bf16.mxu0 0
        %2132 = vmatpush1.bf16.msra.mxu0 %v2120
        %2133 = vmatprep.subr.bf16.mxu0 0
        %2134 = vmatpush1.bf16.msra.mxu0 0
        %2135 = vmatprep.subr.bf16.mxu0 0
        %2136 = vmatpush1.bf16.msra.mxu0 0
        %2137 = vmatprep.subr.bf16.mxu0 0
        %2138 = vmatpush1.bf16.msra.mxu0 0
        %2139 = vmatprep.subr.bf16.mxu0 0
        %2140 = vmatpush1.bf16.msra.mxu0 0
        %2141 = vmatprep.subr.bf16.mxu0 0
        %2142 = vmatpush1.bf16.msra.mxu0 0
        %2143 = vmatprep.subr.bf16.mxu0 0
        %2144 = vmatpush1.bf16.msra.mxu0 0
        %2145 = vmatprep.subr.bf16.mxu0 0
        %2146 = vmatpush1.bf16.msra.mxu0 0
        %2147 = vmatprep.subr.bf16.mxu0 0
        %2148 = vmatpush1.bf16.msra.mxu0 0
        %2149 = vmatprep.subr.bf16.mxu0 0
        %2150 = vmatpush1.bf16.msra.mxu0 0
        %2151 = vmatprep.subr.bf16.mxu0 0
        %2152 = vmatpush1.bf16.msra.mxu0 0
        %2153 = vmatprep.subr.bf16.mxu0 0
        %2154 = vmatpush1.bf16.msra.mxu0 0
        %2155 = vmatprep.subr.bf16.mxu0 0
        %2156 = vmatpush1.bf16.msra.mxu0 0
        %2157 = vmatprep.subr.bf16.mxu0 0
        %2158 = vmatpush1.bf16.msra.mxu0 0
        %2159 = vmatprep.subr.bf16.mxu0 0
        %2160 = vmatpush1.bf16.msra.mxu0 0
        %2161 = vmatprep.mubr.bf16.mxu0 0
        %2162 = vmatmul.mubr.bf16.gmra.mrb[0].mxu0 %v2124
        %v2163 = vpop.f32.mrb[0].mxu0
        %v2164 = vadd.f32 %v2109, %v2163
        %v2165 = vpop.f32.mrb[0].mxu0
        %v2166 = vpop.f32.mrb[0].mxu0
        %v2167 = vadd.f32 %v2109, %v2166
        %v2168 = vpop.f32.mrb[0].mxu0
        %2169 = vmatprep.mubr.bf16.mxu0 0
        %2170 = vmatmul.mubr.bf16.gmra.mrb[0].mxu0 %v2127
        %v2171 = vpop.f32.mrb[0].mxu0
        %v2172 = vadd.f32 %v2109, %v2171
        %v2173 = vpop.f32.mrb[0].mxu0
        %v2174 = vpop.f32.mrb[0].mxu0
        %v2175 = vpop.f32.mrb[0].mxu0
        %2176 = vdwg.mxu0
        %v2177 = vadd.f32 %v1651, %v2164
        %v2178 = vadd.f32 %v1652, %v2167
        %v2179 = vadd.f32 %v1653, %v2172
        %s2180 = scalar_lea.vmem %s11, 1
        %v2181 = vld [vmem:[%s2180] sm:$0x1]
        %s2182 = scalar_lea.vmem %s12, 1
        %v2183 = vld [vmem:[%s2182] sm:$0x1]
        %v2184 = vsel %vm771, %v2177, 0.0
        %2185 = vadd.xlane.f32.xlu0 %v2184
        %v2186 = vpop.xlane.xlu0 %2185
        %v2187 = vsel %vm771, %v2178, 0.0
        %2188 = vadd.xlane.f32.xlu0 %v2187
        %v2189 = vpop.xlane.xlu0 %2188
        %v2190 = vsel %vm771, %v2179, 0.0
        %2191 = vadd.xlane.f32.xlu0 %v2190
        %v2192 = vpop.xlane.xlu0 %2191
        %v2193 = vmul.f32 %v2186, %v781
        %v2194 = vmul.f32 %v2189, %v781
        %v2195 = vmul.f32 %v2192, %v781
        %v2196 = vsub.f32 %v2177, %v2193
        %v2197 = vsub.f32 %v2178, %v2194
        %v2198 = vsub.f32 %v2179, %v2195
        %v2199 = vmul.f32 %v2196, %v2196
        %v2200 = vmul.f32 %v2197, %v2197
        %v2201 = vmul.f32 %v2198, %v2198
        %v2202 = vsel %vm771, %v2199, 0.0
        %2203 = vadd.xlane.f32.xlu0 %v2202
        %v2204 = vpop.xlane.xlu0 %2203
        %v2205 = vsel %vm771, %v2200, 0.0
        %2206 = vadd.xlane.f32.xlu0 %v2205
        %v2207 = vpop.xlane.xlu0 %2206
        %v2208 = vsel %vm771, %v2201, 0.0
        %2209 = vadd.xlane.f32.xlu0 %v2208
        %v2210 = vpop.xlane.xlu0 %2209
        %v2211 = vmul.f32 %v2204, %v781
        %v2212 = vmul.f32 %v2207, %v781
        %v2213 = vmul.f32 %v2210, %v781
        %v2214 = vadd.f32 %v2211, 1e-06
        %v2215 = vadd.f32 %v2212, 1e-06
        %v2216 = vadd.f32 %v2213, 1e-06
        %v2217 = vrsqrt.pop %v2214
        %v2218 = vrsqrt.pop %v2215
        %v2219 = vrsqrt.pop %v2216
        %v2220 = vmul.f32 %v2196, %v2217
        %v2221 = vmul.f32 %v2197, %v2218
        %v2222 = vmul.f32 %v2198, %v2219
        %v2224 = vlaneseq
        %v2225 = vshrl.u32 %v2224, 7
        %v2226 = vsub.s32 0, %v2225
        %v2227 = vrot.slane %v2181, %v2226
        %v2229 = vmul.f32 %v2220, %v2227
        %v2230 = vmul.f32 %v2221, %v2227
        %v2231 = vmul.f32 %v2222, %v2227
        %v2233 = vlaneseq
        %v2234 = vshrl.u32 %v2233, 7
        %v2235 = vsub.s32 0, %v2234
        %v2236 = vrot.slane %v2183, %v2235
        %v2238 = vadd.f32 %v2229, %v2236
        %v2239 = vadd.f32 %v2230, %v2236
        %v2240 = vadd.f32 %v2231, %v2236
        %v2241 = vpack.c.bf16 %v2239, %v2238
        %v2242 = vpack.c.bf16 %v2240, %v2240
        %s2243 = scalar_lea.vmem %s13, 16
        %v2244 = vld [vmem:[%s2243] sm:$0xf]
        %v2245 = vld [vmem:[%s2243 + $0x4] sm:$0xf]
        %v2246 = vld [vmem:[%s2243 + $0x8] sm:$0xf]
        %v2247 = vld [vmem:[%s2243 + $0xc] sm:$0xf]
        %s2248 = scalar_lea.vmem %s14, 1
        %v2249 = vld [vmem:[%s2248] sm:$0x1]
        %v2251 = vlaneseq
        %v2252 = vshrl.u32 %v2251, 7
        %v2253 = vsub.s32 0, %v2252
        %v2254 = vrot.slane %v2249, %v2253
        %v2260 = vunpack.c.l.b16 %v2244
        %v2261 = vunpack.c.l.b16 %v2245
        %v2262 = vunpack.c.l.b16 %v2246
        %v2263 = vunpack.c.l.b16 %v2247
        %v2264 = vpack.c.b16 %v2261, %v2260
        %v2265 = vpack.c.b16 %v2263, %v2262
        %v2269 = vsel %vm771, %v2241, 0
        %v2272 = vsel %vm771, %v2242, 0
        %2274 = vmatprep.subr.bf16.mxu0 0
        %2275 = vmatpush1.bf16.msra.mxu0 %v2264
        %2276 = vmatprep.subr.bf16.mxu0 0
        %2277 = vmatpush1.bf16.msra.mxu0 %v2265
        %2278 = vmatprep.subr.bf16.mxu0 0
        %2279 = vmatpush1.bf16.msra.mxu0 0
        %2280 = vmatprep.subr.bf16.mxu0 0
        %2281 = vmatpush1.bf16.msra.mxu0 0
        %2282 = vmatprep.subr.bf16.mxu0 0
        %2283 = vmatpush1.bf16.msra.mxu0 0
        %2284 = vmatprep.subr.bf16.mxu0 0
        %2285 = vmatpush1.bf16.msra.mxu0 0
        %2286 = vmatprep.subr.bf16.mxu0 0
        %2287 = vmatpush1.bf16.msra.mxu0 0
        %2288 = vmatprep.subr.bf16.mxu0 0
        %2289 = vmatpush1.bf16.msra.mxu0 0
        %2290 = vmatprep.subr.bf16.mxu0 0
        %2291 = vmatpush1.bf16.msra.mxu0 0
        %2292 = vmatprep.subr.bf16.mxu0 0
        %2293 = vmatpush1.bf16.msra.mxu0 0
        %2294 = vmatprep.subr.bf16.mxu0 0
        %2295 = vmatpush1.bf16.msra.mxu0 0
        %2296 = vmatprep.subr.bf16.mxu0 0
        %2297 = vmatpush1.bf16.msra.mxu0 0
        %2298 = vmatprep.subr.bf16.mxu0 0
        %2299 = vmatpush1.bf16.msra.mxu0 0
        %2300 = vmatprep.subr.bf16.mxu0 0
        %2301 = vmatpush1.bf16.msra.mxu0 0
        %2302 = vmatprep.subr.bf16.mxu0 0
        %2303 = vmatpush1.bf16.msra.mxu0 0
        %2304 = vmatprep.subr.bf16.mxu0 0
        %2305 = vmatpush1.bf16.msra.mxu0 0
        %2306 = vmatprep.mubr.bf16.mxu0 0
        %2307 = vmatmul.mubr.bf16.gmra.mrb[0].mxu0 %v2269
        %v2308 = vpop.f32.mrb[0].mxu0
        %v2309 = vadd.f32 %v2254, %v2308
        %v2310 = vpop.f32.mrb[0].mxu0
        %v2311 = vpop.f32.mrb[0].mxu0
        %v2312 = vadd.f32 %v2254, %v2311
        %v2313 = vpop.f32.mrb[0].mxu0
        %2314 = vmatprep.mubr.bf16.mxu0 0
        %2315 = vmatmul.mubr.bf16.gmra.mrb[0].mxu0 %v2272
        %v2316 = vpop.f32.mrb[0].mxu0
        %v2317 = vadd.f32 %v2254, %v2316
        %v2318 = vpop.f32.mrb[0].mxu0
        %v2319 = vpop.f32.mrb[0].mxu0
        %v2320 = vpop.f32.mrb[0].mxu0
        %2321 = vdwg.mxu0
        %v2322 = vmul.f32 %v2309, %v2309
        %v2323 = vmul.f32 %v2312, %v2312
        %v2324 = vmul.f32 %v2317, %v2317
        %v2325 = vmul.f32 %v2309, %v2322
        %v2326 = vmul.f32 %v2312, %v2323
        %v2327 = vmul.f32 %v2317, %v2324
        %v2328 = vmul.f32 %v2325, 0.044715
        %v2329 = vmul.f32 %v2326, 0.044715
        %v2330 = vmul.f32 %v2327, 0.044715
        %v2331 = vadd.f32 %v2309, %v2328
        %v2332 = vadd.f32 %v2312, %v2329
        %v2333 = vadd.f32 %v2317, %v2330
        %v2334 = vmul.f32 %v2331, 0.7978846
        %v2335 = vmul.f32 %v2332, 0.7978846
        %v2336 = vmul.f32 %v2333, 0.7978846
        %v2337 = vtanh.pop %v2334
        %v2338 = vtanh.pop %v2335
        %v2339 = vtanh.pop %v2336
        %v2340 = vadd.f32 %v2337, 1.0
        %v2341 = vadd.f32 %v2338, 1.0
        %v2342 = vadd.f32 %v2339, 1.0
        %v2343 = vmul.f32 %v2340, 0.5
        %v2344 = vmul.f32 %v2341, 0.5
        %v2345 = vmul.f32 %v2342, 0.5
        %v2346 = vmul.f32 %v2309, %v2343
        %v2347 = vmul.f32 %v2312, %v2344
        %v2348 = vmul.f32 %v2317, %v2345
        %v2349 = vpack.c.bf16 %v2347, %v2346
        %v2350 = vpack.c.bf16 %v2348, %v2348
        %s2351 = scalar_lea.vmem %s15, 64
        %v2352 = vld [vmem:[%s2351] sm:$0xf]
        %v2353 = vld [vmem:[%s2351 + $0x4] sm:$0xf]
        %v2354 = vld [vmem:[%s2351 + $0x8] sm:$0xf]
        %v2355 = vld [vmem:[%s2351 + $0xc] sm:$0xf]
        %v2356 = vld [vmem:[%s2351 + $0x10] sm:$0xf]
        %v2357 = vld [vmem:[%s2351 + $0x14] sm:$0xf]
        %v2358 = vld [vmem:[%s2351 + $0x18] sm:$0xf]
        %v2359 = vld [vmem:[%s2351 + $0x1c] sm:$0xf]
        %v2360 = vld [vmem:[%s2351 + $0x20] sm:$0xf]
        %v2361 = vld [vmem:[%s2351 + $0x24] sm:$0xf]
        %v2362 = vld [vmem:[%s2351 + $0x28] sm:$0xf]
        %v2363 = vld [vmem:[%s2351 + $0x2c] sm:$0xf]
        %v2364 = vld [vmem:[%s2351 + $0x30] sm:$0xf]
        %v2365 = vld [vmem:[%s2351 + $0x34] sm:$0xf]
        %v2366 = vld [vmem:[%s2351 + $0x38] sm:$0xf]
        %v2367 = vld [vmem:[%s2351 + $0x3c] sm:$0xf]
        %s2368 = scalar_lea.vmem %s16, 1
        %v2369 = vld [vmem:[%s2368] sm:$0x1]
        %v2371 = vlaneseq
        %v2372 = vshrl.u32 %v2371, 7
        %v2373 = vsub.s32 0, %v2372
        %v2374 = vrot.slane %v2369, %v2373
        %v2392 = vunpack.c.l.b16 %v2352
        %v2393 = vunpack.c.l.b16 %v2353
        %v2394 = vunpack.c.l.b16 %v2354
        %v2395 = vunpack.c.l.b16 %v2355
        %v2396 = vunpack.c.l.b16 %v2356
        %v2397 = vunpack.c.l.b16 %v2357
        %v2398 = vunpack.c.l.b16 %v2358
        %v2399 = vunpack.c.l.b16 %v2359
        %v2400 = vunpack.c.l.b16 %v2360
        %v2401 = vunpack.c.l.b16 %v2361
        %v2402 = vunpack.c.l.b16 %v2362
        %v2403 = vunpack.c.l.b16 %v2363
        %v2404 = vunpack.c.l.b16 %v2364
        %v2405 = vunpack.c.l.b16 %v2365
        %v2406 = vunpack.c.l.b16 %v2366
        %v2407 = vunpack.c.l.b16 %v2367
        %v2408 = vpack.c.b16 %v2393, %v2392
        %v2409 = vpack.c.b16 %v2395, %v2394
        %v2410 = vpack.c.b16 %v2397, %v2396
        %v2411 = vpack.c.b16 %v2399, %v2398
        %v2412 = vpack.c.b16 %v2401, %v2400
        %v2413 = vpack.c.b16 %v2403, %v2402
        %v2414 = vpack.c.b16 %v2405, %v2404
        %v2415 = vpack.c.b16 %v2407, %v2406
        %2424 = vmatprep.subr.bf16.mxu0 0
        %2425 = vmatpush1.bf16.msra.mxu0 %v2408
        %2426 = vmatprep.subr.bf16.mxu0 0
        %2427 = vmatpush1.bf16.msra.mxu0 %v2409
        %2428 = vmatprep.subr.bf16.mxu0 0
        %2429 = vmatpush1.bf16.msra.mxu0 %v2410
        %2430 = vmatprep.subr.bf16.mxu0 0
        %2431 = vmatpush1.bf16.msra.mxu0 %v2411
        %2432 = vmatprep.subr.bf16.mxu0 0
        %2433 = vmatpush1.bf16.msra.mxu0 %v2412
        %2434 = vmatprep.subr.bf16.mxu0 0
        %2435 = vmatpush1.bf16.msra.mxu0 %v2413
        %2436 = vmatprep.subr.bf16.mxu0 0
        %2437 = vmatpush1.bf16.msra.mxu0 %v2414
        %2438 = vmatprep.subr.bf16.mxu0 0
        %2439 = vmatpush1.bf16.msra.mxu0 %v2415
        %2440 = vmatprep.subr.bf16.mxu0 0
        %2441 = vmatpush1.bf16.msra.mxu0 0
        %2442 = vmatprep.subr.bf16.mxu0 0
        %2443 = vmatpush1.bf16.msra.mxu0 0
        %2444 = vmatprep.subr.bf16.mxu0 0
        %2445 = vmatpush1.bf16.msra.mxu0 0
        %2446 = vmatprep.subr.bf16.mxu0 0
        %2447 = vmatpush1.bf16.msra.mxu0 0
        %2448 = vmatprep.subr.bf16.mxu0 0
        %2449 = vmatpush1.bf16.msra.mxu0 0
        %2450 = vmatprep.subr.bf16.mxu0 0
        %2451 = vmatpush1.bf16.msra.mxu0 0
        %2452 = vmatprep.subr.bf16.mxu0 0
        %2453 = vmatpush1.bf16.msra.mxu0 0
        %2454 = vmatprep.subr.bf16.mxu0 0
        %2455 = vmatpush1.bf16.msra.mxu0 0
        %2456 = vmatprep.mubr.bf16.mxu0 0
        %2457 = vmatmul.mubr.bf16.gmra.mrb[0].mxu0 %v2349
        %v2458 = vpop.f32.mrb[0].mxu0
        %v2459 = vadd.f32 %v2374, %v2458
        %v2460 = vpop.f32.mrb[0].mxu0
        %v2461 = vpop.f32.mrb[0].mxu0
        %v2462 = vadd.f32 %v2374, %v2461
        %v2463 = vpop.f32.mrb[0].mxu0
        %2464 = vmatprep.mubr.bf16.mxu0 0
        %2465 = vmatmul.mubr.bf16.gmra.mrb[0].mxu0 %v2350
        %v2466 = vpop.f32.mrb[0].mxu0
        %v2467 = vadd.f32 %v2374, %v2466
        %v2468 = vpop.f32.mrb[0].mxu0
        %v2469 = vpop.f32.mrb[0].mxu0
        %v2470 = vpop.f32.mrb[0].mxu0
        %2471 = vdwg.mxu0
        %v2472 = vadd.f32 %v2177, %v2459
        %v2473 = vadd.f32 %v2178, %v2462
        %v2474 = vadd.f32 %v2179, %v2467
        %v2475 = vpack.c.bf16 %v2473, %v2472
        %v2476 = vpack.c.bf16 %v2474, %v2474
        %v2479 = vunpack.c.l.b16 %v2475
        %v2480 = vunpack.c.h.b16 %v2475
        %v2481 = vunpack.c.l.b16 %v2476
        %v2482 = vpack.c.b16 %v2479, %v2479
        %v2483 = vpack.c.b16 %v2480, %v2480
        %v2484 = vpack.c.b16 %v2481, %v2481
        %s2488 = scalar_lea.vmem %s633, 24 [#allocation4]
        %2489 = vst.msk [vmem:[%s2488] sm:$0xf] %vm765, %v2482
        %2490 = vst.msk [vmem:[%s2488 + $0x4] sm:$0xf] %vm765, %v2483
        %2491 = vst.msk [vmem:[%s2488 + $0x8] sm:$0xf] %vm765, %v2484
        %v2492 = vld [vmem:[%s17] sm:$0x1]
        %v2493 = vld [vmem:[%s18] sm:$0x1]
        %v2494 = vsel %vm771, %v2472, 0.0
        %2495 = vadd.xlane.f32.xlu0 %v2494
        %v2496 = vpop.xlane.xlu0 %2495
        %v2497 = vsel %vm771, %v2473, 0.0
        %2498 = vadd.xlane.f32.xlu0 %v2497
        %v2499 = vpop.xlane.xlu0 %2498
        %v2500 = vsel %vm771, %v2474, 0.0
        %2501 = vadd.xlane.f32.xlu0 %v2500
        %v2502 = vpop.xlane.xlu0 %2501
        %v2503 = vmul.f32 %v2496, %v781
        %v2504 = vmul.f32 %v2499, %v781
        %v2505 = vmul.f32 %v2502, %v781
        %v2506 = vsub.f32 %v2472, %v2503
        %v2507 = vsub.f32 %v2473, %v2504
        %v2508 = vsub.f32 %v2474, %v2505
        %v2509 = vmul.f32 %v2506, %v2506
        %v2510 = vmul.f32 %v2507, %v2507
        %v2511 = vmul.f32 %v2508, %v2508
        %v2512 = vsel %vm771, %v2509, 0.0
        %2513 = vadd.xlane.f32.xlu0 %v2512
        %v2514 = vpop.xlane.xlu0 %2513
        %v2515 = vsel %vm771, %v2510, 0.0
        %2516 = vadd.xlane.f32.xlu0 %v2515
        %v2517 = vpop.xlane.xlu0 %2516
        %v2518 = vsel %vm771, %v2511, 0.0
        %2519 = vadd.xlane.f32.xlu0 %v2518
        %v2520 = vpop.xlane.xlu0 %2519
        %v2521 = vmul.f32 %v2514, %v781
        %v2522 = vmul.f32 %v2517, %v781
        %v2523 = vmul.f32 %v2520, %v781
        %v2524 = vadd.f32 %v2521, 1e-06
        %v2525 = vadd.f32 %v2522, 1e-06
        %v2526 = vadd.f32 %v2523, 1e-06
        %v2527 = vrsqrt.pop %v2524
        %v2528 = vrsqrt.pop %v2525
        %v2529 = vrsqrt.pop %v2526
        %v2530 = vmul.f32 %v2506, %v2527
        %v2531 = vmul.f32 %v2507, %v2528
        %v2532 = vmul.f32 %v2508, %v2529
        %v2534 = vlaneseq
        %v2535 = vshrl.u32 %v2534, 7
        %v2536 = vsub.s32 0, %v2535
        %v2537 = vrot.slane %v2492, %v2536
        %v2539 = vmul.f32 %v2530, %v2537
        %v2540 = vmul.f32 %v2531, %v2537
        %v2541 = vmul.f32 %v2532, %v2537
        %v2543 = vlaneseq
        %v2544 = vshrl.u32 %v2543, 7
        %v2545 = vsub.s32 0, %v2544
        %v2546 = vrot.slane %v2493, %v2545
        %v2548 = vadd.f32 %v2539, %v2546
        %v2549 = vadd.f32 %v2540, %v2546
        %v2550 = vadd.f32 %v2541, %v2546
        %2551 = vst.msk [vmem:[%s626] sm:$0xff] %vm771, %v2548
        %2552 = vst.msk [vmem:[%s626 + $0x8] sm:$0xff] %vm771, %v2549
        %2553 = vst.msk [vmem:[%s626 + $0x10] sm:$0xff] %vm771, %v2550
        %s2554 = sand.u32 %s450, 1
        %s2555 = scalar_lea.sflag [#allocation3], %s2554
        %s2556 = sand.u32 %s450, 1
        %s2557 = smul.addr %s2556, 24
        %s2558 = scalar_lea.vmem [#allocation2], %s2557
        %s2559 = sand.u32 %s476, 1
        %s2560 = scalar_lea.sflag [#allocation5], %s2559
        %s2561 = sand.u32 %s476, 1
        %s2562 = smul.addr %s2561, 36
        %s2563 = scalar_lea.vmem [#allocation4], %s2562
        // Predicated region
        $region97: #{_encode.1} parent=95 // pred_check
          %p2564 = pneg %p460
        $region98: #{_encode.1} parent=95 // pred_check_branch
          %2566 = sbr.rel (%p2564) target = $region100
        $region99: #{_encode.1} parent=95 // pred_region
          %s2568 = ssub.s32 384, 384
          %2569 = vsyncadd %s2555, %s2568
          %s2570 = smul.addr %s38, 3
          %s2571 = smul.addr %s2570, 128
          %s2572 = scalar_lea.hbm %s19, %s2571
          %s2573 = sshll.u32 %s2558, 4
          %s2574 = int_to_ptr.vmem [resolvable:$true] %s2573
          %2579 = dma.vmem_to_hbm [thread:$0]  %s2574, 384, %s2572, %s2555, 128, 128, 8
        $region100: #{_encode.1} parent=95 // pred_fallthru
          _
        // Predicated region
        $region101: #{_encode.1} parent=95 // pred_check
          %p2580 = pneg %p486
        $region102: #{_encode.1} parent=95 // pred_check_branch
          %2582 = sbr.rel (%p2580) target = $region104
        $region103: #{_encode.1} parent=95 // pred_region
          %s2584 = ssub.s32 576, 576
          %2585 = vsyncadd %s2560, %s2584
          %s2586 = smul.addr %s38, 9
          %s2587 = smul.addr %s2586, 64
          %s2588 = scalar_lea.hbm %s20, %s2587
          %s2589 = sshll.u32 %s2563, 4
          %s2590 = int_to_ptr.vmem [resolvable:$true] %s2589
          %2595 = dma.vmem_to_hbm [thread:$0]  %s2590, 576, %s2588, %s2560, 64, 64, 4
        $region104: #{_encode.1} parent=95 // pred_fallthru
          _
      $region96: #{_encode.1} parent=5 // pred_fallthru
        _
      %p2596 = scmp.le.s32.totalorder 2, %s33
      // Predicated region
      $region105: #{_encode.1} parent=5 // pred_check
        %p2597 = pneg %p2596
      $region106: #{_encode.1} parent=5 // pred_check_branch
        %2599 = sbr.rel (%p2597) target = $region108
      $region107: #{_encode.1} parent=5 // pred_region
        %s2600 = ssub.s32 %s33, 2
        // Predicated region
        $region109: #{_encode.1} parent=107 // pred_check
          %p2601 = pneg %p466
        $region110: #{_encode.1} parent=107 // pred_check_branch
          %2603 = sbr.rel (%p2601) target = $region112
        $region111: #{_encode.1} parent=107 // pred_region
          %s2604 = sand.u32 %s451, 1
          %s2605 = scalar_lea.sflag [#allocation3], %s2604
          %s2606 = sand.u32 %s451, 1
          %s2607 = smul.addr %s2606, 24
          %s2608 = scalar_lea.vmem [#allocation2], %s2607
          %2609 = dma.done %s2605, 384
        $region112: #{_encode.1} parent=107 // pred_fallthru
          _
        // Predicated region
        $region113: #{_encode.1} parent=107 // pred_check
          %p2610 = pneg %p492
        $region114: #{_encode.1} parent=107 // pred_check_branch
          %2612 = sbr.rel (%p2610) target = $region116
        $region115: #{_encode.1} parent=107 // pred_region
          %s2613 = sand.u32 %s477, 1
          %s2614 = scalar_lea.sflag [#allocation5], %s2613
          %s2615 = sand.u32 %s477, 1
          %s2616 = smul.addr %s2615, 36
          %s2617 = scalar_lea.vmem [#allocation4], %s2616
          %2618 = dma.done %s2614, 576
        $region116: #{_encode.1} parent=107 // pred_fallthru
          _
      $region108: #{_encode.1} parent=5 // pred_fallthru
        _
    $region6: #{_encode.1} parent=1 // loop_footer
      %s37 = sadd.s32 1, %s33
    $region7: #{_encode.1} parent=1 // loop_footer_branch
      %32 = sbr.rel target = $region3
    $region8: #{_encode.1} parent=1 // loop_exit
      _
    %2619 = vsyncpa [#allocation3], 1
    %s2620 = scalar_lea.sflag [#allocation3], 1
    %2621 = vsyncpa %s2620, 1
    %2622 = vsyncpa [#allocation5], 1
    %s2623 = scalar_lea.sflag [#allocation5], 1
    %2624 = vsyncpa %s2623, 1

</llo_original>
